<compile_context>
chip_gen: v7x
topology: tpu7x:2x2x1
jax: 0.10.0
libtpu: 0.0.40
codegen_flags: <defaults>
</compile_context>

<pallas_src>
import numpy as np
import jax
import jax.numpy as jnp
from jax.experimental import pallas as pl
from jax.experimental.pallas import tpu as pltpu


# ------------------------- static linear operators (host) -------------------------

def _bilinear_matrix(out_size, in_size):
    """1-D interpolation matrix matching nn.Upsample(mode='bilinear', align_corners=True)."""
    K = np.zeros((out_size, in_size), np.float32)
    if in_size == 1 or out_size == 1:
        K[:, 0] = 1.0
        return K
    src = np.arange(out_size, dtype=np.float64) * (in_size - 1) / (out_size - 1)
    i0 = np.minimum(np.floor(src).astype(np.int64), in_size - 1)
    i1 = np.minimum(i0 + 1, in_size - 1)
    w1 = (src - i0).astype(np.float32)
    K[np.arange(out_size), i0] += 1.0 - w1
    K[np.arange(out_size), i1] += w1
    return K


def _upsample_matrix_T(h_in, w_in, scale):
    """Transposed 2-D bilinear (align_corners=True) operator: (H_in*W_in, H_out*W_out)."""
    kh = _bilinear_matrix(h_in * scale, h_in)
    kw = _bilinear_matrix(w_in * scale, w_in)
    return np.kron(kh, kw).T.astype(np.float32)


def _avgpool_matrix_T(h, w, k):
    """Transposed k x k average-pool operator: (H*W, (H//k)*(W//k))."""
    ah = np.repeat(np.eye(h // k, dtype=np.float32), k, axis=1) / k      # (h//k, h)
    aw = np.repeat(np.eye(w // k, dtype=np.float32), k, axis=1) / k      # (w//k, w)
    return np.kron(ah, aw).T.astype(np.float32)


# --------------------------------- fused kernel -----------------------------------

def _unet_dyhead_kernel(x_ref, p2t_ref, p3t_ref,
                        wbbT_ref, bbb_ref, wdT_ref, bd_ref, waT_ref, ba_ref,
                        wf_ref, u2t_ref, u3t_ref, bfin_ref, o_ref):
    # x_ref: (Cin, HW) for one batch element (channels on sublanes, HW on lanes).
    x = x_ref[...]                                                       # f32
    # multi-scale inputs: avg-pool (stride 2 / 4) expressed as exact f32 matmuls
    pooled = (
        x,
        jnp.dot(x, p2t_ref[...], preferred_element_type=jnp.float32),   # (Cin, HW/4)
        jnp.dot(x, p3t_ref[...], preferred_element_type=jnp.float32),   # (Cin, HW/16)
    )

    hw_out = o_ref.shape[-1]
    acc = jnp.zeros((1, hw_out), jnp.float32)

    for l in range(3):                                                   # unrolled, static shapes
        xl = pooled[l].astype(jnp.bfloat16)                              # (Cin, HW_l)

        # backbone 1x1 conv + ReLU (bf16 operands, f32 accumulate)
        # TODO(synk): real UNet3Plus backbone was not provided; simplified multi-scale
        # stand-in (strides 1/2/4, 1x1 conv + ReLU, 80 channels each).
        h = jnp.dot(wbbT_ref[l], xl, preferred_element_type=jnp.float32)
        h = jnp.maximum(h + bbb_ref[l], 0.0)                             # (C, HW_l)

        # simplified DyHead level: scale/task-aware attention (GAP -> fc -> hard-sigmoid)
        # TODO(synk): DyHead's spatial-aware deformable conv (DCNv2) has no clean Pallas
        # equivalent; it is omitted from this synthetic stand-in.
        gap = jnp.mean(h, axis=1, keepdims=True)                         # (C, 1)  lane reduce
        z = jnp.dot(waT_ref[l], gap.astype(jnp.bfloat16),
                    preferred_element_type=jnp.float32) + ba_ref[l]      # (C, 1)
        att = jnp.clip(z / 6.0 + 0.5, 0.0, 1.0)                          # hard-sigmoid

        # attention-modulated 1x1 conv + ReLU
        r = jnp.maximum(
            jnp.dot(wdT_ref[l], h.astype(jnp.bfloat16),
                    preferred_element_type=jnp.float32) + bd_ref[l], 0.0)  # (C, HW_l)

        # final 1x1 conv folded per level: the per-column attention and the final-conv
        # weight slice combine into one (C,1) scale; reduce over channels on VPU+XLU
        # (avoids an M=1 MXU push).  m is the level's 1-channel map.
        attf = att * wf_ref[l]                                           # (C, 1)
        m = jnp.sum(attf * r, axis=0, keepdims=True)                     # (1, HW_l)

        # bilinear upsample (align_corners=True) of the 1-channel map via a precomputed
        # interpolation matrix (identity for level 1); valid because upsample is linear.
        if l == 1:
            m = jnp.dot(m, u2t_ref[...], preferred_element_type=jnp.float32)
        elif l == 2:
            m = jnp.dot(m, u3t_ref[...], preferred_element_type=jnp.float32)
        acc = acc + m                                                    # (1, HW)

    o_ref[...] = (acc + bfin_ref[...]).astype(o_ref.dtype)               # lane-dense store


# ----------------------------------- wrapper ---------------------------------------

def init_params(key, c_in=4, c_feat=80, h=16, w=16):
    """Parameters in kernel-ready layout: weights stored transposed (output-channels on
    sublanes), stacked over the 3 pyramid levels, matmul weights in bf16."""
    ks = jax.random.split(key, 4)
    f32, bf16 = jnp.float32, jnp.bfloat16
    return {
        # backbone 1x1 convs (3 levels): (3, C, Cin)
        "wbbT": (jax.random.normal(ks[0], (3, c_feat, c_in), f32) * 0.1).astype(bf16),
        "bbb":  jnp.zeros((3, c_feat, 1), f32),
        # DyHead attention fc and 1x1 conv: (3, C, C), transposed
        "waT":  (jax.random.normal(ks[1], (3, c_feat, c_feat), f32) * 0.05).astype(bf16),
        "ba":   jnp.zeros((3, c_feat, 1), f32),
        "wdT":  (jax.random.normal(ks[2], (3, c_feat, c_feat), f32) * 0.05).astype(bf16),
        "bd":   jnp.zeros((3, c_feat, 1), f32),
        # final 1x1 conv (3*C -> 1), split per level as (3, C, 1), plus its bias
        "wf":   jax.random.normal(ks[3], (3, c_feat, 1), f32) * 0.05,
        "bfin": jnp.zeros((1, 1), f32),
        # static linear operators (transposed): avg-pool and bilinear-upsample matrices
        "p2T":  jnp.asarray(_avgpool_matrix_T(h, w, 2)),
        "p3T":  jnp.asarray(_avgpool_matrix_T(h, w, 4)),
        "u2T":  jnp.asarray(_upsample_matrix_T(h // 2, w // 2, 2)),
        "u3T":  jnp.asarray(_upsample_matrix_T(h // 4, w // 4, 4)),
    }


@jax.jit
def unet_dyhead_forward(x_nchw, params):
    N, Cin, H, W = x_nchw.shape
    HW, HW2, HW3 = H * W, (H // 2) * (W // 2), (H // 4) * (W // 4)
    C = params["wdT"].shape[-1]
    x = x_nchw.astype(jnp.float32).reshape(N, Cin, HW)        # NCHW is already channels-first

    def full(shape):
        return pl.BlockSpec(shape, lambda n, _s=len(shape): (0,) * _s)

    out = pl.pallas_call(
        _unet_dyhead_kernel,
        out_shape=jax.ShapeDtypeStruct((N, 1, HW), jnp.float32),
        grid=(N,),
        in_specs=[
            pl.BlockSpec((None, Cin, HW), lambda n: (n, 0, 0)),   # x, one batch elem / step
            full((HW, HW2)), full((HW, HW3)),                     # pooling operators
            full((3, C, Cin)), full((3, C, 1)),                   # backbone
            full((3, C, C)), full((3, C, 1)),                     # DyHead conv
            full((3, C, C)), full((3, C, 1)),                     # DyHead attention fc
            full((3, C, 1)),                                      # final-conv weight slices
            full((HW2, HW)), full((HW3, HW)),                     # upsample operators
            full((1, 1)),                                         # final-conv bias
        ],
        out_specs=pl.BlockSpec((None, 1, HW), lambda n: (n, 0, 0)),
        compiler_params=pltpu.CompilerParams(
            dimension_semantics=("parallel",)),                   # shard batch across TCs
    )(x, params["p2T"], params["p3T"],
      params["wbbT"], params["bbb"], params["wdT"], params["bd"],
      params["waT"], params["ba"], params["wf"],
      params["u2T"], params["u3T"], params["bfin"])
    return out.reshape(N, 1, H, W)                                # already NCHW


if __name__ == "__main__":
    key = jax.random.PRNGKey(0)
    kx, kp = jax.random.split(key)
    x = jax.random.normal(kx, (2, 4, 16, 16), jnp.float32)        # NCHW like PyTorch
    params = init_params(kp, c_in=4, c_feat=80, h=16, w=16)
    res = jax.block_until_ready(unet_dyhead_forward(x, params))
    assert res.shape == (2, 1, 16, 16), res.shape
    assert bool(jnp.all(jnp.isfinite(res)))
    print("KERNEL_OK")
</pallas_src>

<mosaic_0001>
module attributes {stable_mosaic.version = 11 : i64} {
  func.func @_unet_dyhead_kernel(%arg0: i32, %arg1: memref<1x4x256xf32, #tpu.memory_space<vmem>>, %arg2: memref<256x64xf32, #tpu.memory_space<vmem>>, %arg3: memref<256x16xf32, #tpu.memory_space<vmem>>, %arg4: memref<3x80x4xbf16, #tpu.memory_space<vmem>>, %arg5: memref<3x80x1xf32, #tpu.memory_space<vmem>>, %arg6: memref<3x80x80xbf16, #tpu.memory_space<vmem>>, %arg7: memref<3x80x1xf32, #tpu.memory_space<vmem>>, %arg8: memref<3x80x80xbf16, #tpu.memory_space<vmem>>, %arg9: memref<3x80x1xf32, #tpu.memory_space<vmem>>, %arg10: memref<3x80x1xf32, #tpu.memory_space<vmem>>, %arg11: memref<64x256xf32, #tpu.memory_space<vmem>>, %arg12: memref<16x256xf32, #tpu.memory_space<vmem>>, %arg13: memref<1x1xf32, #tpu.memory_space<vmem>>, %arg14: memref<1x1x256xf32, #tpu.memory_space<vmem>>) attributes {dimension_semantics = [#tpu.dimension_semantics<parallel>], iteration_bounds = array<i64: 2>, scalar_prefetch = 0 : i64, scratch_operands = 0 : i64, tpu.core_type = #tpu.core_type<tc>, window_params = [{transform_indices = @transform_0, window_bounds = array<i64: 1, 4, 256>}, {pipeline_mode = #tpu.pipeline_mode<synchronous>, transform_indices = @transform_1, window_bounds = array<i64: 256, 64>}, {pipeline_mode = #tpu.pipeline_mode<synchronous>, transform_indices = @transform_2, window_bounds = array<i64: 256, 16>}, {pipeline_mode = #tpu.pipeline_mode<synchronous>, transform_indices = @transform_3, window_bounds = array<i64: 3, 80, 4>}, {pipeline_mode = #tpu.pipeline_mode<synchronous>, transform_indices = @transform_4, window_bounds = array<i64: 3, 80, 1>}, {pipeline_mode = #tpu.pipeline_mode<synchronous>, transform_indices = @transform_5, window_bounds = array<i64: 3, 80, 80>}, {pipeline_mode = #tpu.pipeline_mode<synchronous>, transform_indices = @transform_6, window_bounds = array<i64: 3, 80, 1>}, {pipeline_mode = #tpu.pipeline_mode<synchronous>, transform_indices = @transform_7, window_bounds = array<i64: 3, 80, 80>}, {pipeline_mode = #tpu.pipeline_mode<synchronous>, transform_indices = @transform_8, window_bounds = array<i64: 3, 80, 1>}, {pipeline_mode = #tpu.pipeline_mode<synchronous>, transform_indices = @transform_9, window_bounds = array<i64: 3, 80, 1>}, {pipeline_mode = #tpu.pipeline_mode<synchronous>, transform_indices = @transform_10, window_bounds = array<i64: 64, 256>}, {pipeline_mode = #tpu.pipeline_mode<synchronous>, transform_indices = @transform_11, window_bounds = array<i64: 16, 256>}, {pipeline_mode = #tpu.pipeline_mode<synchronous>, transform_indices = @transform_12, window_bounds = array<i64: 1, 1>}, {transform_indices = @transform_13, window_bounds = array<i64: 1, 1, 256>}]} {
    %c0 = arith.constant 0 : index
    %c0_0 = arith.constant 0 : index
    %c0_1 = arith.constant 0 : index
    %0 = vector.load %arg1[%c0, %c0_0, %c0_1] : memref<1x4x256xf32, #tpu.memory_space<vmem>>, vector<1x4x256xf32>
    %1 = vector.shape_cast %0 : vector<1x4x256xf32> to vector<4x256xf32>
    %c0_2 = arith.constant 0 : index
    %c0_3 = arith.constant 0 : index
    %2 = vector.load %arg2[%c0_2, %c0_3] : memref<256x64xf32, #tpu.memory_space<vmem>>, vector<256x64xf32>
    %cst = arith.constant dense<0.000000e+00> : vector<4x64xf32>
    %3 = tpu.matmul %1, %2, %cst {dimension_numbers = #tpu.dot_dimension_numbers<[1], [0], [0], [1], [0, 0, 1, 1], [], []>} : vector<4x256xf32>, vector<256x64xf32>, vector<4x64xf32> -> vector<4x64xf32>
    %c0_4 = arith.constant 0 : index
    %c0_5 = arith.constant 0 : index
    %4 = vector.load %arg3[%c0_4, %c0_5] : memref<256x16xf32, #tpu.memory_space<vmem>>, vector<256x16xf32>
    %cst_6 = arith.constant dense<0.000000e+00> : vector<4x16xf32>
    %5 = tpu.matmul %1, %4, %cst_6 {dimension_numbers = #tpu.dot_dimension_numbers<[1], [0], [0], [1], [0, 0, 1, 1], [], []>} : vector<4x256xf32>, vector<256x16xf32>, vector<4x16xf32> -> vector<4x16xf32>
    %cst_7 = arith.constant 0.000000e+00 : f32
    %6 = vector.broadcast %cst_7 : f32 to vector<1x256xf32>
    %7 = arith.truncf %1 : vector<4x256xf32> to vector<4x256xbf16>
    %c0_8 = arith.constant 0 : index
    %c0_9 = arith.constant 0 : index
    %c0_10 = arith.constant 0 : index
    %8 = vector.load %arg4[%c0_8, %c0_9, %c0_10] : memref<3x80x4xbf16, #tpu.memory_space<vmem>>, vector<1x80x4xbf16>
    %9 = vector.shape_cast %8 : vector<1x80x4xbf16> to vector<80x4xbf16>
    %cst_11 = arith.constant dense<0.000000e+00> : vector<80x256xf32>
    %10 = tpu.matmul %9, %7, %cst_11 {dimension_numbers = #tpu.dot_dimension_numbers<[1], [0], [0], [1], [0, 0, 1, 1], [], []>} : vector<80x4xbf16>, vector<4x256xbf16>, vector<80x256xf32> -> vector<80x256xf32>
    %c0_12 = arith.constant 0 : index
    %c0_13 = arith.constant 0 : index
    %c0_14 = arith.constant 0 : index
    %11 = vector.load %arg5[%c0_12, %c0_13, %c0_14] : memref<3x80x1xf32, #tpu.memory_space<vmem>>, vector<1x80x1xf32>
    %12 = vector.shape_cast %11 : vector<1x80x1xf32> to vector<80x1xf32>
    %13 = vector.broadcast %12 : vector<80x1xf32> to vector<80x256xf32>
    %14 = arith.addf %10, %13 : vector<80x256xf32>
    %cst_15 = arith.constant 0.000000e+00 : f32
    %15 = vector.broadcast %cst_15 : f32 to vector<80x256xf32>
    %16 = arith.maximumf %14, %15 : vector<80x256xf32>
    %cst_16 = arith.constant dense<0.000000e+00> : vector<80xf32>
    %17 = vector.multi_reduction <add>, %16, %cst_16 [1] : vector<80x256xf32> to vector<80xf32>
    %18 = vector.shape_cast %17 : vector<80xf32> to vector<80x1xf32>
    %cst_17 = arith.constant 2.560000e+02 : f32
    %19 = vector.broadcast %cst_17 : f32 to vector<80x1xf32>
    %20 = arith.divf %18, %19 : vector<80x1xf32>
    %c0_18 = arith.constant 0 : index
    %c0_19 = arith.constant 0 : index
    %c0_20 = arith.constant 0 : index
    %21 = vector.load %arg8[%c0_18, %c0_19, %c0_20] : memref<3x80x80xbf16, #tpu.memory_space<vmem>>, vector<1x80x80xbf16>
    %22 = vector.shape_cast %21 : vector<1x80x80xbf16> to vector<80x80xbf16>
    %23 = arith.truncf %20 : vector<80x1xf32> to vector<80x1xbf16>
    %cst_21 = arith.constant dense<0.000000e+00> : vector<80x1xf32>
    %24 = tpu.matmul %22, %23, %cst_21 {dimension_numbers = #tpu.dot_dimension_numbers<[1], [0], [0], [1], [0, 0, 1, 1], [], []>} : vector<80x80xbf16>, vector<80x1xbf16>, vector<80x1xf32> -> vector<80x1xf32>
    %c0_22 = arith.constant 0 : index
    %c0_23 = arith.constant 0 : index
    %c0_24 = arith.constant 0 : index
    %25 = vector.load %arg9[%c0_22, %c0_23, %c0_24] : memref<3x80x1xf32, #tpu.memory_space<vmem>>, vector<1x80x1xf32>
    %26 = vector.shape_cast %25 : vector<1x80x1xf32> to vector<80x1xf32>
    %27 = arith.addf %24, %26 : vector<80x1xf32>
    %cst_25 = arith.constant 6.000000e+00 : f32
    %28 = vector.broadcast %cst_25 : f32 to vector<80x1xf32>
    %29 = arith.divf %27, %28 : vector<80x1xf32>
    %cst_26 = arith.constant 5.000000e-01 : f32
    %30 = vector.broadcast %cst_26 : f32 to vector<80x1xf32>
    %31 = arith.addf %29, %30 : vector<80x1xf32>
    %cst_27 = arith.constant 0.000000e+00 : f32
    %cst_28 = arith.constant 1.000000e+00 : f32
    %32 = vector.broadcast %cst_27 : f32 to vector<80x1xf32>
    %33 = arith.maximumf %32, %31 : vector<80x1xf32>
    %34 = vector.broadcast %cst_28 : f32 to vector<80x1xf32>
    %35 = arith.minimumf %34, %33 : vector<80x1xf32>
    %c0_29 = arith.constant 0 : index
    %c0_30 = arith.constant 0 : index
    %c0_31 = arith.constant 0 : index
    %36 = vector.load %arg6[%c0_29, %c0_30, %c0_31] : memref<3x80x80xbf16, #tpu.memory_space<vmem>>, vector<1x80x80xbf16>
    %37 = vector.shape_cast %36 : vector<1x80x80xbf16> to vector<80x80xbf16>
    %38 = arith.truncf %16 : vector<80x256xf32> to vector<80x256xbf16>
    %cst_32 = arith.constant dense<0.000000e+00> : vector<80x256xf32>
    %39 = tpu.matmul %37, %38, %cst_32 {dimension_numbers = #tpu.dot_dimension_numbers<[1], [0], [0], [1], [0, 0, 1, 1], [], []>} : vector<80x80xbf16>, vector<80x256xbf16>, vector<80x256xf32> -> vector<80x256xf32>
    %c0_33 = arith.constant 0 : index
    %c0_34 = arith.constant 0 : index
    %c0_35 = arith.constant 0 : index
    %40 = vector.load %arg7[%c0_33, %c0_34, %c0_35] : memref<3x80x1xf32, #tpu.memory_space<vmem>>, vector<1x80x1xf32>
    %41 = vector.shape_cast %40 : vector<1x80x1xf32> to vector<80x1xf32>
    %42 = vector.broadcast %41 : vector<80x1xf32> to vector<80x256xf32>
    %43 = arith.addf %39, %42 : vector<80x256xf32>
    %cst_36 = arith.constant 0.000000e+00 : f32
    %44 = vector.broadcast %cst_36 : f32 to vector<80x256xf32>
    %45 = arith.maximumf %43, %44 : vector<80x256xf32>
    %c0_37 = arith.constant 0 : index
    %c0_38 = arith.constant 0 : index
    %c0_39 = arith.constant 0 : index
    %46 = vector.load %arg10[%c0_37, %c0_38, %c0_39] : memref<3x80x1xf32, #tpu.memory_space<vmem>>, vector<1x80x1xf32>
    %47 = vector.shape_cast %46 : vector<1x80x1xf32> to vector<80x1xf32>
    %48 = arith.mulf %35, %47 : vector<80x1xf32>
    %49 = vector.broadcast %48 : vector<80x1xf32> to vector<80x256xf32>
    %50 = arith.mulf %49, %45 : vector<80x256xf32>
    %cst_40 = arith.constant dense<0.000000e+00> : vector<256xf32>
    %51 = vector.multi_reduction <add>, %50, %cst_40 [0] : vector<80x256xf32> to vector<256xf32>
    %52 = vector.shape_cast %51 : vector<256xf32> to vector<1x256xf32>
    %53 = arith.addf %6, %52 : vector<1x256xf32>
    %54 = arith.truncf %3 : vector<4x64xf32> to vector<4x64xbf16>
    %c1 = arith.constant 1 : index
    %c0_41 = arith.constant 0 : index
    %c0_42 = arith.constant 0 : index
    %55 = vector.load %arg4[%c1, %c0_41, %c0_42] : memref<3x80x4xbf16, #tpu.memory_space<vmem>>, vector<1x80x4xbf16>
    %56 = vector.shape_cast %55 : vector<1x80x4xbf16> to vector<80x4xbf16>
    %cst_43 = arith.constant dense<0.000000e+00> : vector<80x64xf32>
    %57 = tpu.matmul %56, %54, %cst_43 {dimension_numbers = #tpu.dot_dimension_numbers<[1], [0], [0], [1], [0, 0, 1, 1], [], []>} : vector<80x4xbf16>, vector<4x64xbf16>, vector<80x64xf32> -> vector<80x64xf32>
    %c1_44 = arith.constant 1 : index
    %c0_45 = arith.constant 0 : index
    %c0_46 = arith.constant 0 : index
    %58 = vector.load %arg5[%c1_44, %c0_45, %c0_46] : memref<3x80x1xf32, #tpu.memory_space<vmem>>, vector<1x80x1xf32>
    %59 = vector.shape_cast %58 : vector<1x80x1xf32> to vector<80x1xf32>
    %60 = vector.broadcast %59 : vector<80x1xf32> to vector<80x64xf32>
    %61 = arith.addf %57, %60 : vector<80x64xf32>
    %cst_47 = arith.constant 0.000000e+00 : f32
    %62 = vector.broadcast %cst_47 : f32 to vector<80x64xf32>
    %63 = arith.maximumf %61, %62 : vector<80x64xf32>
    %cst_48 = arith.constant dense<0.000000e+00> : vector<80xf32>
    %64 = vector.multi_reduction <add>, %63, %cst_48 [1] : vector<80x64xf32> to vector<80xf32>
    %65 = vector.shape_cast %64 : vector<80xf32> to vector<80x1xf32>
    %cst_49 = arith.constant 6.400000e+01 : f32
    %66 = vector.broadcast %cst_49 : f32 to vector<80x1xf32>
    %67 = arith.divf %65, %66 : vector<80x1xf32>
    %c1_50 = arith.constant 1 : index
    %c0_51 = arith.constant 0 : index
    %c0_52 = arith.constant 0 : index
    %68 = vector.load %arg8[%c1_50, %c0_51, %c0_52] : memref<3x80x80xbf16, #tpu.memory_space<vmem>>, vector<1x80x80xbf16>
    %69 = vector.shape_cast %68 : vector<1x80x80xbf16> to vector<80x80xbf16>
    %70 = arith.truncf %67 : vector<80x1xf32> to vector<80x1xbf16>
    %cst_53 = arith.constant dense<0.000000e+00> : vector<80x1xf32>
    %71 = tpu.matmul %69, %70, %cst_53 {dimension_numbers = #tpu.dot_dimension_numbers<[1], [0], [0], [1], [0, 0, 1, 1], [], []>} : vector<80x80xbf16>, vector<80x1xbf16>, vector<80x1xf32> -> vector<80x1xf32>
    %c1_54 = arith.constant 1 : index
    %c0_55 = arith.constant 0 : index
    %c0_56 = arith.constant 0 : index
    %72 = vector.load %arg9[%c1_54, %c0_55, %c0_56] : memref<3x80x1xf32, #tpu.memory_space<vmem>>, vector<1x80x1xf32>
    %73 = vector.shape_cast %72 : vector<1x80x1xf32> to vector<80x1xf32>
    %74 = arith.addf %71, %73 : vector<80x1xf32>
    %cst_57 = arith.constant 6.000000e+00 : f32
    %75 = vector.broadcast %cst_57 : f32 to vector<80x1xf32>
    %76 = arith.divf %74, %75 : vector<80x1xf32>
    %cst_58 = arith.constant 5.000000e-01 : f32
    %77 = vector.broadcast %cst_58 : f32 to vector<80x1xf32>
    %78 = arith.addf %76, %77 : vector<80x1xf32>
    %cst_59 = arith.constant 0.000000e+00 : f32
    %cst_60 = arith.constant 1.000000e+00 : f32
    %79 = vector.broadcast %cst_59 : f32 to vector<80x1xf32>
    %80 = arith.maximumf %79, %78 : vector<80x1xf32>
    %81 = vector.broadcast %cst_60 : f32 to vector<80x1xf32>
    %82 = arith.minimumf %81, %80 : vector<80x1xf32>
    %c1_61 = arith.constant 1 : index
    %c0_62 = arith.constant 0 : index
    %c0_63 = arith.constant 0 : index
    %83 = vector.load %arg6[%c1_61, %c0_62, %c0_63] : memref<3x80x80xbf16, #tpu.memory_space<vmem>>, vector<1x80x80xbf16>
    %84 = vector.shape_cast %83 : vector<1x80x80xbf16> to vector<80x80xbf16>
    %85 = arith.truncf %63 : vector<80x64xf32> to vector<80x64xbf16>
    %cst_64 = arith.constant dense<0.000000e+00> : vector<80x64xf32>
    %86 = tpu.matmul %84, %85, %cst_64 {dimension_numbers = #tpu.dot_dimension_numbers<[1], [0], [0], [1], [0, 0, 1, 1], [], []>} : vector<80x80xbf16>, vector<80x64xbf16>, vector<80x64xf32> -> vector<80x64xf32>
    %c1_65 = arith.constant 1 : index
    %c0_66 = arith.constant 0 : index
    %c0_67 = arith.constant 0 : index
    %87 = vector.load %arg7[%c1_65, %c0_66, %c0_67] : memref<3x80x1xf32, #tpu.memory_space<vmem>>, vector<1x80x1xf32>
    %88 = vector.shape_cast %87 : vector<1x80x1xf32> to vector<80x1xf32>
    %89 = vector.broadcast %88 : vector<80x1xf32> to vector<80x64xf32>
    %90 = arith.addf %86, %89 : vector<80x64xf32>
    %cst_68 = arith.constant 0.000000e+00 : f32
    %91 = vector.broadcast %cst_68 : f32 to vector<80x64xf32>
    %92 = arith.maximumf %90, %91 : vector<80x64xf32>
    %c1_69 = arith.constant 1 : index
    %c0_70 = arith.constant 0 : index
    %c0_71 = arith.constant 0 : index
    %93 = vector.load %arg10[%c1_69, %c0_70, %c0_71] : memref<3x80x1xf32, #tpu.memory_space<vmem>>, vector<1x80x1xf32>
    %94 = vector.shape_cast %93 : vector<1x80x1xf32> to vector<80x1xf32>
    %95 = arith.mulf %82, %94 : vector<80x1xf32>
    %96 = vector.broadcast %95 : vector<80x1xf32> to vector<80x64xf32>
    %97 = arith.mulf %96, %92 : vector<80x64xf32>
    %cst_72 = arith.constant dense<0.000000e+00> : vector<64xf32>
    %98 = vector.multi_reduction <add>, %97, %cst_72 [0] : vector<80x64xf32> to vector<64xf32>
    %99 = vector.shape_cast %98 : vector<64xf32> to vector<1x64xf32>
    %c0_73 = arith.constant 0 : index
    %c0_74 = arith.constant 0 : index
    %100 = vector.load %arg11[%c0_73, %c0_74] : memref<64x256xf32, #tpu.memory_space<vmem>>, vector<64x256xf32>
    %cst_75 = arith.constant dense<0.000000e+00> : vector<1x256xf32>
    %101 = tpu.matmul %99, %100, %cst_75 {dimension_numbers = #tpu.dot_dimension_numbers<[1], [0], [0], [1], [0, 0, 1, 1], [], []>} : vector<1x64xf32>, vector<64x256xf32>, vector<1x256xf32> -> vector<1x256xf32>
    %102 = arith.addf %53, %101 : vector<1x256xf32>
    %103 = arith.truncf %5 : vector<4x16xf32> to vector<4x16xbf16>
    %c2 = arith.constant 2 : index
    %c0_76 = arith.constant 0 : index
    %c0_77 = arith.constant 0 : index
    %104 = vector.load %arg4[%c2, %c0_76, %c0_77] : memref<3x80x4xbf16, #tpu.memory_space<vmem>>, vector<1x80x4xbf16>
    %105 = vector.shape_cast %104 : vector<1x80x4xbf16> to vector<80x4xbf16>
    %cst_78 = arith.constant dense<0.000000e+00> : vector<80x16xf32>
    %106 = tpu.matmul %105, %103, %cst_78 {dimension_numbers = #tpu.dot_dimension_numbers<[1], [0], [0], [1], [0, 0, 1, 1], [], []>} : vector<80x4xbf16>, vector<4x16xbf16>, vector<80x16xf32> -> vector<80x16xf32>
    %c2_79 = arith.constant 2 : index
    %c0_80 = arith.constant 0 : index
    %c0_81 = arith.constant 0 : index
    %107 = vector.load %arg5[%c2_79, %c0_80, %c0_81] : memref<3x80x1xf32, #tpu.memory_space<vmem>>, vector<1x80x1xf32>
    %108 = vector.shape_cast %107 : vector<1x80x1xf32> to vector<80x1xf32>
    %109 = vector.broadcast %108 : vector<80x1xf32> to vector<80x16xf32>
    %110 = arith.addf %106, %109 : vector<80x16xf32>
    %cst_82 = arith.constant 0.000000e+00 : f32
    %111 = vector.broadcast %cst_82 : f32 to vector<80x16xf32>
    %112 = arith.maximumf %110, %111 : vector<80x16xf32>
    %cst_83 = arith.constant dense<0.000000e+00> : vector<80xf32>
    %113 = vector.multi_reduction <add>, %112, %cst_83 [1] : vector<80x16xf32> to vector<80xf32>
    %114 = vector.shape_cast %113 : vector<80xf32> to vector<80x1xf32>
    %cst_84 = arith.constant 1.600000e+01 : f32
    %115 = vector.broadcast %cst_84 : f32 to vector<80x1xf32>
    %116 = arith.divf %114, %115 : vector<80x1xf32>
    %c2_85 = arith.constant 2 : index
    %c0_86 = arith.constant 0 : index
    %c0_87 = arith.constant 0 : index
    %117 = vector.load %arg8[%c2_85, %c0_86, %c0_87] : memref<3x80x80xbf16, #tpu.memory_space<vmem>>, vector<1x80x80xbf16>
    %118 = vector.shape_cast %117 : vector<1x80x80xbf16> to vector<80x80xbf16>
    %119 = arith.truncf %116 : vector<80x1xf32> to vector<80x1xbf16>
    %cst_88 = arith.constant dense<0.000000e+00> : vector<80x1xf32>
    %120 = tpu.matmul %118, %119, %cst_88 {dimension_numbers = #tpu.dot_dimension_numbers<[1], [0], [0], [1], [0, 0, 1, 1], [], []>} : vector<80x80xbf16>, vector<80x1xbf16>, vector<80x1xf32> -> vector<80x1xf32>
    %c2_89 = arith.constant 2 : index
    %c0_90 = arith.constant 0 : index
    %c0_91 = arith.constant 0 : index
    %121 = vector.load %arg9[%c2_89, %c0_90, %c0_91] : memref<3x80x1xf32, #tpu.memory_space<vmem>>, vector<1x80x1xf32>
    %122 = vector.shape_cast %121 : vector<1x80x1xf32> to vector<80x1xf32>
    %123 = arith.addf %120, %122 : vector<80x1xf32>
    %cst_92 = arith.constant 6.000000e+00 : f32
    %124 = vector.broadcast %cst_92 : f32 to vector<80x1xf32>
    %125 = arith.divf %123, %124 : vector<80x1xf32>
    %cst_93 = arith.constant 5.000000e-01 : f32
    %126 = vector.broadcast %cst_93 : f32 to vector<80x1xf32>
    %127 = arith.addf %125, %126 : vector<80x1xf32>
    %cst_94 = arith.constant 0.000000e+00 : f32
    %cst_95 = arith.constant 1.000000e+00 : f32
    %128 = vector.broadcast %cst_94 : f32 to vector<80x1xf32>
    %129 = arith.maximumf %128, %127 : vector<80x1xf32>
    %130 = vector.broadcast %cst_95 : f32 to vector<80x1xf32>
    %131 = arith.minimumf %130, %129 : vector<80x1xf32>
    %c2_96 = arith.constant 2 : index
    %c0_97 = arith.constant 0 : index
    %c0_98 = arith.constant 0 : index
    %132 = vector.load %arg6[%c2_96, %c0_97, %c0_98] : memref<3x80x80xbf16, #tpu.memory_space<vmem>>, vector<1x80x80xbf16>
    %133 = vector.shape_cast %132 : vector<1x80x80xbf16> to vector<80x80xbf16>
    %134 = arith.truncf %112 : vector<80x16xf32> to vector<80x16xbf16>
    %cst_99 = arith.constant dense<0.000000e+00> : vector<80x16xf32>
    %135 = tpu.matmul %133, %134, %cst_99 {dimension_numbers = #tpu.dot_dimension_numbers<[1], [0], [0], [1], [0, 0, 1, 1], [], []>} : vector<80x80xbf16>, vector<80x16xbf16>, vector<80x16xf32> -> vector<80x16xf32>
    %c2_100 = arith.constant 2 : index
    %c0_101 = arith.constant 0 : index
    %c0_102 = arith.constant 0 : index
    %136 = vector.load %arg7[%c2_100, %c0_101, %c0_102] : memref<3x80x1xf32, #tpu.memory_space<vmem>>, vector<1x80x1xf32>
    %137 = vector.shape_cast %136 : vector<1x80x1xf32> to vector<80x1xf32>
    %138 = vector.broadcast %137 : vector<80x1xf32> to vector<80x16xf32>
    %139 = arith.addf %135, %138 : vector<80x16xf32>
    %cst_103 = arith.constant 0.000000e+00 : f32
    %140 = vector.broadcast %cst_103 : f32 to vector<80x16xf32>
    %141 = arith.maximumf %139, %140 : vector<80x16xf32>
    %c2_104 = arith.constant 2 : index
    %c0_105 = arith.constant 0 : index
    %c0_106 = arith.constant 0 : index
    %142 = vector.load %arg10[%c2_104, %c0_105, %c0_106] : memref<3x80x1xf32, #tpu.memory_space<vmem>>, vector<1x80x1xf32>
    %143 = vector.shape_cast %142 : vector<1x80x1xf32> to vector<80x1xf32>
    %144 = arith.mulf %131, %143 : vector<80x1xf32>
    %145 = vector.broadcast %144 : vector<80x1xf32> to vector<80x16xf32>
    %146 = arith.mulf %145, %141 : vector<80x16xf32>
    %cst_107 = arith.constant dense<0.000000e+00> : vector<16xf32>
    %147 = vector.multi_reduction <add>, %146, %cst_107 [0] : vector<80x16xf32> to vector<16xf32>
    %148 = vector.shape_cast %147 : vector<16xf32> to vector<1x16xf32>
    %c0_108 = arith.constant 0 : index
    %c0_109 = arith.constant 0 : index
    %149 = vector.load %arg12[%c0_108, %c0_109] : memref<16x256xf32, #tpu.memory_space<vmem>>, vector<16x256xf32>
    %cst_110 = arith.constant dense<0.000000e+00> : vector<1x256xf32>
    %150 = tpu.matmul %148, %149, %cst_110 {dimension_numbers = #tpu.dot_dimension_numbers<[1], [0], [0], [1], [0, 0, 1, 1], [], []>} : vector<1x16xf32>, vector<16x256xf32>, vector<1x256xf32> -> vector<1x256xf32>
    %151 = arith.addf %102, %150 : vector<1x256xf32>
    %c0_111 = arith.constant 0 : index
    %c0_112 = arith.constant 0 : index
    %152 = vector.load %arg13[%c0_111, %c0_112] : memref<1x1xf32, #tpu.memory_space<vmem>>, vector<1x1xf32>
    %153 = vector.broadcast %152 : vector<1x1xf32> to vector<1x256xf32>
    %154 = arith.addf %151, %153 : vector<1x256xf32>
    %c0_113 = arith.constant 0 : index
    %c0_114 = arith.constant 0 : index
    %c0_115 = arith.constant 0 : index
    %155 = vector.load %arg14[%c0_113, %c0_114, %c0_115] : memref<1x1x256xf32, #tpu.memory_space<vmem>>, vector<1x1x256xf32>
    %156 = vector.shape_cast %155 : vector<1x1x256xf32> to vector<1x256xf32>
    %157 = vector.shape_cast %154 : vector<1x256xf32> to vector<1x1x256xf32>
    tpu.vector_store %arg14[%c0_113, %c0_114, %c0_115], %157 {strides = array<i32>} : memref<1x1x256xf32, #tpu.memory_space<vmem>>, vector<1x1x256xf32>,
    return
  }
  func.func @transform_0(%arg0: i32) -> (i32, i32, i32) {
    %c0_i32 = arith.constant 0 : i32
    %c0_i32_0 = arith.constant 0 : i32
    %c0_i32_1 = arith.constant 0 : i32
    return %arg0, %c0_i32, %c0_i32_0 : i32, i32, i32
  }
  func.func @transform_1(%arg0: i32) -> (i32, i32) {
    %c0_i32 = arith.constant 0 : i32
    %c0_i32_0 = arith.constant 0 : i32
    %c0_i32_1 = arith.constant 0 : i32
    return %c0_i32, %c0_i32_0 : i32, i32
  }
  func.func @transform_2(%arg0: i32) -> (i32, i32) {
    %c0_i32 = arith.constant 0 : i32
    %c0_i32_0 = arith.constant 0 : i32
    %c0_i32_1 = arith.constant 0 : i32
    return %c0_i32, %c0_i32_0 : i32, i32
  }
  func.func @transform_3(%arg0: i32) -> (i32, i32, i32) {
    %c0_i32 = arith.constant 0 : i32
    %c0_i32_0 = arith.constant 0 : i32
    %c0_i32_1 = arith.constant 0 : i32
    %c0_i32_2 = arith.constant 0 : i32
    return %c0_i32, %c0_i32_0, %c0_i32_1 : i32, i32, i32
  }
  func.func @transform_4(%arg0: i32) -> (i32, i32, i32) {
    %c0_i32 = arith.constant 0 : i32
    %c0_i32_0 = arith.constant 0 : i32
    %c0_i32_1 = arith.constant 0 : i32
    %c0_i32_2 = arith.constant 0 : i32
    return %c0_i32, %c0_i32_0, %c0_i32_1 : i32, i32, i32
  }
  func.func @transform_5(%arg0: i32) -> (i32, i32, i32) {
    %c0_i32 = arith.constant 0 : i32
    %c0_i32_0 = arith.constant 0 : i32
    %c0_i32_1 = arith.constant 0 : i32
    %c0_i32_2 = arith.constant 0 : i32
    return %c0_i32, %c0_i32_0, %c0_i32_1 : i32, i32, i32
  }
  func.func @transform_6(%arg0: i32) -> (i32, i32, i32) {
    %c0_i32 = arith.constant 0 : i32
    %c0_i32_0 = arith.constant 0 : i32
    %c0_i32_1 = arith.constant 0 : i32
    %c0_i32_2 = arith.constant 0 : i32
    return %c0_i32, %c0_i32_0, %c0_i32_1 : i32, i32, i32
  }
  func.func @transform_7(%arg0: i32) -> (i32, i32, i32) {
    %c0_i32 = arith.constant 0 : i32
    %c0_i32_0 = arith.constant 0 : i32
    %c0_i32_1 = arith.constant 0 : i32
    %c0_i32_2 = arith.constant 0 : i32
    return %c0_i32, %c0_i32_0, %c0_i32_1 : i32, i32, i32
  }
  func.func @transform_8(%arg0: i32) -> (i32, i32, i32) {
    %c0_i32 = arith.constant 0 : i32
    %c0_i32_0 = arith.constant 0 : i32
    %c0_i32_1 = arith.constant 0 : i32
    %c0_i32_2 = arith.constant 0 : i32
    return %c0_i32, %c0_i32_0, %c0_i32_1 : i32, i32, i32
  }
  func.func @transform_9(%arg0: i32) -> (i32, i32, i32) {
    %c0_i32 = arith.constant 0 : i32
    %c0_i32_0 = arith.constant 0 : i32
    %c0_i32_1 = arith.constant 0 : i32
    %c0_i32_2 = arith.constant 0 : i32
    return %c0_i32, %c0_i32_0, %c0_i32_1 : i32, i32, i32
  }
  func.func @transform_10(%arg0: i32) -> (i32, i32) {
    %c0_i32 = arith.constant 0 : i32
    %c0_i32_0 = arith.constant 0 : i32
    %c0_i32_1 = arith.constant 0 : i32
    return %c0_i32, %c0_i32_0 : i32, i32
  }
  func.func @transform_11(%arg0: i32) -> (i32, i32) {
    %c0_i32 = arith.constant 0 : i32
    %c0_i32_0 = arith.constant 0 : i32
    %c0_i32_1 = arith.constant 0 : i32
    return %c0_i32, %c0_i32_0 : i32, i32
  }
  func.func @transform_12(%arg0: i32) -> (i32, i32) {
    %c0_i32 = arith.constant 0 : i32
    %c0_i32_0 = arith.constant 0 : i32
    %c0_i32_1 = arith.constant 0 : i32
    return %c0_i32, %c0_i32_0 : i32, i32
  }
  func.func @transform_13(%arg0: i32) -> (i32, i32, i32) {
    %c0_i32 = arith.constant 0 : i32
    %c0_i32_0 = arith.constant 0 : i32
    %c0_i32_1 = arith.constant 0 : i32
    return %arg0, %c0_i32, %c0_i32_0 : i32, i32, i32
  }
}

</mosaic_0001>

<llo_original>
// kernel: unet_dyhead_forward.1
$region0: #{unet_dyhead_forward.1}
  #allocation0 [shape = 'u32[]', space=smem, size = 0x4, offset = 0x4, fixed_abs, tag = 'smem constant byte address 0x4 - core index']
  #allocation1 [shape = 'u32[144,128]{1,0:T(1,128)}', space=vmem, size = 0x12000, scoped, tag = 'internal scratch']
  #allocation2 [shape = 'f32[1,1]{1,0:T(1,128)S(1)}', space=vmem, size = 0x200, scoped, tag = 'scoped memory for unet_dyhead_forward.1']
  %s0 = inlined_call_operand.vmem [shape: f32[2,4,256], index: 0, kind: input, shape index: {}]
  %s1 = inlined_call_operand.vmem [shape: f32[256,64], index: 1, kind: input, shape index: {}]
  %s2 = inlined_call_operand.vmem [shape: f32[256,16], index: 2, kind: input, shape index: {}]
  %s3 = inlined_call_operand.vmem [shape: bf16[3,80,4], index: 3, kind: input, shape index: {}]
  %s4 = inlined_call_operand.vmem [shape: f32[3,80,1], index: 4, kind: input, shape index: {}]
  %s5 = inlined_call_operand.vmem [shape: bf16[3,80,80], index: 5, kind: input, shape index: {}]
  %s6 = inlined_call_operand.vmem [shape: f32[3,80,1], index: 6, kind: input, shape index: {}]
  %s7 = inlined_call_operand.vmem [shape: bf16[3,80,80], index: 7, kind: input, shape index: {}]
  %s8 = inlined_call_operand.vmem [shape: f32[3,80,1], index: 8, kind: input, shape index: {}]
  %s9 = inlined_call_operand.vmem [shape: f32[3,80,1], index: 9, kind: input, shape index: {}]
  %s10 = inlined_call_operand.vmem [shape: f32[64,256], index: 10, kind: input, shape index: {}]
  %s11 = inlined_call_operand.vmem [shape: f32[16,256], index: 11, kind: input, shape index: {}]
  %s12 = inlined_call_operand.<no memory space> [shape: f32[1,1], index: 12, kind: input, shape index: {}]
  %s13 = inlined_call_operand.vmem [shape: f32[2,1,256], index: 13, kind: output, shape index: {}]
  %s14 = sld [smem:[#allocation0]]
  $region85: #{unet_dyhead_forward.1} parent=0
    _
  %s16 = ssub.s32 1, %s14
  %s17 = scalar_select 0, %s16, %s14
  %v18 = vstv %s12
  %19 = vst [vmem:[#allocation2] sm:$0x1] %v18
  loop: start=0, step=1, limit=4
  $region2: #{unet_dyhead_forward.1} parent=0 // loop_pre_header
    _
  $region3: #{unet_dyhead_forward.1} parent=0 // loop_header
    %s21 = sphi 0, %s25
    %p22 = scmp.ge.s32.totalorder %s21, 4
    %s31 = sphi 0, %s33
    %s34 = sphi 0, %s31
    %s35 = sphi 0, %s34
    %s51 = sphi 0, %s35
    %s55 = sphi 0, %s55
    %s57 = sphi 0, %s55
    %s58 = sphi 0, %s57
    %s72 = sphi 0, %s58
    %s76 = sphi 0, %s76
    %s78 = sphi 0, %s76
    %s79 = sphi 0, %s78
    %s93 = sphi 0, %s79
    %s97 = sphi 0, %s97
    %s99 = sphi 0, %s97
    %s100 = sphi 0, %s99
    %s114 = sphi 0, %s100
    %s118 = sphi 0, %s118
    %s120 = sphi 0, %s118
    %s121 = sphi 0, %s120
    %s135 = sphi 0, %s121
    %s139 = sphi 0, %s139
    %s141 = sphi 0, %s139
    %s142 = sphi 0, %s141
    %s156 = sphi 0, %s142
    %s160 = sphi 0, %s160
    %s162 = sphi 0, %s160
    %s163 = sphi 0, %s162
    %s177 = sphi 0, %s163
    %s181 = sphi 0, %s181
    %s183 = sphi 0, %s181
    %s184 = sphi 0, %s183
    %s198 = sphi 0, %s184
    %s202 = sphi 0, %s202
    %s204 = sphi 0, %s202
    %s205 = sphi 0, %s204
    %s219 = sphi 0, %s205
    %s223 = sphi 0, %s223
    %s225 = sphi 0, %s223
    %s226 = sphi 0, %s225
    %s240 = sphi 0, %s226
    %s244 = sphi 0, %s244
    %s246 = sphi 0, %s244
    %s247 = sphi 0, %s246
    %s261 = sphi 0, %s247
    %s265 = sphi 0, %s265
    %s267 = sphi 0, %s265
    %s268 = sphi 0, %s267
    %s282 = sphi 0, %s268
    %s286 = sphi 0, %s286
    %s288 = sphi 0, %s286
    %s289 = sphi 0, %s288
    %s303 = sphi 0, %s289
    %s309 = sphi 0, %s311
    %s312 = sphi 0, %s309
    %s313 = sphi 0, %s312
    %s329 = sphi 0, %s313
  $region4: #{unet_dyhead_forward.1} parent=0 // loop_header_branch
    %24 = sbr.rel (%p22) target = $region8
  $region5: #{unet_dyhead_forward.1} parent=0 // loop_body
    %s26 = ssub.s32 %s21, 1
    %s27 = ssub.s32 %s21, 2
    %s28 = sadd.s32 %s21, 1
    %s29 = ssub.s32 %s21, %s28
    %p30 = scmp.eq.s32.totalorder %s29, 0
    %s32 = sadd.s32 %s31, 1
    %s33 = scalar_select %p30, %s31, %s32
    %p36 = pneg %p30
    %p37 = scmp.eq.s32.totalorder %s21, 1
    %p38 = por %p36, %p37
    %p39 = scmp.ne.s32.totalorder %s31, %s34
    %p40 = scmp.eq.s32.totalorder %s21, 0
    %p41 = por %p39, %p40
    %p42 = scmp.ne.s32.totalorder %s31, %s34
    %p43 = scmp.eq.s32.totalorder %s26, 1
    %p44 = por %p42, %p43
    %p45 = scmp.ne.s32.totalorder %s34, %s35
    %p46 = scmp.eq.s32.totalorder %s26, 0
    %p47 = por %p45, %p46
    %p48 = scmp.ne.s32.totalorder %s34, %s35
    %p49 = scmp.eq.s32.totalorder %s27, 1
    %p50 = por %p48, %p49
    %p52 = scmp.ne.s32.totalorder %s35, %s51
    %p53 = scmp.eq.s32.totalorder %s27, 0
    %p54 = por %p52, %p53
    %s56 = sadd.s32 %s55, 1
    %p59 = scmp.eq.s32.totalorder %s21, 1
    %p60 = scmp.ne.s32.totalorder %s55, %s57
    %p61 = scmp.eq.s32.totalorder %s21, 0
    %p62 = por %p60, %p61
    %p63 = scmp.ne.s32.totalorder %s55, %s57
    %p64 = scmp.eq.s32.totalorder %s26, 1
    %p65 = por %p63, %p64
    %p66 = scmp.ne.s32.totalorder %s57, %s58
    %p67 = scmp.eq.s32.totalorder %s26, 0
    %p68 = por %p66, %p67
    %p69 = scmp.ne.s32.totalorder %s57, %s58
    %p70 = scmp.eq.s32.totalorder %s27, 1
    %p71 = por %p69, %p70
    %p73 = scmp.ne.s32.totalorder %s58, %s72
    %p74 = scmp.eq.s32.totalorder %s27, 0
    %p75 = por %p73, %p74
    %s77 = sadd.s32 %s76, 1
    %p80 = scmp.eq.s32.totalorder %s21, 1
    %p81 = scmp.ne.s32.totalorder %s76, %s78
    %p82 = scmp.eq.s32.totalorder %s21, 0
    %p83 = por %p81, %p82
    %p84 = scmp.ne.s32.totalorder %s76, %s78
    %p85 = scmp.eq.s32.totalorder %s26, 1
    %p86 = por %p84, %p85
    %p87 = scmp.ne.s32.totalorder %s78, %s79
    %p88 = scmp.eq.s32.totalorder %s26, 0
    %p89 = por %p87, %p88
    %p90 = scmp.ne.s32.totalorder %s78, %s79
    %p91 = scmp.eq.s32.totalorder %s27, 1
    %p92 = por %p90, %p91
    %p94 = scmp.ne.s32.totalorder %s79, %s93
    %p95 = scmp.eq.s32.totalorder %s27, 0
    %p96 = por %p94, %p95
    %s98 = sadd.s32 %s97, 1
    %p101 = scmp.eq.s32.totalorder %s21, 1
    %p102 = scmp.ne.s32.totalorder %s97, %s99
    %p103 = scmp.eq.s32.totalorder %s21, 0
    %p104 = por %p102, %p103
    %p105 = scmp.ne.s32.totalorder %s97, %s99
    %p106 = scmp.eq.s32.totalorder %s26, 1
    %p107 = por %p105, %p106
    %p108 = scmp.ne.s32.totalorder %s99, %s100
    %p109 = scmp.eq.s32.totalorder %s26, 0
    %p110 = por %p108, %p109
    %p111 = scmp.ne.s32.totalorder %s99, %s100
    %p112 = scmp.eq.s32.totalorder %s27, 1
    %p113 = por %p111, %p112
    %p115 = scmp.ne.s32.totalorder %s100, %s114
    %p116 = scmp.eq.s32.totalorder %s27, 0
    %p117 = por %p115, %p116
    %s119 = sadd.s32 %s118, 1
    %p122 = scmp.eq.s32.totalorder %s21, 1
    %p123 = scmp.ne.s32.totalorder %s118, %s120
    %p124 = scmp.eq.s32.totalorder %s21, 0
    %p125 = por %p123, %p124
    %p126 = scmp.ne.s32.totalorder %s118, %s120
    %p127 = scmp.eq.s32.totalorder %s26, 1
    %p128 = por %p126, %p127
    %p129 = scmp.ne.s32.totalorder %s120, %s121
    %p130 = scmp.eq.s32.totalorder %s26, 0
    %p131 = por %p129, %p130
    %p132 = scmp.ne.s32.totalorder %s120, %s121
    %p133 = scmp.eq.s32.totalorder %s27, 1
    %p134 = por %p132, %p133
    %p136 = scmp.ne.s32.totalorder %s121, %s135
    %p137 = scmp.eq.s32.totalorder %s27, 0
    %p138 = por %p136, %p137
    %s140 = sadd.s32 %s139, 1
    %p143 = scmp.eq.s32.totalorder %s21, 1
    %p144 = scmp.ne.s32.totalorder %s139, %s141
    %p145 = scmp.eq.s32.totalorder %s21, 0
    %p146 = por %p144, %p145
    %p147 = scmp.ne.s32.totalorder %s139, %s141
    %p148 = scmp.eq.s32.totalorder %s26, 1
    %p149 = por %p147, %p148
    %p150 = scmp.ne.s32.totalorder %s141, %s142
    %p151 = scmp.eq.s32.totalorder %s26, 0
    %p152 = por %p150, %p151
    %p153 = scmp.ne.s32.totalorder %s141, %s142
    %p154 = scmp.eq.s32.totalorder %s27, 1
    %p155 = por %p153, %p154
    %p157 = scmp.ne.s32.totalorder %s142, %s156
    %p158 = scmp.eq.s32.totalorder %s27, 0
    %p159 = por %p157, %p158
    %s161 = sadd.s32 %s160, 1
    %p164 = scmp.eq.s32.totalorder %s21, 1
    %p165 = scmp.ne.s32.totalorder %s160, %s162
    %p166 = scmp.eq.s32.totalorder %s21, 0
    %p167 = por %p165, %p166
    %p168 = scmp.ne.s32.totalorder %s160, %s162
    %p169 = scmp.eq.s32.totalorder %s26, 1
    %p170 = por %p168, %p169
    %p171 = scmp.ne.s32.totalorder %s162, %s163
    %p172 = scmp.eq.s32.totalorder %s26, 0
    %p173 = por %p171, %p172
    %p174 = scmp.ne.s32.totalorder %s162, %s163
    %p175 = scmp.eq.s32.totalorder %s27, 1
    %p176 = por %p174, %p175
    %p178 = scmp.ne.s32.totalorder %s163, %s177
    %p179 = scmp.eq.s32.totalorder %s27, 0
    %p180 = por %p178, %p179
    %s182 = sadd.s32 %s181, 1
    %p185 = scmp.eq.s32.totalorder %s21, 1
    %p186 = scmp.ne.s32.totalorder %s181, %s183
    %p187 = scmp.eq.s32.totalorder %s21, 0
    %p188 = por %p186, %p187
    %p189 = scmp.ne.s32.totalorder %s181, %s183
    %p190 = scmp.eq.s32.totalorder %s26, 1
    %p191 = por %p189, %p190
    %p192 = scmp.ne.s32.totalorder %s183, %s184
    %p193 = scmp.eq.s32.totalorder %s26, 0
    %p194 = por %p192, %p193
    %p195 = scmp.ne.s32.totalorder %s183, %s184
    %p196 = scmp.eq.s32.totalorder %s27, 1
    %p197 = por %p195, %p196
    %p199 = scmp.ne.s32.totalorder %s184, %s198
    %p200 = scmp.eq.s32.totalorder %s27, 0
    %p201 = por %p199, %p200
    %s203 = sadd.s32 %s202, 1
    %p206 = scmp.eq.s32.totalorder %s21, 1
    %p207 = scmp.ne.s32.totalorder %s202, %s204
    %p208 = scmp.eq.s32.totalorder %s21, 0
    %p209 = por %p207, %p208
    %p210 = scmp.ne.s32.totalorder %s202, %s204
    %p211 = scmp.eq.s32.totalorder %s26, 1
    %p212 = por %p210, %p211
    %p213 = scmp.ne.s32.totalorder %s204, %s205
    %p214 = scmp.eq.s32.totalorder %s26, 0
    %p215 = por %p213, %p214
    %p216 = scmp.ne.s32.totalorder %s204, %s205
    %p217 = scmp.eq.s32.totalorder %s27, 1
    %p218 = por %p216, %p217
    %p220 = scmp.ne.s32.totalorder %s205, %s219
    %p221 = scmp.eq.s32.totalorder %s27, 0
    %p222 = por %p220, %p221
    %s224 = sadd.s32 %s223, 1
    %p227 = scmp.eq.s32.totalorder %s21, 1
    %p228 = scmp.ne.s32.totalorder %s223, %s225
    %p229 = scmp.eq.s32.totalorder %s21, 0
    %p230 = por %p228, %p229
    %p231 = scmp.ne.s32.totalorder %s223, %s225
    %p232 = scmp.eq.s32.totalorder %s26, 1
    %p233 = por %p231, %p232
    %p234 = scmp.ne.s32.totalorder %s225, %s226
    %p235 = scmp.eq.s32.totalorder %s26, 0
    %p236 = por %p234, %p235
    %p237 = scmp.ne.s32.totalorder %s225, %s226
    %p238 = scmp.eq.s32.totalorder %s27, 1
    %p239 = por %p237, %p238
    %p241 = scmp.ne.s32.totalorder %s226, %s240
    %p242 = scmp.eq.s32.totalorder %s27, 0
    %p243 = por %p241, %p242
    %s245 = sadd.s32 %s244, 1
    %p248 = scmp.eq.s32.totalorder %s21, 1
    %p249 = scmp.ne.s32.totalorder %s244, %s246
    %p250 = scmp.eq.s32.totalorder %s21, 0
    %p251 = por %p249, %p250
    %p252 = scmp.ne.s32.totalorder %s244, %s246
    %p253 = scmp.eq.s32.totalorder %s26, 1
    %p254 = por %p252, %p253
    %p255 = scmp.ne.s32.totalorder %s246, %s247
    %p256 = scmp.eq.s32.totalorder %s26, 0
    %p257 = por %p255, %p256
    %p258 = scmp.ne.s32.totalorder %s246, %s247
    %p259 = scmp.eq.s32.totalorder %s27, 1
    %p260 = por %p258, %p259
    %p262 = scmp.ne.s32.totalorder %s247, %s261
    %p263 = scmp.eq.s32.totalorder %s27, 0
    %p264 = por %p262, %p263
    %s266 = sadd.s32 %s265, 1
    %p269 = scmp.eq.s32.totalorder %s21, 1
    %p270 = scmp.ne.s32.totalorder %s265, %s267
    %p271 = scmp.eq.s32.totalorder %s21, 0
    %p272 = por %p270, %p271
    %p273 = scmp.ne.s32.totalorder %s265, %s267
    %p274 = scmp.eq.s32.totalorder %s26, 1
    %p275 = por %p273, %p274
    %p276 = scmp.ne.s32.totalorder %s267, %s268
    %p277 = scmp.eq.s32.totalorder %s26, 0
    %p278 = por %p276, %p277
    %p279 = scmp.ne.s32.totalorder %s267, %s268
    %p280 = scmp.eq.s32.totalorder %s27, 1
    %p281 = por %p279, %p280
    %p283 = scmp.ne.s32.totalorder %s268, %s282
    %p284 = scmp.eq.s32.totalorder %s27, 0
    %p285 = por %p283, %p284
    %s287 = sadd.s32 %s286, 1
    %p290 = scmp.eq.s32.totalorder %s21, 1
    %p291 = scmp.ne.s32.totalorder %s286, %s288
    %p292 = scmp.eq.s32.totalorder %s21, 0
    %p293 = por %p291, %p292
    %p294 = scmp.ne.s32.totalorder %s286, %s288
    %p295 = scmp.eq.s32.totalorder %s26, 1
    %p296 = por %p294, %p295
    %p297 = scmp.ne.s32.totalorder %s288, %s289
    %p298 = scmp.eq.s32.totalorder %s26, 0
    %p299 = por %p297, %p298
    %p300 = scmp.ne.s32.totalorder %s288, %s289
    %p301 = scmp.eq.s32.totalorder %s27, 1
    %p302 = por %p300, %p301
    %p304 = scmp.ne.s32.totalorder %s289, %s303
    %p305 = scmp.eq.s32.totalorder %s27, 0
    %p306 = por %p304, %p305
    %s307 = ssub.s32 %s21, %s28
    %p308 = scmp.eq.s32.totalorder %s307, 0
    %s310 = sadd.s32 %s309, 1
    %s311 = scalar_select %p308, %s309, %s310
    %p314 = pneg %p308
    %p315 = scmp.eq.s32.totalorder %s21, 1
    %p316 = por %p314, %p315
    %p317 = scmp.ne.s32.totalorder %s309, %s312
    %p318 = scmp.eq.s32.totalorder %s21, 0
    %p319 = por %p317, %p318
    %p320 = scmp.ne.s32.totalorder %s309, %s312
    %p321 = scmp.eq.s32.totalorder %s26, 1
    %p322 = por %p320, %p321
    %p323 = scmp.ne.s32.totalorder %s312, %s313
    %p324 = scmp.eq.s32.totalorder %s26, 0
    %p325 = por %p323, %p324
    %p326 = scmp.ne.s32.totalorder %s312, %s313
    %p327 = scmp.eq.s32.totalorder %s27, 1
    %p328 = por %p326, %p327
    %p330 = scmp.ne.s32.totalorder %s313, %s329
    %p331 = scmp.eq.s32.totalorder %s27, 0
    %p332 = por %p330, %p331
    %p333 = scmp.le.s32.totalorder 1, %s21
    %p334 = scmp.lt.s32.totalorder %s21, 3
    %p335 = pnand %p333, %p334
    %p336 = pneg %p335
    // Predicated region
    $region9: #{unet_dyhead_forward.1} parent=5 // pred_check
      _
    $region10: #{unet_dyhead_forward.1} parent=5 // pred_check_branch
      %338 = sbr.rel (%p335) target = $region12
    $region11: #{unet_dyhead_forward.1} parent=5 // pred_region
      %s339 = ssub.s32 %s21, 1
      // Predicated region
      $region13: #{unet_dyhead_forward.1} parent=11 // pred_check
        %p340 = pneg %p68
      $region14: #{unet_dyhead_forward.1} parent=11 // pred_check_branch
        %342 = sbr.rel (%p340) target = $region16
      $region15: #{unet_dyhead_forward.1} parent=11 // pred_region
        _
      $region16: #{unet_dyhead_forward.1} parent=11 // pred_fallthru
        _
      // Predicated region
      $region17: #{unet_dyhead_forward.1} parent=11 // pred_check
        %p343 = pneg %p89
      $region18: #{unet_dyhead_forward.1} parent=11 // pred_check_branch
        %345 = sbr.rel (%p343) target = $region20
      $region19: #{unet_dyhead_forward.1} parent=11 // pred_region
        _
      $region20: #{unet_dyhead_forward.1} parent=11 // pred_fallthru
        _
      // Predicated region
      $region21: #{unet_dyhead_forward.1} parent=11 // pred_check
        %p346 = pneg %p110
      $region22: #{unet_dyhead_forward.1} parent=11 // pred_check_branch
        %348 = sbr.rel (%p346) target = $region24
      $region23: #{unet_dyhead_forward.1} parent=11 // pred_region
        _
      $region24: #{unet_dyhead_forward.1} parent=11 // pred_fallthru
        _
      // Predicated region
      $region25: #{unet_dyhead_forward.1} parent=11 // pred_check
        %p349 = pneg %p131
      $region26: #{unet_dyhead_forward.1} parent=11 // pred_check_branch
        %351 = sbr.rel (%p349) target = $region28
      $region27: #{unet_dyhead_forward.1} parent=11 // pred_region
        _
      $region28: #{unet_dyhead_forward.1} parent=11 // pred_fallthru
        _
      // Predicated region
      $region29: #{unet_dyhead_forward.1} parent=11 // pred_check
        %p352 = pneg %p152
      $region30: #{unet_dyhead_forward.1} parent=11 // pred_check_branch
        %354 = sbr.rel (%p352) target = $region32
      $region31: #{unet_dyhead_forward.1} parent=11 // pred_region
        _
      $region32: #{unet_dyhead_forward.1} parent=11 // pred_fallthru
        _
      // Predicated region
      $region33: #{unet_dyhead_forward.1} parent=11 // pred_check
        %p355 = pneg %p173
      $region34: #{unet_dyhead_forward.1} parent=11 // pred_check_branch
        %357 = sbr.rel (%p355) target = $region36
      $region35: #{unet_dyhead_forward.1} parent=11 // pred_region
        _
      $region36: #{unet_dyhead_forward.1} parent=11 // pred_fallthru
        _
      // Predicated region
      $region37: #{unet_dyhead_forward.1} parent=11 // pred_check
        %p358 = pneg %p194
      $region38: #{unet_dyhead_forward.1} parent=11 // pred_check_branch
        %360 = sbr.rel (%p358) target = $region40
      $region39: #{unet_dyhead_forward.1} parent=11 // pred_region
        _
      $region40: #{unet_dyhead_forward.1} parent=11 // pred_fallthru
        _
      // Predicated region
      $region41: #{unet_dyhead_forward.1} parent=11 // pred_check
        %p361 = pneg %p215
      $region42: #{unet_dyhead_forward.1} parent=11 // pred_check_branch
        %363 = sbr.rel (%p361) target = $region44
      $region43: #{unet_dyhead_forward.1} parent=11 // pred_region
        _
      $region44: #{unet_dyhead_forward.1} parent=11 // pred_fallthru
        _
      // Predicated region
      $region45: #{unet_dyhead_forward.1} parent=11 // pred_check
        %p364 = pneg %p236
      $region46: #{unet_dyhead_forward.1} parent=11 // pred_check_branch
        %366 = sbr.rel (%p364) target = $region48
      $region47: #{unet_dyhead_forward.1} parent=11 // pred_region
        _
      $region48: #{unet_dyhead_forward.1} parent=11 // pred_fallthru
        _
      // Predicated region
      $region49: #{unet_dyhead_forward.1} parent=11 // pred_check
        %p367 = pneg %p257
      $region50: #{unet_dyhead_forward.1} parent=11 // pred_check_branch
        %369 = sbr.rel (%p367) target = $region52
      $region51: #{unet_dyhead_forward.1} parent=11 // pred_region
        _
      $region52: #{unet_dyhead_forward.1} parent=11 // pred_fallthru
        _
      // Predicated region
      $region53: #{unet_dyhead_forward.1} parent=11 // pred_check
        %p370 = pneg %p278
      $region54: #{unet_dyhead_forward.1} parent=11 // pred_check_branch
        %372 = sbr.rel (%p370) target = $region56
      $region55: #{unet_dyhead_forward.1} parent=11 // pred_region
        _
      $region56: #{unet_dyhead_forward.1} parent=11 // pred_fallthru
        _
      // Predicated region
      $region57: #{unet_dyhead_forward.1} parent=11 // pred_check
        %p373 = pneg %p299
      $region58: #{unet_dyhead_forward.1} parent=11 // pred_check_branch
        %375 = sbr.rel (%p373) target = $region60
      $region59: #{unet_dyhead_forward.1} parent=11 // pred_region
        _
      $region60: #{unet_dyhead_forward.1} parent=11 // pred_fallthru
        _
    $region12: #{unet_dyhead_forward.1} parent=5 // pred_fallthru
      _
    %p376 = scmp.lt.s32.totalorder %s21, 2
    // Predicated region
    $region61: #{unet_dyhead_forward.1} parent=5 // pred_check
      %p377 = pneg %p376
    $region62: #{unet_dyhead_forward.1} parent=5 // pred_check_branch
      %379 = sbr.rel (%p377) target = $region64
    $region63: #{unet_dyhead_forward.1} parent=5 // pred_region
      // Predicated region
      $region65: #{unet_dyhead_forward.1} parent=63 // pred_check
        %p380 = pneg %p41
      $region66: #{unet_dyhead_forward.1} parent=63 // pred_check_branch
        %382 = sbr.rel (%p380) target = $region68
      $region67: #{unet_dyhead_forward.1} parent=63 // pred_region
        %p383 = scmp.lt.s32.totalorder %s21, 1
        %s384 = scalar_select %p383, %s21, 1
        %s385 = smul.addr %s384, 2
        %s386 = smul.addr %s385, 4
        %s387 = scalar_lea.vmem %s0, %s386
      $region68: #{unet_dyhead_forward.1} parent=63 // pred_fallthru
        _
    $region64: #{unet_dyhead_forward.1} parent=5 // pred_fallthru
      _
    %p388 = scmp.le.s32.totalorder 1, %s21
    %p389 = scmp.lt.s32.totalorder %s21, 3
    %p390 = pnand %p388, %p389
    %p391 = pneg %p390
    // Predicated region
    $region69: #{unet_dyhead_forward.1} parent=5 // pred_check
      _
    $region70: #{unet_dyhead_forward.1} parent=5 // pred_check_branch
      %393 = sbr.rel (%p390) target = $region72
    $region71: #{unet_dyhead_forward.1} parent=5 // pred_region
      %s394 = ssub.s32 %s21, 1
      %p395 = scmp.lt.s32.totalorder %s26, 1
      %s396 = scalar_select %p395, %s26, 1
      %s397 = smul.addr %s396, 2
      %s398 = smul.addr %s397, 4
      %s399 = scalar_lea.vmem %s0, %s398
      %p400 = pneg %p47
      %p401 = pneg %p44
      %p402 = pneg %p68
      %p403 = pneg %p65
      %p404 = pneg %p89
      %p405 = pneg %p86
      %p406 = pneg %p110
      %p407 = pneg %p107
      %p408 = pneg %p131
      %p409 = pneg %p128
      %p410 = pneg %p152
      %p411 = pneg %p149
      %p412 = pneg %p173
      %p413 = pneg %p170
      %p414 = pneg %p194
      %p415 = pneg %p191
      %p416 = pneg %p215
      %p417 = pneg %p212
      %p418 = pneg %p236
      %p419 = pneg %p233
      %p420 = pneg %p257
      %p421 = pneg %p254
      %p422 = pneg %p278
      %p423 = pneg %p275
      %p424 = pneg %p299
      %p425 = pneg %p296
      %p426 = pneg %p325
      %p427 = pneg %p322
      %p428 = scmp.lt.s32.totalorder %s26, 1
      %s429 = scalar_select %p428, %s26, 1
      %s430 = smul.addr %s429, 2
      %s431 = scalar_lea.vmem %s13, %s430
      %p432 = scmp.lt.s32.totalorder %s26, 1
      %s433 = scalar_select %p432, %s26, 1
      %s434 = smul.addr %s433, 2
      %s435 = smul.addr %s434, 4
      %s436 = scalar_lea.vmem %s0, %s435
      %p437 = scmp.lt.s32.totalorder %s26, 1
      %s438 = scalar_select %p437, %s26, 1
      %s439 = smul.addr %s438, 2
      %s440 = scalar_lea.vmem %s13, %s439
      %v442 = vld [vmem:[%s436] sm:$0xff]
      %v443 = vld [vmem:[%s1] sm:$0xff]
      %v444 = vld [vmem:[%s1 + $0x8] sm:$0xff]
      %v445 = vld [vmem:[%s1 + $0x10] sm:$0xff]
      %v446 = vld [vmem:[%s1 + $0x18] sm:$0xff]
      %v447 = vld [vmem:[%s1 + $0x20] sm:$0xff]
      %v448 = vld [vmem:[%s1 + $0x28] sm:$0xff]
      %v449 = vld [vmem:[%s1 + $0x30] sm:$0xff]
      %v450 = vld [vmem:[%s1 + $0x38] sm:$0xff]
      %v451 = vld [vmem:[%s1 + $0x40] sm:$0xff]
      %v452 = vld [vmem:[%s1 + $0x48] sm:$0xff]
      %v453 = vld [vmem:[%s1 + $0x50] sm:$0xff]
      %v454 = vld [vmem:[%s1 + $0x58] sm:$0xff]
      %v455 = vld [vmem:[%s1 + $0x60] sm:$0xff]
      %v456 = vld [vmem:[%s1 + $0x68] sm:$0xff]
      %v457 = vld [vmem:[%s1 + $0x70] sm:$0xff]
      %v458 = vld [vmem:[%s1 + $0x78] sm:$0xff]
      %v459 = vld [vmem:[%s1 + $0x80] sm:$0xff]
      %v460 = vld [vmem:[%s1 + $0x88] sm:$0xff]
      %v461 = vld [vmem:[%s1 + $0x90] sm:$0xff]
      %v462 = vld [vmem:[%s1 + $0x98] sm:$0xff]
      %v463 = vld [vmem:[%s1 + $0xa0] sm:$0xff]
      %v464 = vld [vmem:[%s1 + $0xa8] sm:$0xff]
      %v465 = vld [vmem:[%s1 + $0xb0] sm:$0xff]
      %v466 = vld [vmem:[%s1 + $0xb8] sm:$0xff]
      %v467 = vld [vmem:[%s1 + $0xc0] sm:$0xff]
      %v468 = vld [vmem:[%s1 + $0xc8] sm:$0xff]
      %v469 = vld [vmem:[%s1 + $0xd0] sm:$0xff]
      %v470 = vld [vmem:[%s1 + $0xd8] sm:$0xff]
      %v471 = vld [vmem:[%s1 + $0xe0] sm:$0xff]
      %v472 = vld [vmem:[%s1 + $0xe8] sm:$0xff]
      %v473 = vld [vmem:[%s1 + $0xf0] sm:$0xff]
      %v474 = vld [vmem:[%s1 + $0xf8] sm:$0xff]
      %v476 = vcombine.high %v442, %v442
      %478 = vmatprep.subr.mxu0 0.0
      %479 = vmatpush1.msra.mxu0 %v443
      %480 = vmatprep.subr.mxu0 0.0
      %481 = vmatpush1.msra.mxu0 %v444
      %482 = vmatprep.subr.mxu0 0.0
      %483 = vmatpush1.msra.mxu0 %v445
      %484 = vmatprep.subr.mxu0 0.0
      %485 = vmatpush1.msra.mxu0 %v446
      %486 = vmatprep.subr.mxu0 0.0
      %487 = vmatpush1.msra.mxu0 %v447
      %488 = vmatprep.subr.mxu0 0.0
      %489 = vmatpush1.msra.mxu0 %v448
      %490 = vmatprep.subr.mxu0 0.0
      %491 = vmatpush1.msra.mxu0 %v449
      %492 = vmatprep.subr.mxu0 0.0
      %493 = vmatpush1.msra.mxu0 %v450
      %494 = vmatprep.subr.mxu0 0.0
      %495 = vmatpush1.msra.mxu0 %v451
      %496 = vmatprep.subr.mxu0 0.0
      %497 = vmatpush1.msra.mxu0 %v452
      %498 = vmatprep.subr.mxu0 0.0
      %499 = vmatpush1.msra.mxu0 %v453
      %500 = vmatprep.subr.mxu0 0.0
      %501 = vmatpush1.msra.mxu0 %v454
      %502 = vmatprep.subr.mxu0 0.0
      %503 = vmatpush1.msra.mxu0 %v455
      %504 = vmatprep.subr.mxu0 0.0
      %505 = vmatpush1.msra.mxu0 %v456
      %506 = vmatprep.subr.mxu0 0.0
      %507 = vmatpush1.msra.mxu0 %v457
      %508 = vmatprep.subr.mxu0 0.0
      %509 = vmatpush1.msra.mxu0 %v458
      %510 = vmatprep.subr.mxu0 0.0
      %511 = vmatpush1.msra.mxu0 %v459
      %512 = vmatprep.subr.mxu0 0.0
      %513 = vmatpush1.msra.mxu0 %v460
      %514 = vmatprep.subr.mxu0 0.0
      %515 = vmatpush1.msra.mxu0 %v461
      %516 = vmatprep.subr.mxu0 0.0
      %517 = vmatpush1.msra.mxu0 %v462
      %518 = vmatprep.subr.mxu0 0.0
      %519 = vmatpush1.msra.mxu0 %v463
      %520 = vmatprep.subr.mxu0 0.0
      %521 = vmatpush1.msra.mxu0 %v464
      %522 = vmatprep.subr.mxu0 0.0
      %523 = vmatpush1.msra.mxu0 %v465
      %524 = vmatprep.subr.mxu0 0.0
      %525 = vmatpush1.msra.mxu0 %v466
      %526 = vmatprep.subr.mxu0 0.0
      %527 = vmatpush1.msra.mxu0 %v467
      %528 = vmatprep.subr.mxu0 0.0
      %529 = vmatpush1.msra.mxu0 %v468
      %530 = vmatprep.subr.mxu0 0.0
      %531 = vmatpush1.msra.mxu0 %v469
      %532 = vmatprep.subr.mxu0 0.0
      %533 = vmatpush1.msra.mxu0 %v470
      %534 = vmatprep.subr.mxu0 0.0
      %535 = vmatpush1.msra.mxu0 %v471
      %536 = vmatprep.subr.mxu0 0.0
      %537 = vmatpush1.msra.mxu0 %v472
      %538 = vmatprep.subr.mxu0 0.0
      %539 = vmatpush1.msra.mxu0 %v473
      %540 = vmatprep.subr.mxu0 0.0
      %541 = vmatpush1.msra.mxu0 %v474
      %542 = vmatprep.mubr.f32.mxu0 %v476
      %543 = vmatmul.mubr.f32.gmra.mrb[0].mxu0 %v442
      %v544 = vpop.f32.mrb[0].mxu0
      %v545 = vadd.f32 0.0, %v544
      %v546 = vpop.f32.mrb[0].mxu0
      %547 = vdwg.mxu0
      %v548 = vld [vmem:[%s2] sm:$0xff]
      %v549 = vld [vmem:[%s2 + $0x8] sm:$0xff]
      %v550 = vld [vmem:[%s2 + $0x10] sm:$0xff]
      %v551 = vld [vmem:[%s2 + $0x18] sm:$0xff]
      %v552 = vld [vmem:[%s2 + $0x20] sm:$0xff]
      %v553 = vld [vmem:[%s2 + $0x28] sm:$0xff]
      %v554 = vld [vmem:[%s2 + $0x30] sm:$0xff]
      %v555 = vld [vmem:[%s2 + $0x38] sm:$0xff]
      %v556 = vld [vmem:[%s2 + $0x40] sm:$0xff]
      %v557 = vld [vmem:[%s2 + $0x48] sm:$0xff]
      %v558 = vld [vmem:[%s2 + $0x50] sm:$0xff]
      %v559 = vld [vmem:[%s2 + $0x58] sm:$0xff]
      %v560 = vld [vmem:[%s2 + $0x60] sm:$0xff]
      %v561 = vld [vmem:[%s2 + $0x68] sm:$0xff]
      %v562 = vld [vmem:[%s2 + $0x70] sm:$0xff]
      %v563 = vld [vmem:[%s2 + $0x78] sm:$0xff]
      %v564 = vld [vmem:[%s2 + $0x80] sm:$0xff]
      %v565 = vld [vmem:[%s2 + $0x88] sm:$0xff]
      %v566 = vld [vmem:[%s2 + $0x90] sm:$0xff]
      %v567 = vld [vmem:[%s2 + $0x98] sm:$0xff]
      %v568 = vld [vmem:[%s2 + $0xa0] sm:$0xff]
      %v569 = vld [vmem:[%s2 + $0xa8] sm:$0xff]
      %v570 = vld [vmem:[%s2 + $0xb0] sm:$0xff]
      %v571 = vld [vmem:[%s2 + $0xb8] sm:$0xff]
      %v572 = vld [vmem:[%s2 + $0xc0] sm:$0xff]
      %v573 = vld [vmem:[%s2 + $0xc8] sm:$0xff]
      %v574 = vld [vmem:[%s2 + $0xd0] sm:$0xff]
      %v575 = vld [vmem:[%s2 + $0xd8] sm:$0xff]
      %v576 = vld [vmem:[%s2 + $0xe0] sm:$0xff]
      %v577 = vld [vmem:[%s2 + $0xe8] sm:$0xff]
      %v578 = vld [vmem:[%s2 + $0xf0] sm:$0xff]
      %v579 = vld [vmem:[%s2 + $0xf8] sm:$0xff]
      %580 = vmatprep.subr.mxu0 0.0
      %581 = vmatpush1.msra.mxu0 %v548
      %582 = vmatprep.subr.mxu0 0.0
      %583 = vmatpush1.msra.mxu0 %v549
      %584 = vmatprep.subr.mxu0 0.0
      %585 = vmatpush1.msra.mxu0 %v550
      %586 = vmatprep.subr.mxu0 0.0
      %587 = vmatpush1.msra.mxu0 %v551
      %588 = vmatprep.subr.mxu0 0.0
      %589 = vmatpush1.msra.mxu0 %v552
      %590 = vmatprep.subr.mxu0 0.0
      %591 = vmatpush1.msra.mxu0 %v553
      %592 = vmatprep.subr.mxu0 0.0
      %593 = vmatpush1.msra.mxu0 %v554
      %594 = vmatprep.subr.mxu0 0.0
      %595 = vmatpush1.msra.mxu0 %v555
      %596 = vmatprep.subr.mxu0 0.0
      %597 = vmatpush1.msra.mxu0 %v556
      %598 = vmatprep.subr.mxu0 0.0
      %599 = vmatpush1.msra.mxu0 %v557
      %600 = vmatprep.subr.mxu0 0.0
      %601 = vmatpush1.msra.mxu0 %v558
      %602 = vmatprep.subr.mxu0 0.0
      %603 = vmatpush1.msra.mxu0 %v559
      %604 = vmatprep.subr.mxu0 0.0
      %605 = vmatpush1.msra.mxu0 %v560
      %606 = vmatprep.subr.mxu0 0.0
      %607 = vmatpush1.msra.mxu0 %v561
      %608 = vmatprep.subr.mxu0 0.0
      %609 = vmatpush1.msra.mxu0 %v562
      %610 = vmatprep.subr.mxu0 0.0
      %611 = vmatpush1.msra.mxu0 %v563
      %612 = vmatprep.subr.mxu0 0.0
      %613 = vmatpush1.msra.mxu0 %v564
      %614 = vmatprep.subr.mxu0 0.0
      %615 = vmatpush1.msra.mxu0 %v565
      %616 = vmatprep.subr.mxu0 0.0
      %617 = vmatpush1.msra.mxu0 %v566
      %618 = vmatprep.subr.mxu0 0.0
      %619 = vmatpush1.msra.mxu0 %v567
      %620 = vmatprep.subr.mxu0 0.0
      %621 = vmatpush1.msra.mxu0 %v568
      %622 = vmatprep.subr.mxu0 0.0
      %623 = vmatpush1.msra.mxu0 %v569
      %624 = vmatprep.subr.mxu0 0.0
      %625 = vmatpush1.msra.mxu0 %v570
      %626 = vmatprep.subr.mxu0 0.0
      %627 = vmatpush1.msra.mxu0 %v571
      %628 = vmatprep.subr.mxu0 0.0
      %629 = vmatpush1.msra.mxu0 %v572
      %630 = vmatprep.subr.mxu0 0.0
      %631 = vmatpush1.msra.mxu0 %v573
      %632 = vmatprep.subr.mxu0 0.0
      %633 = vmatpush1.msra.mxu0 %v574
      %634 = vmatprep.subr.mxu0 0.0
      %635 = vmatpush1.msra.mxu0 %v575
      %636 = vmatprep.subr.mxu0 0.0
      %637 = vmatpush1.msra.mxu0 %v576
      %638 = vmatprep.subr.mxu0 0.0
      %639 = vmatpush1.msra.mxu0 %v577
      %640 = vmatprep.subr.mxu0 0.0
      %641 = vmatpush1.msra.mxu0 %v578
      %642 = vmatprep.subr.mxu0 0.0
      %643 = vmatpush1.msra.mxu0 %v579
      %644 = vmatprep.mubr.f32.mxu0 %v476
      %645 = vmatmul.mubr.f32.gmra.mrb[0].mxu0 %v442
      %v646 = vpop.f32.mrb[0].mxu0
      %v647 = vadd.f32 0.0, %v646
      %v648 = vpop.f32.mrb[0].mxu0
      %649 = vdwg.mxu0
      %v650 = vpack.c.bf16 %v442, %v442
      %v651 = vpack.c.bf16 %v476, %v476
      %v652 = vld [vmem:[%s3] sm:$0xf]
      %v653 = vld [vmem:[%s3 + $0x4] sm:$0xf]
      %v654 = vld [vmem:[%s3 + $0x8] sm:$0xf]
      %v655 = vld [vmem:[%s3 + $0xc] sm:$0xf]
      %v656 = vld [vmem:[%s3 + $0x10] sm:$0xf]
      %v657 = vld [vmem:[%s3 + $0x14] sm:$0xf]
      %v658 = vld [vmem:[%s3 + $0x18] sm:$0xf]
      %v659 = vld [vmem:[%s3 + $0x1c] sm:$0xf]
      %v660 = vld [vmem:[%s3 + $0x20] sm:$0xf]
      %v661 = vld [vmem:[%s3 + $0x24] sm:$0xf]
      %v662 = vld [vmem:[%s4] sm:$0xff]
      %v663 = vld [vmem:[%s4 + $0x8] sm:$0xff]
      %v664 = vld [vmem:[%s4 + $0x10] sm:$0xff]
      %v665 = vld [vmem:[%s4 + $0x18] sm:$0xff]
      %v666 = vld [vmem:[%s4 + $0x20] sm:$0xff]
      %v667 = vld [vmem:[%s4 + $0x28] sm:$0xff]
      %v668 = vld [vmem:[%s4 + $0x30] sm:$0xff]
      %v669 = vld [vmem:[%s4 + $0x38] sm:$0xff]
      %v670 = vld [vmem:[%s4 + $0x40] sm:$0xff]
      %v671 = vld [vmem:[%s4 + $0x48] sm:$0xff]
      %673 = vset.pattern.permute.xlu0 0
      %674 = vperm.xlu0 %673, %v662
      %v675 = vpop.permute.xlu0 %674
      %678 = vset.pattern.permute.xlu0 0
      %679 = vperm.xlu0 %678, %v663
      %v680 = vpop.permute.xlu0 %679
      %683 = vset.pattern.permute.xlu0 0
      %684 = vperm.xlu0 %683, %v664
      %v685 = vpop.permute.xlu0 %684
      %688 = vset.pattern.permute.xlu0 0
      %689 = vperm.xlu0 %688, %v665
      %v690 = vpop.permute.xlu0 %689
      %693 = vset.pattern.permute.xlu0 0
      %694 = vperm.xlu0 %693, %v666
      %v695 = vpop.permute.xlu0 %694
      %698 = vset.pattern.permute.xlu0 0
      %699 = vperm.xlu0 %698, %v667
      %v700 = vpop.permute.xlu0 %699
      %703 = vset.pattern.permute.xlu0 0
      %704 = vperm.xlu0 %703, %v668
      %v705 = vpop.permute.xlu0 %704
      %708 = vset.pattern.permute.xlu0 0
      %709 = vperm.xlu0 %708, %v669
      %v710 = vpop.permute.xlu0 %709
      %713 = vset.pattern.permute.xlu0 0
      %714 = vperm.xlu0 %713, %v670
      %v715 = vpop.permute.xlu0 %714
      %718 = vset.pattern.permute.xlu0 0
      %719 = vperm.xlu0 %718, %v671
      %v720 = vpop.permute.xlu0 %719
      %v732 = vunpack.c.l.b16 %v652
      %v733 = vunpack.c.l.b16 %v653
      %v734 = vunpack.c.l.b16 %v654
      %v735 = vunpack.c.l.b16 %v655
      %v736 = vunpack.c.l.b16 %v656
      %v737 = vunpack.c.l.b16 %v657
      %v738 = vunpack.c.l.b16 %v658
      %v739 = vunpack.c.l.b16 %v659
      %v740 = vunpack.c.l.b16 %v660
      %v741 = vunpack.c.l.b16 %v661
      %v742 = vpack.c.b16 %v733, %v732
      %v743 = vpack.c.b16 %v735, %v734
      %v744 = vpack.c.b16 %v737, %v736
      %v745 = vpack.c.b16 %v739, %v738
      %v746 = vpack.c.b16 %v741, %v740
      %vm747 = vcmask 31744
      %v749 = vsel %vm747, %v742, 0
      %v752 = vsel %vm747, %v743, 0
      %v755 = vsel %vm747, %v744, 0
      %v758 = vsel %vm747, %v745, 0
      %v761 = vsel %vm747, %v746, 0
      %vm763 = vcmask 1041408
      %v765 = vsel %vm763, %v650, 0
      %v768 = vsel %vm763, %v651, 0
      %770 = vmatprep.subr.bf16.mxu0 %v768
      %771 = vmatpush1.bf16.msra.mxu0 %v765
      %772 = vmatprep.subr.bf16.mxu0 0
      %773 = vmatpush1.bf16.msra.mxu0 0
      %774 = vmatprep.subr.bf16.mxu0 0
      %775 = vmatpush1.bf16.msra.mxu0 0
      %776 = vmatprep.subr.bf16.mxu0 0
      %777 = vmatpush1.bf16.msra.mxu0 0
      %778 = vmatprep.subr.bf16.mxu0 0
      %779 = vmatpush1.bf16.msra.mxu0 0
      %780 = vmatprep.subr.bf16.mxu0 0
      %781 = vmatpush1.bf16.msra.mxu0 0
      %782 = vmatprep.subr.bf16.mxu0 0
      %783 = vmatpush1.bf16.msra.mxu0 0
      %784 = vmatprep.subr.bf16.mxu0 0
      %785 = vmatpush1.bf16.msra.mxu0 0
      %786 = vmatprep.subr.bf16.mxu0 0
      %787 = vmatpush1.bf16.msra.mxu0 0
      %788 = vmatprep.subr.bf16.mxu0 0
      %789 = vmatpush1.bf16.msra.mxu0 0
      %790 = vmatprep.subr.bf16.mxu0 0
      %791 = vmatpush1.bf16.msra.mxu0 0
      %792 = vmatprep.subr.bf16.mxu0 0
      %793 = vmatpush1.bf16.msra.mxu0 0
      %794 = vmatprep.subr.bf16.mxu0 0
      %795 = vmatpush1.bf16.msra.mxu0 0
      %796 = vmatprep.subr.bf16.mxu0 0
      %797 = vmatpush1.bf16.msra.mxu0 0
      %798 = vmatprep.subr.bf16.mxu0 0
      %799 = vmatpush1.bf16.msra.mxu0 0
      %800 = vmatprep.subr.bf16.mxu0 0
      %801 = vmatpush1.bf16.msra.mxu0 0
      %802 = vmatprep.mubr.bf16.mxu0 0
      %803 = vmatmul.mubr.bf16.gmra.mrb[0].mxu0 %v749
      %v804 = vpop.f32.mrb[0].mxu0
      %v805 = vadd.f32 %v675, %v804
      %v806 = vpop.f32.mrb[0].mxu0
      %v807 = vadd.f32 %v675, %v806
      %v808 = vpop.f32.mrb[0].mxu0
      %v809 = vadd.f32 %v680, %v808
      %v810 = vpop.f32.mrb[0].mxu0
      %v811 = vadd.f32 %v680, %v810
      %812 = vmatprep.mubr.bf16.mxu0 0
      %813 = vmatmul.mubr.bf16.gmra.mrb[0].mxu0 %v752
      %v814 = vpop.f32.mrb[0].mxu0
      %v815 = vadd.f32 %v685, %v814
      %v816 = vpop.f32.mrb[0].mxu0
      %v817 = vadd.f32 %v685, %v816
      %v818 = vpop.f32.mrb[0].mxu0
      %v819 = vadd.f32 %v690, %v818
      %v820 = vpop.f32.mrb[0].mxu0
      %v821 = vadd.f32 %v690, %v820
      %822 = vmatprep.mubr.bf16.mxu0 0
      %823 = vmatmul.mubr.bf16.gmra.mrb[0].mxu0 %v755
      %v824 = vpop.f32.mrb[0].mxu0
      %v825 = vadd.f32 %v695, %v824
      %v826 = vpop.f32.mrb[0].mxu0
      %v827 = vadd.f32 %v695, %v826
      %v828 = vpop.f32.mrb[0].mxu0
      %v829 = vadd.f32 %v700, %v828
      %v830 = vpop.f32.mrb[0].mxu0
      %v831 = vadd.f32 %v700, %v830
      %832 = vmatprep.mubr.bf16.mxu0 0
      %833 = vmatmul.mubr.bf16.gmra.mrb[0].mxu0 %v758
      %v834 = vpop.f32.mrb[0].mxu0
      %v835 = vadd.f32 %v705, %v834
      %v836 = vpop.f32.mrb[0].mxu0
      %v837 = vadd.f32 %v705, %v836
      %v838 = vpop.f32.mrb[0].mxu0
      %v839 = vadd.f32 %v710, %v838
      %v840 = vpop.f32.mrb[0].mxu0
      %v841 = vadd.f32 %v710, %v840
      %842 = vmatprep.mubr.bf16.mxu0 0
      %843 = vmatmul.mubr.bf16.gmra.mrb[0].mxu0 %v761
      %v844 = vpop.f32.mrb[0].mxu0
      %v845 = vadd.f32 %v715, %v844
      %v846 = vpop.f32.mrb[0].mxu0
      %v847 = vadd.f32 %v715, %v846
      %v848 = vpop.f32.mrb[0].mxu0
      %v849 = vadd.f32 %v720, %v848
      %v850 = vpop.f32.mrb[0].mxu0
      %v851 = vadd.f32 %v720, %v850
      %852 = vdwg.mxu0
      %v853 = vmax.f32 %v805, 0.0
      %v854 = vmax.f32 %v807, 0.0
      %v855 = vmax.f32 %v809, 0.0
      %v856 = vmax.f32 %v811, 0.0
      %v857 = vmax.f32 %v815, 0.0
      %v858 = vmax.f32 %v817, 0.0
      %v859 = vmax.f32 %v819, 0.0
      %v860 = vmax.f32 %v821, 0.0
      %v861 = vmax.f32 %v825, 0.0
      %v862 = vmax.f32 %v827, 0.0
      %v863 = vmax.f32 %v829, 0.0
      %v864 = vmax.f32 %v831, 0.0
      %v865 = vmax.f32 %v835, 0.0
      %v866 = vmax.f32 %v837, 0.0
      %v867 = vmax.f32 %v839, 0.0
      %v868 = vmax.f32 %v841, 0.0
      %v869 = vmax.f32 %v845, 0.0
      %v870 = vmax.f32 %v847, 0.0
      %v871 = vmax.f32 %v849, 0.0
      %v872 = vmax.f32 %v851, 0.0
      %v873 = vadd.f32 %v853, %v854
      %874 = vadd.xlane.f32.xlu0 %v873
      %v875 = vpop.xlane.xlu0 %874
      %v876 = vadd.f32 %v855, %v856
      %877 = vadd.xlane.f32.xlu0 %v876
      %v878 = vpop.xlane.xlu0 %877
      %v879 = vadd.f32 %v857, %v858
      %880 = vadd.xlane.f32.xlu0 %v879
      %v881 = vpop.xlane.xlu0 %880
      %v882 = vadd.f32 %v859, %v860
      %883 = vadd.xlane.f32.xlu0 %v882
      %v884 = vpop.xlane.xlu0 %883
      %v885 = vadd.f32 %v861, %v862
      %886 = vadd.xlane.f32.xlu0 %v885
      %v887 = vpop.xlane.xlu0 %886
      %v888 = vadd.f32 %v863, %v864
      %889 = vadd.xlane.f32.xlu0 %v888
      %v890 = vpop.xlane.xlu0 %889
      %v891 = vadd.f32 %v865, %v866
      %892 = vadd.xlane.f32.xlu0 %v891
      %v893 = vpop.xlane.xlu0 %892
      %v894 = vadd.f32 %v867, %v868
      %895 = vadd.xlane.f32.xlu0 %v894
      %v896 = vpop.xlane.xlu0 %895
      %v897 = vadd.f32 %v869, %v870
      %898 = vadd.xlane.f32.xlu0 %v897
      %v899 = vpop.xlane.xlu0 %898
      %v900 = vadd.f32 %v871, %v872
      %901 = vadd.xlane.f32.xlu0 %v900
      %v902 = vpop.xlane.xlu0 %901
      %v903 = vrcp.pop 256.0
      %v904 = vmul.f32 %v875, %v903
      %v905 = vmul.f32 %v878, %v903
      %v906 = vmul.f32 %v881, %v903
      %v907 = vmul.f32 %v884, %v903
      %v908 = vmul.f32 %v887, %v903
      %v909 = vmul.f32 %v890, %v903
      %v910 = vmul.f32 %v893, %v903
      %v911 = vmul.f32 %v896, %v903
      %v912 = vmul.f32 %v899, %v903
      %v913 = vmul.f32 %v902, %v903
      %v914 = vld [vmem:[%s7] sm:$0xf]
      %v915 = vld [vmem:[%s7 + $0x4] sm:$0xf]
      %v916 = vld [vmem:[%s7 + $0x8] sm:$0xf]
      %v917 = vld [vmem:[%s7 + $0xc] sm:$0xf]
      %v918 = vld [vmem:[%s7 + $0x10] sm:$0xf]
      %v919 = vld [vmem:[%s7 + $0x14] sm:$0xf]
      %v920 = vld [vmem:[%s7 + $0x18] sm:$0xf]
      %v921 = vld [vmem:[%s7 + $0x1c] sm:$0xf]
      %v922 = vld [vmem:[%s7 + $0x20] sm:$0xf]
      %v923 = vld [vmem:[%s7 + $0x24] sm:$0xf]
      %v924 = vpack.c.bf16 %v905, %v904
      %v925 = vpack.c.bf16 %v907, %v906
      %v926 = vpack.c.bf16 %v909, %v908
      %v927 = vpack.c.bf16 %v911, %v910
      %v928 = vpack.c.bf16 %v913, %v912
      %v929 = vld [vmem:[%s8] sm:$0xff]
      %v930 = vld [vmem:[%s8 + $0x8] sm:$0xff]
      %v931 = vld [vmem:[%s8 + $0x10] sm:$0xff]
      %v932 = vld [vmem:[%s8 + $0x18] sm:$0xff]
      %v933 = vld [vmem:[%s8 + $0x20] sm:$0xff]
      %v934 = vld [vmem:[%s8 + $0x28] sm:$0xff]
      %v935 = vld [vmem:[%s8 + $0x30] sm:$0xff]
      %v936 = vld [vmem:[%s8 + $0x38] sm:$0xff]
      %v937 = vld [vmem:[%s8 + $0x40] sm:$0xff]
      %v938 = vld [vmem:[%s8 + $0x48] sm:$0xff]
      %v949 = vunpack.c.l.b16 %v914
      %v950 = vunpack.c.l.b16 %v915
      %v951 = vunpack.c.l.b16 %v916
      %v952 = vunpack.c.l.b16 %v917
      %v953 = vunpack.c.l.b16 %v918
      %v954 = vunpack.c.l.b16 %v919
      %v955 = vunpack.c.l.b16 %v920
      %v956 = vunpack.c.l.b16 %v921
      %v957 = vunpack.c.l.b16 %v922
      %v958 = vunpack.c.l.b16 %v923
      %v959 = vpack.c.b16 %v950, %v949
      %v960 = vpack.c.b16 %v952, %v951
      %v961 = vpack.c.b16 %v954, %v953
      %v962 = vpack.c.b16 %v956, %v955
      %v963 = vpack.c.b16 %v958, %v957
      %vm964 = vcmask 654336
      %v966 = vsel %vm964, %v959, 0
      %v969 = vsel %vm964, %v960, 0
      %v972 = vsel %vm964, %v961, 0
      %v975 = vsel %vm964, %v962, 0
      %v978 = vsel %vm964, %v963, 0
      %980 = vmatprep.subr.bf16.mxu0 0
      %981 = vmatpush1.bf16.msra.mxu0 %v924
      %982 = vmatprep.subr.bf16.mxu0 0
      %983 = vmatpush1.bf16.msra.mxu0 %v925
      %984 = vmatprep.subr.bf16.mxu0 0
      %985 = vmatpush1.bf16.msra.mxu0 %v926
      %986 = vmatprep.subr.bf16.mxu0 0
      %987 = vmatpush1.bf16.msra.mxu0 %v927
      %988 = vmatprep.subr.bf16.mxu0 0
      %989 = vmatpush1.bf16.msra.mxu0 %v928
      %990 = vmatprep.subr.bf16.mxu0 0
      %991 = vmatpush1.bf16.msra.mxu0 0
      %992 = vmatprep.subr.bf16.mxu0 0
      %993 = vmatpush1.bf16.msra.mxu0 0
      %994 = vmatprep.subr.bf16.mxu0 0
      %995 = vmatpush1.bf16.msra.mxu0 0
      %996 = vmatprep.subr.bf16.mxu0 0
      %997 = vmatpush1.bf16.msra.mxu0 0
      %998 = vmatprep.subr.bf16.mxu0 0
      %999 = vmatpush1.bf16.msra.mxu0 0
      %1000 = vmatprep.subr.bf16.mxu0 0
      %1001 = vmatpush1.bf16.msra.mxu0 0
      %1002 = vmatprep.subr.bf16.mxu0 0
      %1003 = vmatpush1.bf16.msra.mxu0 0
      %1004 = vmatprep.subr.bf16.mxu0 0
      %1005 = vmatpush1.bf16.msra.mxu0 0
      %1006 = vmatprep.subr.bf16.mxu0 0
      %1007 = vmatpush1.bf16.msra.mxu0 0
      %1008 = vmatprep.subr.bf16.mxu0 0
      %1009 = vmatpush1.bf16.msra.mxu0 0
      %1010 = vmatprep.subr.bf16.mxu0 0
      %1011 = vmatpush1.bf16.msra.mxu0 0
      %1012 = vmatprep.mubr.bf16.mxu0 0
      %1013 = vmatmul.mubr.bf16.gmra.mrb[0].mxu0 %v966
      %v1014 = vpop.f32.mrb[0].mxu0
      %v1015 = vadd.f32 %v929, %v1014
      %v1016 = vpop.f32.mrb[0].mxu0
      %v1017 = vpop.f32.mrb[0].mxu0
      %v1018 = vadd.f32 %v930, %v1017
      %v1019 = vpop.f32.mrb[0].mxu0
      %1020 = vmatprep.mubr.bf16.mxu0 0
      %1021 = vmatmul.mubr.bf16.gmra.mrb[0].mxu0 %v969
      %v1022 = vpop.f32.mrb[0].mxu0
      %v1023 = vadd.f32 %v931, %v1022
      %v1024 = vpop.f32.mrb[0].mxu0
      %v1025 = vpop.f32.mrb[0].mxu0
      %v1026 = vadd.f32 %v932, %v1025
      %v1027 = vpop.f32.mrb[0].mxu0
      %1028 = vmatprep.mubr.bf16.mxu0 0
      %1029 = vmatmul.mubr.bf16.gmra.mrb[0].mxu0 %v972
      %v1030 = vpop.f32.mrb[0].mxu0
      %v1031 = vadd.f32 %v933, %v1030
      %v1032 = vpop.f32.mrb[0].mxu0
      %v1033 = vpop.f32.mrb[0].mxu0
      %v1034 = vadd.f32 %v934, %v1033
      %v1035 = vpop.f32.mrb[0].mxu0
      %1036 = vmatprep.mubr.bf16.mxu0 0
      %1037 = vmatmul.mubr.bf16.gmra.mrb[0].mxu0 %v975
      %v1038 = vpop.f32.mrb[0].mxu0
      %v1039 = vadd.f32 %v935, %v1038
      %v1040 = vpop.f32.mrb[0].mxu0
      %v1041 = vpop.f32.mrb[0].mxu0
      %v1042 = vadd.f32 %v936, %v1041
      %v1043 = vpop.f32.mrb[0].mxu0
      %1044 = vmatprep.mubr.bf16.mxu0 0
      %1045 = vmatmul.mubr.bf16.gmra.mrb[0].mxu0 %v978
      %v1046 = vpop.f32.mrb[0].mxu0
      %v1047 = vadd.f32 %v937, %v1046
      %v1048 = vpop.f32.mrb[0].mxu0
      %v1049 = vpop.f32.mrb[0].mxu0
      %v1050 = vadd.f32 %v938, %v1049
      %v1051 = vpop.f32.mrb[0].mxu0
      %1052 = vdwg.mxu0
      %v1053 = vrcp.pop 6.0
      %v1054 = vmul.f32 %v1015, %v1053
      %v1055 = vmul.f32 %v1018, %v1053
      %v1056 = vmul.f32 %v1023, %v1053
      %v1057 = vmul.f32 %v1026, %v1053
      %v1058 = vmul.f32 %v1031, %v1053
      %v1059 = vmul.f32 %v1034, %v1053
      %v1060 = vmul.f32 %v1039, %v1053
      %v1061 = vmul.f32 %v1042, %v1053
      %v1062 = vmul.f32 %v1047, %v1053
      %v1063 = vmul.f32 %v1050, %v1053
      %v1064 = vadd.f32 %v1054, 0.5
      %v1065 = vadd.f32 %v1055, 0.5
      %v1066 = vadd.f32 %v1056, 0.5
      %v1067 = vadd.f32 %v1057, 0.5
      %v1068 = vadd.f32 %v1058, 0.5
      %v1069 = vadd.f32 %v1059, 0.5
      %v1070 = vadd.f32 %v1060, 0.5
      %v1071 = vadd.f32 %v1061, 0.5
      %v1072 = vadd.f32 %v1062, 0.5
      %v1073 = vadd.f32 %v1063, 0.5
      %v1074 = vmax.f32 %v1064, 0.0
      %v1075 = vmax.f32 %v1065, 0.0
      %v1076 = vmax.f32 %v1066, 0.0
      %v1077 = vmax.f32 %v1067, 0.0
      %v1078 = vmax.f32 %v1068, 0.0
      %v1079 = vmax.f32 %v1069, 0.0
      %v1080 = vmax.f32 %v1070, 0.0
      %v1081 = vmax.f32 %v1071, 0.0
      %v1082 = vmax.f32 %v1072, 0.0
      %v1083 = vmax.f32 %v1073, 0.0
      %v1084 = vmin.f32 %v1074, 1.0
      %v1085 = vmin.f32 %v1075, 1.0
      %v1086 = vmin.f32 %v1076, 1.0
      %v1087 = vmin.f32 %v1077, 1.0
      %v1088 = vmin.f32 %v1078, 1.0
      %v1089 = vmin.f32 %v1079, 1.0
      %v1090 = vmin.f32 %v1080, 1.0
      %v1091 = vmin.f32 %v1081, 1.0
      %v1092 = vmin.f32 %v1082, 1.0
      %v1093 = vmin.f32 %v1083, 1.0
      %v1094 = vld [vmem:[%s5] sm:$0xf]
      %v1095 = vld [vmem:[%s5 + $0x4] sm:$0xf]
      %v1096 = vld [vmem:[%s5 + $0x8] sm:$0xf]
      %v1097 = vld [vmem:[%s5 + $0xc] sm:$0xf]
      %v1098 = vld [vmem:[%s5 + $0x10] sm:$0xf]
      %v1099 = vld [vmem:[%s5 + $0x14] sm:$0xf]
      %v1100 = vld [vmem:[%s5 + $0x18] sm:$0xf]
      %v1101 = vld [vmem:[%s5 + $0x1c] sm:$0xf]
      %v1102 = vld [vmem:[%s5 + $0x20] sm:$0xf]
      %v1103 = vld [vmem:[%s5 + $0x24] sm:$0xf]
      %v1104 = vpack.c.bf16 %v855, %v853
      %v1105 = vpack.c.bf16 %v856, %v854
      %v1106 = vpack.c.bf16 %v859, %v857
      %v1107 = vpack.c.bf16 %v860, %v858
      %v1108 = vpack.c.bf16 %v863, %v861
      %v1109 = vpack.c.bf16 %v864, %v862
      %v1110 = vpack.c.bf16 %v867, %v865
      %v1111 = vpack.c.bf16 %v868, %v866
      %v1112 = vpack.c.bf16 %v871, %v869
      %v1113 = vpack.c.bf16 %v872, %v870
      %v1114 = vld [vmem:[%s6] sm:$0xff]
      %v1115 = vld [vmem:[%s6 + $0x8] sm:$0xff]
      %v1116 = vld [vmem:[%s6 + $0x10] sm:$0xff]
      %v1117 = vld [vmem:[%s6 + $0x18] sm:$0xff]
      %v1118 = vld [vmem:[%s6 + $0x20] sm:$0xff]
      %v1119 = vld [vmem:[%s6 + $0x28] sm:$0xff]
      %v1120 = vld [vmem:[%s6 + $0x30] sm:$0xff]
      %v1121 = vld [vmem:[%s6 + $0x38] sm:$0xff]
      %v1122 = vld [vmem:[%s6 + $0x40] sm:$0xff]
      %v1123 = vld [vmem:[%s6 + $0x48] sm:$0xff]
      %1125 = vset.pattern.permute.xlu0 0
      %1126 = vperm.xlu0 %1125, %v1114
      %v1127 = vpop.permute.xlu0 %1126
      %1130 = vset.pattern.permute.xlu0 0
      %1131 = vperm.xlu0 %1130, %v1115
      %v1132 = vpop.permute.xlu0 %1131
      %1135 = vset.pattern.permute.xlu0 0
      %1136 = vperm.xlu0 %1135, %v1116
      %v1137 = vpop.permute.xlu0 %1136
      %1140 = vset.pattern.permute.xlu0 0
      %1141 = vperm.xlu0 %1140, %v1117
      %v1142 = vpop.permute.xlu0 %1141
      %1145 = vset.pattern.permute.xlu0 0
      %1146 = vperm.xlu0 %1145, %v1118
      %v1147 = vpop.permute.xlu0 %1146
      %1150 = vset.pattern.permute.xlu0 0
      %1151 = vperm.xlu0 %1150, %v1119
      %v1152 = vpop.permute.xlu0 %1151
      %1155 = vset.pattern.permute.xlu0 0
      %1156 = vperm.xlu0 %1155, %v1120
      %v1157 = vpop.permute.xlu0 %1156
      %1160 = vset.pattern.permute.xlu0 0
      %1161 = vperm.xlu0 %1160, %v1121
      %v1162 = vpop.permute.xlu0 %1161
      %1165 = vset.pattern.permute.xlu0 0
      %1166 = vperm.xlu0 %1165, %v1122
      %v1167 = vpop.permute.xlu0 %1166
      %1170 = vset.pattern.permute.xlu0 0
      %1171 = vperm.xlu0 %1170, %v1123
      %v1172 = vpop.permute.xlu0 %1171
      %v1184 = vunpack.c.l.b16 %v1094
      %v1185 = vunpack.c.l.b16 %v1095
      %v1186 = vunpack.c.l.b16 %v1096
      %v1187 = vunpack.c.l.b16 %v1097
      %v1188 = vunpack.c.l.b16 %v1098
      %v1189 = vunpack.c.l.b16 %v1099
      %v1190 = vunpack.c.l.b16 %v1100
      %v1191 = vunpack.c.l.b16 %v1101
      %v1192 = vunpack.c.l.b16 %v1102
      %v1193 = vunpack.c.l.b16 %v1103
      %v1194 = vpack.c.b16 %v1185, %v1184
      %v1195 = vpack.c.b16 %v1187, %v1186
      %v1196 = vpack.c.b16 %v1189, %v1188
      %v1197 = vpack.c.b16 %v1191, %v1190
      %v1198 = vpack.c.b16 %v1193, %v1192
      %v1200 = vsel %vm964, %v1194, 0
      %v1203 = vsel %vm964, %v1195, 0
      %v1206 = vsel %vm964, %v1196, 0
      %v1209 = vsel %vm964, %v1197, 0
      %v1212 = vsel %vm964, %v1198, 0
      %1214 = vmatprep.subr.bf16.mxu0 %v1105
      %1215 = vmatpush1.bf16.msra.mxu0 %v1104
      %1216 = vmatprep.subr.bf16.mxu0 %v1107
      %1217 = vmatpush1.bf16.msra.mxu0 %v1106
      %1218 = vmatprep.subr.bf16.mxu0 %v1109
      %1219 = vmatpush1.bf16.msra.mxu0 %v1108
      %1220 = vmatprep.subr.bf16.mxu0 %v1111
      %1221 = vmatpush1.bf16.msra.mxu0 %v1110
      %1222 = vmatprep.subr.bf16.mxu0 %v1113
      %1223 = vmatpush1.bf16.msra.mxu0 %v1112
      %1224 = vmatprep.subr.bf16.mxu0 0
      %1225 = vmatpush1.bf16.msra.mxu0 0
      %1226 = vmatprep.subr.bf16.mxu0 0
      %1227 = vmatpush1.bf16.msra.mxu0 0
      %1228 = vmatprep.subr.bf16.mxu0 0
      %1229 = vmatpush1.bf16.msra.mxu0 0
      %1230 = vmatprep.subr.bf16.mxu0 0
      %1231 = vmatpush1.bf16.msra.mxu0 0
      %1232 = vmatprep.subr.bf16.mxu0 0
      %1233 = vmatpush1.bf16.msra.mxu0 0
      %1234 = vmatprep.subr.bf16.mxu0 0
      %1235 = vmatpush1.bf16.msra.mxu0 0
      %1236 = vmatprep.subr.bf16.mxu0 0
      %1237 = vmatpush1.bf16.msra.mxu0 0
      %1238 = vmatprep.subr.bf16.mxu0 0
      %1239 = vmatpush1.bf16.msra.mxu0 0
      %1240 = vmatprep.subr.bf16.mxu0 0
      %1241 = vmatpush1.bf16.msra.mxu0 0
      %1242 = vmatprep.subr.bf16.mxu0 0
      %1243 = vmatpush1.bf16.msra.mxu0 0
      %1244 = vmatprep.subr.bf16.mxu0 0
      %1245 = vmatpush1.bf16.msra.mxu0 0
      %1246 = vmatprep.mubr.bf16.mxu0 0
      %1247 = vmatmul.mubr.bf16.gmra.mrb[0].mxu0 %v1200
      %v1248 = vpop.f32.mrb[0].mxu0
      %v1249 = vadd.f32 %v1127, %v1248
      %v1250 = vpop.f32.mrb[0].mxu0
      %v1251 = vadd.f32 %v1127, %v1250
      %v1252 = vpop.f32.mrb[0].mxu0
      %v1253 = vadd.f32 %v1132, %v1252
      %v1254 = vpop.f32.mrb[0].mxu0
      %v1255 = vadd.f32 %v1132, %v1254
      %1256 = vmatprep.mubr.bf16.mxu0 0
      %1257 = vmatmul.mubr.bf16.gmra.mrb[0].mxu0 %v1203
      %v1258 = vpop.f32.mrb[0].mxu0
      %v1259 = vadd.f32 %v1137, %v1258
      %v1260 = vpop.f32.mrb[0].mxu0
      %v1261 = vadd.f32 %v1137, %v1260
      %v1262 = vpop.f32.mrb[0].mxu0
      %v1263 = vadd.f32 %v1142, %v1262
      %v1264 = vpop.f32.mrb[0].mxu0
      %v1265 = vadd.f32 %v1142, %v1264
      %1266 = vmatprep.mubr.bf16.mxu0 0
      %1267 = vmatmul.mubr.bf16.gmra.mrb[0].mxu0 %v1206
      %v1268 = vpop.f32.mrb[0].mxu0
      %v1269 = vadd.f32 %v1147, %v1268
      %v1270 = vpop.f32.mrb[0].mxu0
      %v1271 = vadd.f32 %v1147, %v1270
      %v1272 = vpop.f32.mrb[0].mxu0
      %v1273 = vadd.f32 %v1152, %v1272
      %v1274 = vpop.f32.mrb[0].mxu0
      %v1275 = vadd.f32 %v1152, %v1274
      %1276 = vmatprep.mubr.bf16.mxu0 0
      %1277 = vmatmul.mubr.bf16.gmra.mrb[0].mxu0 %v1209
      %v1278 = vpop.f32.mrb[0].mxu0
      %v1279 = vadd.f32 %v1157, %v1278
      %v1280 = vpop.f32.mrb[0].mxu0
      %v1281 = vadd.f32 %v1157, %v1280
      %v1282 = vpop.f32.mrb[0].mxu0
      %v1283 = vadd.f32 %v1162, %v1282
      %v1284 = vpop.f32.mrb[0].mxu0
      %v1285 = vadd.f32 %v1162, %v1284
      %1286 = vmatprep.mubr.bf16.mxu0 0
      %1287 = vmatmul.mubr.bf16.gmra.mrb[0].mxu0 %v1212
      %v1288 = vpop.f32.mrb[0].mxu0
      %v1289 = vadd.f32 %v1167, %v1288
      %v1290 = vpop.f32.mrb[0].mxu0
      %v1291 = vadd.f32 %v1167, %v1290
      %v1292 = vpop.f32.mrb[0].mxu0
      %v1293 = vadd.f32 %v1172, %v1292
      %v1294 = vpop.f32.mrb[0].mxu0
      %v1295 = vadd.f32 %v1172, %v1294
      %1296 = vdwg.mxu0
      %v1297 = vmax.f32 %v1249, 0.0
      %v1298 = vmax.f32 %v1251, 0.0
      %v1299 = vmax.f32 %v1253, 0.0
      %v1300 = vmax.f32 %v1255, 0.0
      %v1301 = vmax.f32 %v1259, 0.0
      %v1302 = vmax.f32 %v1261, 0.0
      %v1303 = vmax.f32 %v1263, 0.0
      %v1304 = vmax.f32 %v1265, 0.0
      %v1305 = vmax.f32 %v1269, 0.0
      %v1306 = vmax.f32 %v1271, 0.0
      %v1307 = vmax.f32 %v1273, 0.0
      %v1308 = vmax.f32 %v1275, 0.0
      %v1309 = vmax.f32 %v1279, 0.0
      %v1310 = vmax.f32 %v1281, 0.0
      %v1311 = vmax.f32 %v1283, 0.0
      %v1312 = vmax.f32 %v1285, 0.0
      %v1313 = vmax.f32 %v1289, 0.0
      %v1314 = vmax.f32 %v1291, 0.0
      %v1315 = vmax.f32 %v1293, 0.0
      %v1316 = vmax.f32 %v1295, 0.0
      %v1317 = vld [vmem:[%s9] sm:$0xff]
      %v1318 = vld [vmem:[%s9 + $0x8] sm:$0xff]
      %v1319 = vld [vmem:[%s9 + $0x10] sm:$0xff]
      %v1320 = vld [vmem:[%s9 + $0x18] sm:$0xff]
      %v1321 = vld [vmem:[%s9 + $0x20] sm:$0xff]
      %v1322 = vld [vmem:[%s9 + $0x28] sm:$0xff]
      %v1323 = vld [vmem:[%s9 + $0x30] sm:$0xff]
      %v1324 = vld [vmem:[%s9 + $0x38] sm:$0xff]
      %v1325 = vld [vmem:[%s9 + $0x40] sm:$0xff]
      %v1326 = vld [vmem:[%s9 + $0x48] sm:$0xff]
      %v1327 = vmul.f32 %v1084, %v1317
      %v1328 = vmul.f32 %v1085, %v1318
      %v1329 = vmul.f32 %v1086, %v1319
      %v1330 = vmul.f32 %v1087, %v1320
      %v1331 = vmul.f32 %v1088, %v1321
      %v1332 = vmul.f32 %v1089, %v1322
      %v1333 = vmul.f32 %v1090, %v1323
      %v1334 = vmul.f32 %v1091, %v1324
      %v1335 = vmul.f32 %v1092, %v1325
      %v1336 = vmul.f32 %v1093, %v1326
      %1338 = vset.pattern.permute.xlu0 0
      %1339 = vperm.xlu0 %1338, %v1327
      %v1340 = vpop.permute.xlu0 %1339
      %1343 = vset.pattern.permute.xlu0 0
      %1344 = vperm.xlu0 %1343, %v1328
      %v1345 = vpop.permute.xlu0 %1344
      %1348 = vset.pattern.permute.xlu0 0
      %1349 = vperm.xlu0 %1348, %v1329
      %v1350 = vpop.permute.xlu0 %1349
      %1353 = vset.pattern.permute.xlu0 0
      %1354 = vperm.xlu0 %1353, %v1330
      %v1355 = vpop.permute.xlu0 %1354
      %1358 = vset.pattern.permute.xlu0 0
      %1359 = vperm.xlu0 %1358, %v1331
      %v1360 = vpop.permute.xlu0 %1359
      %1363 = vset.pattern.permute.xlu0 0
      %1364 = vperm.xlu0 %1363, %v1332
      %v1365 = vpop.permute.xlu0 %1364
      %1368 = vset.pattern.permute.xlu0 0
      %1369 = vperm.xlu0 %1368, %v1333
      %v1370 = vpop.permute.xlu0 %1369
      %1373 = vset.pattern.permute.xlu0 0
      %1374 = vperm.xlu0 %1373, %v1334
      %v1375 = vpop.permute.xlu0 %1374
      %1378 = vset.pattern.permute.xlu0 0
      %1379 = vperm.xlu0 %1378, %v1335
      %v1380 = vpop.permute.xlu0 %1379
      %1383 = vset.pattern.permute.xlu0 0
      %1384 = vperm.xlu0 %1383, %v1336
      %v1385 = vpop.permute.xlu0 %1384
      %v1387 = vmul.f32 %v1340, %v1297
      %v1388 = vmul.f32 %v1340, %v1298
      %v1389 = vmul.f32 %v1345, %v1299
      %v1390 = vmul.f32 %v1345, %v1300
      %v1391 = vmul.f32 %v1350, %v1301
      %v1392 = vmul.f32 %v1350, %v1302
      %v1393 = vmul.f32 %v1355, %v1303
      %v1394 = vmul.f32 %v1355, %v1304
      %v1395 = vmul.f32 %v1360, %v1305
      %v1396 = vmul.f32 %v1360, %v1306
      %v1397 = vmul.f32 %v1365, %v1307
      %v1398 = vmul.f32 %v1365, %v1308
      %v1399 = vmul.f32 %v1370, %v1309
      %v1400 = vmul.f32 %v1370, %v1310
      %v1401 = vmul.f32 %v1375, %v1311
      %v1402 = vmul.f32 %v1375, %v1312
      %v1403 = vmul.f32 %v1380, %v1313
      %v1404 = vmul.f32 %v1380, %v1314
      %v1405 = vmul.f32 %v1385, %v1315
      %v1406 = vmul.f32 %v1385, %v1316
      %v1407 = vadd.f32 %v1387, %v1389
      %v1408 = vadd.f32 %v1407, %v1391
      %v1409 = vadd.f32 %v1408, %v1393
      %v1410 = vadd.f32 %v1409, %v1395
      %v1411 = vadd.f32 %v1410, %v1397
      %v1412 = vadd.f32 %v1411, %v1399
      %v1413 = vadd.f32 %v1412, %v1401
      %v1414 = vadd.f32 %v1413, %v1403
      %v1415 = vadd.f32 %v1414, %v1405
      %v1416 = vrot.slane %v1415, 4
      %v1417 = vadd.f32 %v1415, %v1416
      %v1418 = vrot.slane %v1417, 2
      %v1419 = vadd.f32 %v1417, %v1418
      %v1420 = vrot.slane %v1419, 1
      %v1421 = vadd.f32 %v1419, %v1420
      %v1422 = vadd.f32 %v1388, %v1390
      %v1423 = vadd.f32 %v1422, %v1392
      %v1424 = vadd.f32 %v1423, %v1394
      %v1425 = vadd.f32 %v1424, %v1396
      %v1426 = vadd.f32 %v1425, %v1398
      %v1427 = vadd.f32 %v1426, %v1400
      %v1428 = vadd.f32 %v1427, %v1402
      %v1429 = vadd.f32 %v1428, %v1404
      %v1430 = vadd.f32 %v1429, %v1406
      %v1431 = vrot.slane %v1430, 4
      %v1432 = vadd.f32 %v1430, %v1431
      %v1433 = vrot.slane %v1432, 2
      %v1434 = vadd.f32 %v1432, %v1433
      %v1435 = vrot.slane %v1434, 1
      %v1436 = vadd.f32 %v1434, %v1435
      %v1437 = vadd.f32 %v1421, 0.0
      %v1438 = vadd.f32 %v1436, 0.0
      %v1439 = vpack.c.bf16 %v545, %v545
      %s1440 = scalar_lea.vmem %s3, 40
      %v1441 = vld [vmem:[%s1440] sm:$0xf]
      %v1442 = vld [vmem:[%s1440 + $0x4] sm:$0xf]
      %v1443 = vld [vmem:[%s1440 + $0x8] sm:$0xf]
      %v1444 = vld [vmem:[%s1440 + $0xc] sm:$0xf]
      %v1445 = vld [vmem:[%s1440 + $0x10] sm:$0xf]
      %v1446 = vld [vmem:[%s1440 + $0x14] sm:$0xf]
      %v1447 = vld [vmem:[%s1440 + $0x18] sm:$0xf]
      %v1448 = vld [vmem:[%s1440 + $0x1c] sm:$0xf]
      %v1449 = vld [vmem:[%s1440 + $0x20] sm:$0xf]
      %v1450 = vld [vmem:[%s1440 + $0x24] sm:$0xf]
      %s1451 = scalar_lea.vmem %s4, 80
      %v1452 = vld [vmem:[%s1451] sm:$0xff]
      %v1453 = vld [vmem:[%s1451 + $0x8] sm:$0xff]
      %v1454 = vld [vmem:[%s1451 + $0x10] sm:$0xff]
      %v1455 = vld [vmem:[%s1451 + $0x18] sm:$0xff]
      %v1456 = vld [vmem:[%s1451 + $0x20] sm:$0xff]
      %v1457 = vld [vmem:[%s1451 + $0x28] sm:$0xff]
      %v1458 = vld [vmem:[%s1451 + $0x30] sm:$0xff]
      %v1459 = vld [vmem:[%s1451 + $0x38] sm:$0xff]
      %v1460 = vld [vmem:[%s1451 + $0x40] sm:$0xff]
      %v1461 = vld [vmem:[%s1451 + $0x48] sm:$0xff]
      %1463 = vset.pattern.permute.xlu0 0
      %1464 = vperm.xlu0 %1463, %v1452
      %v1465 = vpop.permute.xlu0 %1464
      %1468 = vset.pattern.permute.xlu0 0
      %1469 = vperm.xlu0 %1468, %v1453
      %v1470 = vpop.permute.xlu0 %1469
      %1473 = vset.pattern.permute.xlu0 0
      %1474 = vperm.xlu0 %1473, %v1454
      %v1475 = vpop.permute.xlu0 %1474
      %1478 = vset.pattern.permute.xlu0 0
      %1479 = vperm.xlu0 %1478, %v1455
      %v1480 = vpop.permute.xlu0 %1479
      %1483 = vset.pattern.permute.xlu0 0
      %1484 = vperm.xlu0 %1483, %v1456
      %v1485 = vpop.permute.xlu0 %1484
      %1488 = vset.pattern.permute.xlu0 0
      %1489 = vperm.xlu0 %1488, %v1457
      %v1490 = vpop.permute.xlu0 %1489
      %1493 = vset.pattern.permute.xlu0 0
      %1494 = vperm.xlu0 %1493, %v1458
      %v1495 = vpop.permute.xlu0 %1494
      %1498 = vset.pattern.permute.xlu0 0
      %1499 = vperm.xlu0 %1498, %v1459
      %v1500 = vpop.permute.xlu0 %1499
      %1503 = vset.pattern.permute.xlu0 0
      %1504 = vperm.xlu0 %1503, %v1460
      %v1505 = vpop.permute.xlu0 %1504
      %1508 = vset.pattern.permute.xlu0 0
      %1509 = vperm.xlu0 %1508, %v1461
      %v1510 = vpop.permute.xlu0 %1509
      %v1522 = vunpack.c.l.b16 %v1441
      %v1523 = vunpack.c.l.b16 %v1442
      %v1524 = vunpack.c.l.b16 %v1443
      %v1525 = vunpack.c.l.b16 %v1444
      %v1526 = vunpack.c.l.b16 %v1445
      %v1527 = vunpack.c.l.b16 %v1446
      %v1528 = vunpack.c.l.b16 %v1447
      %v1529 = vunpack.c.l.b16 %v1448
      %v1530 = vunpack.c.l.b16 %v1449
      %v1531 = vunpack.c.l.b16 %v1450
      %v1532 = vpack.c.b16 %v1523, %v1522
      %v1533 = vpack.c.b16 %v1525, %v1524
      %v1534 = vpack.c.b16 %v1527, %v1526
      %v1535 = vpack.c.b16 %v1529, %v1528
      %v1536 = vpack.c.b16 %v1531, %v1530
      %v1538 = vsel %vm747, %v1532, 0
      %v1541 = vsel %vm747, %v1533, 0
      %v1544 = vsel %vm747, %v1534, 0
      %v1547 = vsel %vm747, %v1535, 0
      %v1550 = vsel %vm747, %v1536, 0
      %v1553 = vsel %vm763, %v1439, 0
      %1555 = vmatprep.subr.bf16.mxu0 0
      %1556 = vmatpush1.bf16.msra.mxu0 %v1553
      %1557 = vmatprep.subr.bf16.mxu0 0
      %1558 = vmatpush1.bf16.msra.mxu0 0
      %1559 = vmatprep.subr.bf16.mxu0 0
      %1560 = vmatpush1.bf16.msra.mxu0 0
      %1561 = vmatprep.subr.bf16.mxu0 0
      %1562 = vmatpush1.bf16.msra.mxu0 0
      %1563 = vmatprep.subr.bf16.mxu0 0
      %1564 = vmatpush1.bf16.msra.mxu0 0
      %1565 = vmatprep.subr.bf16.mxu0 0
      %1566 = vmatpush1.bf16.msra.mxu0 0
      %1567 = vmatprep.subr.bf16.mxu0 0
      %1568 = vmatpush1.bf16.msra.mxu0 0
      %1569 = vmatprep.subr.bf16.mxu0 0
      %1570 = vmatpush1.bf16.msra.mxu0 0
      %1571 = vmatprep.subr.bf16.mxu0 0
      %1572 = vmatpush1.bf16.msra.mxu0 0
      %1573 = vmatprep.subr.bf16.mxu0 0
      %1574 = vmatpush1.bf16.msra.mxu0 0
      %1575 = vmatprep.subr.bf16.mxu0 0
      %1576 = vmatpush1.bf16.msra.mxu0 0
      %1577 = vmatprep.subr.bf16.mxu0 0
      %1578 = vmatpush1.bf16.msra.mxu0 0
      %1579 = vmatprep.subr.bf16.mxu0 0
      %1580 = vmatpush1.bf16.msra.mxu0 0
      %1581 = vmatprep.subr.bf16.mxu0 0
      %1582 = vmatpush1.bf16.msra.mxu0 0
      %1583 = vmatprep.subr.bf16.mxu0 0
      %1584 = vmatpush1.bf16.msra.mxu0 0
      %1585 = vmatprep.subr.bf16.mxu0 0
      %1586 = vmatpush1.bf16.msra.mxu0 0
      %1587 = vmatprep.mubr.bf16.mxu0 0
      %1588 = vmatmul.mubr.bf16.gmra.mrb[0].mxu0 %v1538
      %v1589 = vpop.f32.mrb[0].mxu0
      %v1590 = vadd.f32 %v1465, %v1589
      %v1591 = vpop.f32.mrb[0].mxu0
      %v1592 = vpop.f32.mrb[0].mxu0
      %v1593 = vadd.f32 %v1470, %v1592
      %v1594 = vpop.f32.mrb[0].mxu0
      %1595 = vmatprep.mubr.bf16.mxu0 0
      %1596 = vmatmul.mubr.bf16.gmra.mrb[0].mxu0 %v1541
      %v1597 = vpop.f32.mrb[0].mxu0
      %v1598 = vadd.f32 %v1475, %v1597
      %v1599 = vpop.f32.mrb[0].mxu0
      %v1600 = vpop.f32.mrb[0].mxu0
      %v1601 = vadd.f32 %v1480, %v1600
      %v1602 = vpop.f32.mrb[0].mxu0
      %1603 = vmatprep.mubr.bf16.mxu0 0
      %1604 = vmatmul.mubr.bf16.gmra.mrb[0].mxu0 %v1544
      %v1605 = vpop.f32.mrb[0].mxu0
      %v1606 = vadd.f32 %v1485, %v1605
      %v1607 = vpop.f32.mrb[0].mxu0
      %v1608 = vpop.f32.mrb[0].mxu0
      %v1609 = vadd.f32 %v1490, %v1608
      %v1610 = vpop.f32.mrb[0].mxu0
      %1611 = vmatprep.mubr.bf16.mxu0 0
      %1612 = vmatmul.mubr.bf16.gmra.mrb[0].mxu0 %v1547
      %v1613 = vpop.f32.mrb[0].mxu0
      %v1614 = vadd.f32 %v1495, %v1613
      %v1615 = vpop.f32.mrb[0].mxu0
      %v1616 = vpop.f32.mrb[0].mxu0
      %v1617 = vadd.f32 %v1500, %v1616
      %v1618 = vpop.f32.mrb[0].mxu0
      %1619 = vmatprep.mubr.bf16.mxu0 0
      %1620 = vmatmul.mubr.bf16.gmra.mrb[0].mxu0 %v1550
      %v1621 = vpop.f32.mrb[0].mxu0
      %v1622 = vadd.f32 %v1505, %v1621
      %v1623 = vpop.f32.mrb[0].mxu0
      %v1624 = vpop.f32.mrb[0].mxu0
      %v1625 = vadd.f32 %v1510, %v1624
      %v1626 = vpop.f32.mrb[0].mxu0
      %1627 = vdwg.mxu0
      %v1628 = vmax.f32 %v1590, 0.0
      %v1629 = vmax.f32 %v1593, 0.0
      %v1630 = vmax.f32 %v1598, 0.0
      %v1631 = vmax.f32 %v1601, 0.0
      %v1632 = vmax.f32 %v1606, 0.0
      %v1633 = vmax.f32 %v1609, 0.0
      %v1634 = vmax.f32 %v1614, 0.0
      %v1635 = vmax.f32 %v1617, 0.0
      %v1636 = vmax.f32 %v1622, 0.0
      %v1637 = vmax.f32 %v1625, 0.0
      %vm1638 = vcmask 523264
      %v1639 = vsel %vm1638, %v1628, 0.0
      %1640 = vadd.xlane.f32.xlu0 %v1639
      %v1641 = vpop.xlane.xlu0 %1640
      %v1642 = vsel %vm1638, %v1629, 0.0
      %1643 = vadd.xlane.f32.xlu0 %v1642
      %v1644 = vpop.xlane.xlu0 %1643
      %v1645 = vsel %vm1638, %v1630, 0.0
      %1646 = vadd.xlane.f32.xlu0 %v1645
      %v1647 = vpop.xlane.xlu0 %1646
      %v1648 = vsel %vm1638, %v1631, 0.0
      %1649 = vadd.xlane.f32.xlu0 %v1648
      %v1650 = vpop.xlane.xlu0 %1649
      %v1651 = vsel %vm1638, %v1632, 0.0
      %1652 = vadd.xlane.f32.xlu0 %v1651
      %v1653 = vpop.xlane.xlu0 %1652
      %v1654 = vsel %vm1638, %v1633, 0.0
      %1655 = vadd.xlane.f32.xlu0 %v1654
      %v1656 = vpop.xlane.xlu0 %1655
      %v1657 = vsel %vm1638, %v1634, 0.0
      %1658 = vadd.xlane.f32.xlu0 %v1657
      %v1659 = vpop.xlane.xlu0 %1658
      %v1660 = vsel %vm1638, %v1635, 0.0
      %1661 = vadd.xlane.f32.xlu0 %v1660
      %v1662 = vpop.xlane.xlu0 %1661
      %v1663 = vsel %vm1638, %v1636, 0.0
      %1664 = vadd.xlane.f32.xlu0 %v1663
      %v1665 = vpop.xlane.xlu0 %1664
      %v1666 = vsel %vm1638, %v1637, 0.0
      %1667 = vadd.xlane.f32.xlu0 %v1666
      %v1668 = vpop.xlane.xlu0 %1667
      %v1669 = vrcp.pop 64.0
      %v1670 = vmul.f32 %v1641, %v1669
      %v1671 = vmul.f32 %v1644, %v1669
      %v1672 = vmul.f32 %v1647, %v1669
      %v1673 = vmul.f32 %v1650, %v1669
      %v1674 = vmul.f32 %v1653, %v1669
      %v1675 = vmul.f32 %v1656, %v1669
      %v1676 = vmul.f32 %v1659, %v1669
      %v1677 = vmul.f32 %v1662, %v1669
      %v1678 = vmul.f32 %v1665, %v1669
      %v1679 = vmul.f32 %v1668, %v1669
      %s1680 = scalar_lea.vmem %s7, 40
      %v1681 = vld [vmem:[%s1680] sm:$0xf]
      %v1682 = vld [vmem:[%s1680 + $0x4] sm:$0xf]
      %v1683 = vld [vmem:[%s1680 + $0x8] sm:$0xf]
      %v1684 = vld [vmem:[%s1680 + $0xc] sm:$0xf]
      %v1685 = vld [vmem:[%s1680 + $0x10] sm:$0xf]
      %v1686 = vld [vmem:[%s1680 + $0x14] sm:$0xf]
      %v1687 = vld [vmem:[%s1680 + $0x18] sm:$0xf]
      %v1688 = vld [vmem:[%s1680 + $0x1c] sm:$0xf]
      %v1689 = vld [vmem:[%s1680 + $0x20] sm:$0xf]
      %v1690 = vld [vmem:[%s1680 + $0x24] sm:$0xf]
      %v1691 = vpack.c.bf16 %v1671, %v1670
      %v1692 = vpack.c.bf16 %v1673, %v1672
      %v1693 = vpack.c.bf16 %v1675, %v1674
      %v1694 = vpack.c.bf16 %v1677, %v1676
      %v1695 = vpack.c.bf16 %v1679, %v1678
      %s1696 = scalar_lea.vmem %s8, 80
      %v1697 = vld [vmem:[%s1696] sm:$0xff]
      %v1698 = vld [vmem:[%s1696 + $0x8] sm:$0xff]
      %v1699 = vld [vmem:[%s1696 + $0x10] sm:$0xff]
      %v1700 = vld [vmem:[%s1696 + $0x18] sm:$0xff]
      %v1701 = vld [vmem:[%s1696 + $0x20] sm:$0xff]
      %v1702 = vld [vmem:[%s1696 + $0x28] sm:$0xff]
      %v1703 = vld [vmem:[%s1696 + $0x30] sm:$0xff]
      %v1704 = vld [vmem:[%s1696 + $0x38] sm:$0xff]
      %v1705 = vld [vmem:[%s1696 + $0x40] sm:$0xff]
      %v1706 = vld [vmem:[%s1696 + $0x48] sm:$0xff]
      %v1717 = vunpack.c.l.b16 %v1681
      %v1718 = vunpack.c.l.b16 %v1682
      %v1719 = vunpack.c.l.b16 %v1683
      %v1720 = vunpack.c.l.b16 %v1684
      %v1721 = vunpack.c.l.b16 %v1685
      %v1722 = vunpack.c.l.b16 %v1686
      %v1723 = vunpack.c.l.b16 %v1687
      %v1724 = vunpack.c.l.b16 %v1688
      %v1725 = vunpack.c.l.b16 %v1689
      %v1726 = vunpack.c.l.b16 %v1690
      %v1727 = vpack.c.b16 %v1718, %v1717
      %v1728 = vpack.c.b16 %v1720, %v1719
      %v1729 = vpack.c.b16 %v1722, %v1721
      %v1730 = vpack.c.b16 %v1724, %v1723
      %v1731 = vpack.c.b16 %v1726, %v1725
      %v1733 = vsel %vm964, %v1727, 0
      %v1736 = vsel %vm964, %v1728, 0
      %v1739 = vsel %vm964, %v1729, 0
      %v1742 = vsel %vm964, %v1730, 0
      %v1745 = vsel %vm964, %v1731, 0
      %1747 = vmatprep.subr.bf16.mxu0 0
      %1748 = vmatpush1.bf16.msra.mxu0 %v1691
      %1749 = vmatprep.subr.bf16.mxu0 0
      %1750 = vmatpush1.bf16.msra.mxu0 %v1692
      %1751 = vmatprep.subr.bf16.mxu0 0
      %1752 = vmatpush1.bf16.msra.mxu0 %v1693
      %1753 = vmatprep.subr.bf16.mxu0 0
      %1754 = vmatpush1.bf16.msra.mxu0 %v1694
      %1755 = vmatprep.subr.bf16.mxu0 0
      %1756 = vmatpush1.bf16.msra.mxu0 %v1695
      %1757 = vmatprep.subr.bf16.mxu0 0
      %1758 = vmatpush1.bf16.msra.mxu0 0
      %1759 = vmatprep.subr.bf16.mxu0 0
      %1760 = vmatpush1.bf16.msra.mxu0 0
      %1761 = vmatprep.subr.bf16.mxu0 0
      %1762 = vmatpush1.bf16.msra.mxu0 0
      %1763 = vmatprep.subr.bf16.mxu0 0
      %1764 = vmatpush1.bf16.msra.mxu0 0
      %1765 = vmatprep.subr.bf16.mxu0 0
      %1766 = vmatpush1.bf16.msra.mxu0 0
      %1767 = vmatprep.subr.bf16.mxu0 0
      %1768 = vmatpush1.bf16.msra.mxu0 0
      %1769 = vmatprep.subr.bf16.mxu0 0
      %1770 = vmatpush1.bf16.msra.mxu0 0
      %1771 = vmatprep.subr.bf16.mxu0 0
      %1772 = vmatpush1.bf16.msra.mxu0 0
      %1773 = vmatprep.subr.bf16.mxu0 0
      %1774 = vmatpush1.bf16.msra.mxu0 0
      %1775 = vmatprep.subr.bf16.mxu0 0
      %1776 = vmatpush1.bf16.msra.mxu0 0
      %1777 = vmatprep.subr.bf16.mxu0 0
      %1778 = vmatpush1.bf16.msra.mxu0 0
      %1779 = vmatprep.mubr.bf16.mxu0 0
      %1780 = vmatmul.mubr.bf16.gmra.mrb[0].mxu0 %v1733
      %v1781 = vpop.f32.mrb[0].mxu0
      %v1782 = vadd.f32 %v1697, %v1781
      %v1783 = vpop.f32.mrb[0].mxu0
      %v1784 = vpop.f32.mrb[0].mxu0
      %v1785 = vadd.f32 %v1698, %v1784
      %v1786 = vpop.f32.mrb[0].mxu0
      %1787 = vmatprep.mubr.bf16.mxu0 0
      %1788 = vmatmul.mubr.bf16.gmra.mrb[0].mxu0 %v1736
      %v1789 = vpop.f32.mrb[0].mxu0
      %v1790 = vadd.f32 %v1699, %v1789
      %v1791 = vpop.f32.mrb[0].mxu0
      %v1792 = vpop.f32.mrb[0].mxu0
      %v1793 = vadd.f32 %v1700, %v1792
      %v1794 = vpop.f32.mrb[0].mxu0
      %1795 = vmatprep.mubr.bf16.mxu0 0
      %1796 = vmatmul.mubr.bf16.gmra.mrb[0].mxu0 %v1739
      %v1797 = vpop.f32.mrb[0].mxu0
      %v1798 = vadd.f32 %v1701, %v1797
      %v1799 = vpop.f32.mrb[0].mxu0
      %v1800 = vpop.f32.mrb[0].mxu0
      %v1801 = vadd.f32 %v1702, %v1800
      %v1802 = vpop.f32.mrb[0].mxu0
      %1803 = vmatprep.mubr.bf16.mxu0 0
      %1804 = vmatmul.mubr.bf16.gmra.mrb[0].mxu0 %v1742
      %v1805 = vpop.f32.mrb[0].mxu0
      %v1806 = vadd.f32 %v1703, %v1805
      %v1807 = vpop.f32.mrb[0].mxu0
      %v1808 = vpop.f32.mrb[0].mxu0
      %v1809 = vadd.f32 %v1704, %v1808
      %v1810 = vpop.f32.mrb[0].mxu0
      %1811 = vmatprep.mubr.bf16.mxu0 0
      %1812 = vmatmul.mubr.bf16.gmra.mrb[0].mxu0 %v1745
      %v1813 = vpop.f32.mrb[0].mxu0
      %v1814 = vadd.f32 %v1705, %v1813
      %v1815 = vpop.f32.mrb[0].mxu0
      %v1816 = vpop.f32.mrb[0].mxu0
      %v1817 = vadd.f32 %v1706, %v1816
      %v1818 = vpop.f32.mrb[0].mxu0
      %1819 = vdwg.mxu0
      %v1820 = vmul.f32 %v1782, %v1053
      %v1821 = vmul.f32 %v1785, %v1053
      %v1822 = vmul.f32 %v1790, %v1053
      %v1823 = vmul.f32 %v1793, %v1053
      %v1824 = vmul.f32 %v1798, %v1053
      %v1825 = vmul.f32 %v1801, %v1053
      %v1826 = vmul.f32 %v1806, %v1053
      %v1827 = vmul.f32 %v1809, %v1053
      %v1828 = vmul.f32 %v1814, %v1053
      %v1829 = vmul.f32 %v1817, %v1053
      %v1830 = vadd.f32 %v1820, 0.5
      %v1831 = vadd.f32 %v1821, 0.5
      %v1832 = vadd.f32 %v1822, 0.5
      %v1833 = vadd.f32 %v1823, 0.5
      %v1834 = vadd.f32 %v1824, 0.5
      %v1835 = vadd.f32 %v1825, 0.5
      %v1836 = vadd.f32 %v1826, 0.5
      %v1837 = vadd.f32 %v1827, 0.5
      %v1838 = vadd.f32 %v1828, 0.5
      %v1839 = vadd.f32 %v1829, 0.5
      %v1840 = vmax.f32 %v1830, 0.0
      %v1841 = vmax.f32 %v1831, 0.0
      %v1842 = vmax.f32 %v1832, 0.0
      %v1843 = vmax.f32 %v1833, 0.0
      %v1844 = vmax.f32 %v1834, 0.0
      %v1845 = vmax.f32 %v1835, 0.0
      %v1846 = vmax.f32 %v1836, 0.0
      %v1847 = vmax.f32 %v1837, 0.0
      %v1848 = vmax.f32 %v1838, 0.0
      %v1849 = vmax.f32 %v1839, 0.0
      %v1850 = vmin.f32 %v1840, 1.0
      %v1851 = vmin.f32 %v1841, 1.0
      %v1852 = vmin.f32 %v1842, 1.0
      %v1853 = vmin.f32 %v1843, 1.0
      %v1854 = vmin.f32 %v1844, 1.0
      %v1855 = vmin.f32 %v1845, 1.0
      %v1856 = vmin.f32 %v1846, 1.0
      %v1857 = vmin.f32 %v1847, 1.0
      %v1858 = vmin.f32 %v1848, 1.0
      %v1859 = vmin.f32 %v1849, 1.0
      %s1860 = scalar_lea.vmem %s5, 40
      %v1861 = vld [vmem:[%s1860] sm:$0xf]
      %v1862 = vld [vmem:[%s1860 + $0x4] sm:$0xf]
      %v1863 = vld [vmem:[%s1860 + $0x8] sm:$0xf]
      %v1864 = vld [vmem:[%s1860 + $0xc] sm:$0xf]
      %v1865 = vld [vmem:[%s1860 + $0x10] sm:$0xf]
      %v1866 = vld [vmem:[%s1860 + $0x14] sm:$0xf]
      %v1867 = vld [vmem:[%s1860 + $0x18] sm:$0xf]
      %v1868 = vld [vmem:[%s1860 + $0x1c] sm:$0xf]
      %v1869 = vld [vmem:[%s1860 + $0x20] sm:$0xf]
      %v1870 = vld [vmem:[%s1860 + $0x24] sm:$0xf]
      %v1871 = vpack.c.bf16 %v1629, %v1628
      %v1872 = vpack.c.bf16 %v1631, %v1630
      %v1873 = vpack.c.bf16 %v1633, %v1632
      %v1874 = vpack.c.bf16 %v1635, %v1634
      %v1875 = vpack.c.bf16 %v1637, %v1636
      %s1876 = scalar_lea.vmem %s6, 80
      %v1877 = vld [vmem:[%s1876] sm:$0xff]
      %v1878 = vld [vmem:[%s1876 + $0x8] sm:$0xff]
      %v1879 = vld [vmem:[%s1876 + $0x10] sm:$0xff]
      %v1880 = vld [vmem:[%s1876 + $0x18] sm:$0xff]
      %v1881 = vld [vmem:[%s1876 + $0x20] sm:$0xff]
      %v1882 = vld [vmem:[%s1876 + $0x28] sm:$0xff]
      %v1883 = vld [vmem:[%s1876 + $0x30] sm:$0xff]
      %v1884 = vld [vmem:[%s1876 + $0x38] sm:$0xff]
      %v1885 = vld [vmem:[%s1876 + $0x40] sm:$0xff]
      %v1886 = vld [vmem:[%s1876 + $0x48] sm:$0xff]
      %1888 = vset.pattern.permute.xlu0 0
      %1889 = vperm.xlu0 %1888, %v1877
      %v1890 = vpop.permute.xlu0 %1889
      %1893 = vset.pattern.permute.xlu0 0
      %1894 = vperm.xlu0 %1893, %v1878
      %v1895 = vpop.permute.xlu0 %1894
      %1898 = vset.pattern.permute.xlu0 0
      %1899 = vperm.xlu0 %1898, %v1879
      %v1900 = vpop.permute.xlu0 %1899
      %1903 = vset.pattern.permute.xlu0 0
      %1904 = vperm.xlu0 %1903, %v1880
      %v1905 = vpop.permute.xlu0 %1904
      %1908 = vset.pattern.permute.xlu0 0
      %1909 = vperm.xlu0 %1908, %v1881
      %v1910 = vpop.permute.xlu0 %1909
      %1913 = vset.pattern.permute.xlu0 0
      %1914 = vperm.xlu0 %1913, %v1882
      %v1915 = vpop.permute.xlu0 %1914
      %1918 = vset.pattern.permute.xlu0 0
      %1919 = vperm.xlu0 %1918, %v1883
      %v1920 = vpop.permute.xlu0 %1919
      %1923 = vset.pattern.permute.xlu0 0
      %1924 = vperm.xlu0 %1923, %v1884
      %v1925 = vpop.permute.xlu0 %1924
      %1928 = vset.pattern.permute.xlu0 0
      %1929 = vperm.xlu0 %1928, %v1885
      %v1930 = vpop.permute.xlu0 %1929
      %1933 = vset.pattern.permute.xlu0 0
      %1934 = vperm.xlu0 %1933, %v1886
      %v1935 = vpop.permute.xlu0 %1934
      %v1947 = vunpack.c.l.b16 %v1861
      %v1948 = vunpack.c.l.b16 %v1862
      %v1949 = vunpack.c.l.b16 %v1863
      %v1950 = vunpack.c.l.b16 %v1864
      %v1951 = vunpack.c.l.b16 %v1865
      %v1952 = vunpack.c.l.b16 %v1866
      %v1953 = vunpack.c.l.b16 %v1867
      %v1954 = vunpack.c.l.b16 %v1868
      %v1955 = vunpack.c.l.b16 %v1869
      %v1956 = vunpack.c.l.b16 %v1870
      %v1957 = vpack.c.b16 %v1948, %v1947
      %v1958 = vpack.c.b16 %v1950, %v1949
      %v1959 = vpack.c.b16 %v1952, %v1951
      %v1960 = vpack.c.b16 %v1954, %v1953
      %v1961 = vpack.c.b16 %v1956, %v1955
      %v1963 = vsel %vm964, %v1957, 0
      %v1966 = vsel %vm964, %v1958, 0
      %v1969 = vsel %vm964, %v1959, 0
      %v1972 = vsel %vm964, %v1960, 0
      %v1975 = vsel %vm964, %v1961, 0
      %1977 = vmatprep.subr.bf16.mxu0 0
      %1978 = vmatpush1.bf16.msra.mxu0 %v1871
      %1979 = vmatprep.subr.bf16.mxu0 0
      %1980 = vmatpush1.bf16.msra.mxu0 %v1872
      %1981 = vmatprep.subr.bf16.mxu0 0
      %1982 = vmatpush1.bf16.msra.mxu0 %v1873
      %1983 = vmatprep.subr.bf16.mxu0 0
      %1984 = vmatpush1.bf16.msra.mxu0 %v1874
      %1985 = vmatprep.subr.bf16.mxu0 0
      %1986 = vmatpush1.bf16.msra.mxu0 %v1875
      %1987 = vmatprep.subr.bf16.mxu0 0
      %1988 = vmatpush1.bf16.msra.mxu0 0
      %1989 = vmatprep.subr.bf16.mxu0 0
      %1990 = vmatpush1.bf16.msra.mxu0 0
      %1991 = vmatprep.subr.bf16.mxu0 0
      %1992 = vmatpush1.bf16.msra.mxu0 0
      %1993 = vmatprep.subr.bf16.mxu0 0
      %1994 = vmatpush1.bf16.msra.mxu0 0
      %1995 = vmatprep.subr.bf16.mxu0 0
      %1996 = vmatpush1.bf16.msra.mxu0 0
      %1997 = vmatprep.subr.bf16.mxu0 0
      %1998 = vmatpush1.bf16.msra.mxu0 0
      %1999 = vmatprep.subr.bf16.mxu0 0
      %2000 = vmatpush1.bf16.msra.mxu0 0
      %2001 = vmatprep.subr.bf16.mxu0 0
      %2002 = vmatpush1.bf16.msra.mxu0 0
      %2003 = vmatprep.subr.bf16.mxu0 0
      %2004 = vmatpush1.bf16.msra.mxu0 0
      %2005 = vmatprep.subr.bf16.mxu0 0
      %2006 = vmatpush1.bf16.msra.mxu0 0
      %2007 = vmatprep.subr.bf16.mxu0 0
      %2008 = vmatpush1.bf16.msra.mxu0 0
      %2009 = vmatprep.mubr.bf16.mxu0 0
      %2010 = vmatmul.mubr.bf16.gmra.mrb[0].mxu0 %v1963
      %v2011 = vpop.f32.mrb[0].mxu0
      %v2012 = vadd.f32 %v1890, %v2011
      %v2013 = vpop.f32.mrb[0].mxu0
      %v2014 = vpop.f32.mrb[0].mxu0
      %v2015 = vadd.f32 %v1895, %v2014
      %v2016 = vpop.f32.mrb[0].mxu0
      %2017 = vmatprep.mubr.bf16.mxu0 0
      %2018 = vmatmul.mubr.bf16.gmra.mrb[0].mxu0 %v1966
      %v2019 = vpop.f32.mrb[0].mxu0
      %v2020 = vadd.f32 %v1900, %v2019
      %v2021 = vpop.f32.mrb[0].mxu0
      %v2022 = vpop.f32.mrb[0].mxu0
      %v2023 = vadd.f32 %v1905, %v2022
      %v2024 = vpop.f32.mrb[0].mxu0
      %2025 = vmatprep.mubr.bf16.mxu0 0
      %2026 = vmatmul.mubr.bf16.gmra.mrb[0].mxu0 %v1969
      %v2027 = vpop.f32.mrb[0].mxu0
      %v2028 = vadd.f32 %v1910, %v2027
      %v2029 = vpop.f32.mrb[0].mxu0
      %v2030 = vpop.f32.mrb[0].mxu0
      %v2031 = vadd.f32 %v1915, %v2030
      %v2032 = vpop.f32.mrb[0].mxu0
      %2033 = vmatprep.mubr.bf16.mxu0 0
      %2034 = vmatmul.mubr.bf16.gmra.mrb[0].mxu0 %v1972
      %v2035 = vpop.f32.mrb[0].mxu0
      %v2036 = vadd.f32 %v1920, %v2035
      %v2037 = vpop.f32.mrb[0].mxu0
      %v2038 = vpop.f32.mrb[0].mxu0
      %v2039 = vadd.f32 %v1925, %v2038
      %v2040 = vpop.f32.mrb[0].mxu0
      %2041 = vmatprep.mubr.bf16.mxu0 0
      %2042 = vmatmul.mubr.bf16.gmra.mrb[0].mxu0 %v1975
      %v2043 = vpop.f32.mrb[0].mxu0
      %v2044 = vadd.f32 %v1930, %v2043
      %v2045 = vpop.f32.mrb[0].mxu0
      %v2046 = vpop.f32.mrb[0].mxu0
      %v2047 = vadd.f32 %v1935, %v2046
      %v2048 = vpop.f32.mrb[0].mxu0
      %2049 = vdwg.mxu0
      %v2050 = vmax.f32 %v2012, 0.0
      %v2051 = vmax.f32 %v2015, 0.0
      %v2052 = vmax.f32 %v2020, 0.0
      %v2053 = vmax.f32 %v2023, 0.0
      %v2054 = vmax.f32 %v2028, 0.0
      %v2055 = vmax.f32 %v2031, 0.0
      %v2056 = vmax.f32 %v2036, 0.0
      %v2057 = vmax.f32 %v2039, 0.0
      %v2058 = vmax.f32 %v2044, 0.0
      %v2059 = vmax.f32 %v2047, 0.0
      %s2060 = scalar_lea.vmem %s9, 80
      %v2061 = vld [vmem:[%s2060] sm:$0xff]
      %v2062 = vld [vmem:[%s2060 + $0x8] sm:$0xff]
      %v2063 = vld [vmem:[%s2060 + $0x10] sm:$0xff]
      %v2064 = vld [vmem:[%s2060 + $0x18] sm:$0xff]
      %v2065 = vld [vmem:[%s2060 + $0x20] sm:$0xff]
      %v2066 = vld [vmem:[%s2060 + $0x28] sm:$0xff]
      %v2067 = vld [vmem:[%s2060 + $0x30] sm:$0xff]
      %v2068 = vld [vmem:[%s2060 + $0x38] sm:$0xff]
      %v2069 = vld [vmem:[%s2060 + $0x40] sm:$0xff]
      %v2070 = vld [vmem:[%s2060 + $0x48] sm:$0xff]
      %v2071 = vmul.f32 %v1850, %v2061
      %v2072 = vmul.f32 %v1851, %v2062
      %v2073 = vmul.f32 %v1852, %v2063
      %v2074 = vmul.f32 %v1853, %v2064
      %v2075 = vmul.f32 %v1854, %v2065
      %v2076 = vmul.f32 %v1855, %v2066
      %v2077 = vmul.f32 %v1856, %v2067
      %v2078 = vmul.f32 %v1857, %v2068
      %v2079 = vmul.f32 %v1858, %v2069
      %v2080 = vmul.f32 %v1859, %v2070
      %2082 = vset.pattern.permute.xlu0 0
      %2083 = vperm.xlu0 %2082, %v2071
      %v2084 = vpop.permute.xlu0 %2083
      %2087 = vset.pattern.permute.xlu0 0
      %2088 = vperm.xlu0 %2087, %v2072
      %v2089 = vpop.permute.xlu0 %2088
      %2092 = vset.pattern.permute.xlu0 0
      %2093 = vperm.xlu0 %2092, %v2073
      %v2094 = vpop.permute.xlu0 %2093
      %2097 = vset.pattern.permute.xlu0 0
      %2098 = vperm.xlu0 %2097, %v2074
      %v2099 = vpop.permute.xlu0 %2098
      %2102 = vset.pattern.permute.xlu0 0
      %2103 = vperm.xlu0 %2102, %v2075
      %v2104 = vpop.permute.xlu0 %2103
      %2107 = vset.pattern.permute.xlu0 0
      %2108 = vperm.xlu0 %2107, %v2076
      %v2109 = vpop.permute.xlu0 %2108
      %2112 = vset.pattern.permute.xlu0 0
      %2113 = vperm.xlu0 %2112, %v2077
      %v2114 = vpop.permute.xlu0 %2113
      %2117 = vset.pattern.permute.xlu0 0
      %2118 = vperm.xlu0 %2117, %v2078
      %v2119 = vpop.permute.xlu0 %2118
      %2122 = vset.pattern.permute.xlu0 0
      %2123 = vperm.xlu0 %2122, %v2079
      %v2124 = vpop.permute.xlu0 %2123
      %2127 = vset.pattern.permute.xlu0 0
      %2128 = vperm.xlu0 %2127, %v2080
      %v2129 = vpop.permute.xlu0 %2128
      %v2131 = vmul.f32 %v2084, %v2050
      %v2132 = vmul.f32 %v2089, %v2051
      %v2133 = vmul.f32 %v2094, %v2052
      %v2134 = vmul.f32 %v2099, %v2053
      %v2135 = vmul.f32 %v2104, %v2054
      %v2136 = vmul.f32 %v2109, %v2055
      %v2137 = vmul.f32 %v2114, %v2056
      %v2138 = vmul.f32 %v2119, %v2057
      %v2139 = vmul.f32 %v2124, %v2058
      %v2140 = vmul.f32 %v2129, %v2059
      %v2141 = vsel %vm1638, %v2131, 0.0
      %v2142 = vsel %vm1638, %v2132, 0.0
      %v2143 = vadd.f32 %v2141, %v2142
      %v2144 = vsel %vm1638, %v2133, 0.0
      %v2145 = vadd.f32 %v2143, %v2144
      %v2146 = vsel %vm1638, %v2134, 0.0
      %v2147 = vadd.f32 %v2145, %v2146
      %v2148 = vsel %vm1638, %v2135, 0.0
      %v2149 = vadd.f32 %v2147, %v2148
      %v2150 = vsel %vm1638, %v2136, 0.0
      %v2151 = vadd.f32 %v2149, %v2150
      %v2152 = vsel %vm1638, %v2137, 0.0
      %v2153 = vadd.f32 %v2151, %v2152
      %v2154 = vsel %vm1638, %v2138, 0.0
      %v2155 = vadd.f32 %v2153, %v2154
      %v2156 = vsel %vm1638, %v2139, 0.0
      %v2157 = vadd.f32 %v2155, %v2156
      %v2158 = vsel %vm1638, %v2140, 0.0
      %v2159 = vadd.f32 %v2157, %v2158
      %v2160 = vrot.slane %v2159, 4
      %v2161 = vadd.f32 %v2159, %v2160
      %v2162 = vrot.slane %v2161, 2
      %v2163 = vadd.f32 %v2161, %v2162
      %v2164 = vrot.slane %v2163, 1
      %v2165 = vadd.f32 %v2163, %v2164
      %v2166 = vld [vmem:[%s10] sm:$0xff]
      %v2167 = vld [vmem:[%s10 + $0x8] sm:$0xff]
      %v2168 = vld [vmem:[%s10 + $0x10] sm:$0xff]
      %v2169 = vld [vmem:[%s10 + $0x18] sm:$0xff]
      %v2170 = vld [vmem:[%s10 + $0x20] sm:$0xff]
      %v2171 = vld [vmem:[%s10 + $0x28] sm:$0xff]
      %v2172 = vld [vmem:[%s10 + $0x30] sm:$0xff]
      %v2173 = vld [vmem:[%s10 + $0x38] sm:$0xff]
      %v2174 = vld [vmem:[%s10 + $0x40] sm:$0xff]
      %v2175 = vld [vmem:[%s10 + $0x48] sm:$0xff]
      %v2176 = vld [vmem:[%s10 + $0x50] sm:$0xff]
      %v2177 = vld [vmem:[%s10 + $0x58] sm:$0xff]
      %v2178 = vld [vmem:[%s10 + $0x60] sm:$0xff]
      %v2179 = vld [vmem:[%s10 + $0x68] sm:$0xff]
      %v2180 = vld [vmem:[%s10 + $0x70] sm:$0xff]
      %v2181 = vld [vmem:[%s10 + $0x78] sm:$0xff]
      %v2183 = vsel %vm1638, %v2165, 0
      %2185 = vmatprep.subr.mxu0 %v2167
      %2186 = vmatpush1.msra.mxu0 %v2166
      %2187 = vmatprep.subr.mxu0 %v2169
      %2188 = vmatpush1.msra.mxu0 %v2168
      %2189 = vmatprep.subr.mxu0 %v2171
      %2190 = vmatpush1.msra.mxu0 %v2170
      %2191 = vmatprep.subr.mxu0 %v2173
      %2192 = vmatpush1.msra.mxu0 %v2172
      %2193 = vmatprep.subr.mxu0 %v2175
      %2194 = vmatpush1.msra.mxu0 %v2174
      %2195 = vmatprep.subr.mxu0 %v2177
      %2196 = vmatpush1.msra.mxu0 %v2176
      %2197 = vmatprep.subr.mxu0 %v2179
      %2198 = vmatpush1.msra.mxu0 %v2178
      %2199 = vmatprep.subr.mxu0 %v2181
      %2200 = vmatpush1.msra.mxu0 %v2180
      %2201 = vmatprep.subr.mxu0 0.0
      %2202 = vmatpush1.msra.mxu0 0.0
      %2203 = vmatprep.subr.mxu0 0.0
      %2204 = vmatpush1.msra.mxu0 0.0
      %2205 = vmatprep.subr.mxu0 0.0
      %2206 = vmatpush1.msra.mxu0 0.0
      %2207 = vmatprep.subr.mxu0 0.0
      %2208 = vmatpush1.msra.mxu0 0.0
      %2209 = vmatprep.subr.mxu0 0.0
      %2210 = vmatpush1.msra.mxu0 0.0
      %2211 = vmatprep.subr.mxu0 0.0
      %2212 = vmatpush1.msra.mxu0 0.0
      %2213 = vmatprep.subr.mxu0 0.0
      %2214 = vmatpush1.msra.mxu0 0.0
      %2215 = vmatprep.subr.mxu0 0.0
      %2216 = vmatpush1.msra.mxu0 0.0
      %2217 = vmatprep.subr.mxu0 0.0
      %2218 = vmatpush1.msra.mxu0 0.0
      %2219 = vmatprep.subr.mxu0 0.0
      %2220 = vmatpush1.msra.mxu0 0.0
      %2221 = vmatprep.subr.mxu0 0.0
      %2222 = vmatpush1.msra.mxu0 0.0
      %2223 = vmatprep.subr.mxu0 0.0
      %2224 = vmatpush1.msra.mxu0 0.0
      %2225 = vmatprep.subr.mxu0 0.0
      %2226 = vmatpush1.msra.mxu0 0.0
      %2227 = vmatprep.subr.mxu0 0.0
      %2228 = vmatpush1.msra.mxu0 0.0
      %2229 = vmatprep.subr.mxu0 0.0
      %2230 = vmatpush1.msra.mxu0 0.0
      %2231 = vmatprep.subr.mxu0 0.0
      %2232 = vmatpush1.msra.mxu0 0.0
      %2233 = vmatprep.subr.mxu0 0.0
      %2234 = vmatpush1.msra.mxu0 0.0
      %2235 = vmatprep.subr.mxu0 0.0
      %2236 = vmatpush1.msra.mxu0 0.0
      %2237 = vmatprep.subr.mxu0 0.0
      %2238 = vmatpush1.msra.mxu0 0.0
      %2239 = vmatprep.subr.mxu0 0.0
      %2240 = vmatpush1.msra.mxu0 0.0
      %2241 = vmatprep.subr.mxu0 0.0
      %2242 = vmatpush1.msra.mxu0 0.0
      %2243 = vmatprep.subr.mxu0 0.0
      %2244 = vmatpush1.msra.mxu0 0.0
      %2245 = vmatprep.subr.mxu0 0.0
      %2246 = vmatpush1.msra.mxu0 0.0
      %2247 = vmatprep.subr.mxu0 0.0
      %2248 = vmatpush1.msra.mxu0 0.0
      %2249 = vmatprep.mubr.f32.mxu0 0.0
      %2250 = vmatmul.mubr.f32.gmra.mrb[0].mxu0 %v2183
      %v2251 = vpop.f32.mrb[0].mxu0
      %v2252 = vadd.f32 0.0, %v2251
      %v2253 = vpop.f32.mrb[0].mxu0
      %v2254 = vadd.f32 0.0, %v2253
      %2255 = vdwg.mxu0
      %v2256 = vadd.f32 %v1437, %v2252
      %v2257 = vadd.f32 %v1438, %v2254
      %v2258 = vpack.c.bf16 %v647, %v647
      %s2259 = scalar_lea.vmem %s3, 80
      %v2260 = vld [vmem:[%s2259] sm:$0xf]
      %v2261 = vld [vmem:[%s2259 + $0x4] sm:$0xf]
      %v2262 = vld [vmem:[%s2259 + $0x8] sm:$0xf]
      %v2263 = vld [vmem:[%s2259 + $0xc] sm:$0xf]
      %v2264 = vld [vmem:[%s2259 + $0x10] sm:$0xf]
      %v2265 = vld [vmem:[%s2259 + $0x14] sm:$0xf]
      %v2266 = vld [vmem:[%s2259 + $0x18] sm:$0xf]
      %v2267 = vld [vmem:[%s2259 + $0x1c] sm:$0xf]
      %v2268 = vld [vmem:[%s2259 + $0x20] sm:$0xf]
      %v2269 = vld [vmem:[%s2259 + $0x24] sm:$0xf]
      %s2270 = scalar_lea.vmem %s4, 160
      %v2271 = vld [vmem:[%s2270] sm:$0xff]
      %v2272 = vld [vmem:[%s2270 + $0x8] sm:$0xff]
      %v2273 = vld [vmem:[%s2270 + $0x10] sm:$0xff]
      %v2274 = vld [vmem:[%s2270 + $0x18] sm:$0xff]
      %v2275 = vld [vmem:[%s2270 + $0x20] sm:$0xff]
      %v2276 = vld [vmem:[%s2270 + $0x28] sm:$0xff]
      %v2277 = vld [vmem:[%s2270 + $0x30] sm:$0xff]
      %v2278 = vld [vmem:[%s2270 + $0x38] sm:$0xff]
      %v2279 = vld [vmem:[%s2270 + $0x40] sm:$0xff]
      %v2280 = vld [vmem:[%s2270 + $0x48] sm:$0xff]
      %2282 = vset.pattern.permute.xlu0 0
      %2283 = vperm.xlu0 %2282, %v2271
      %v2284 = vpop.permute.xlu0 %2283
      %2287 = vset.pattern.permute.xlu0 0
      %2288 = vperm.xlu0 %2287, %v2272
      %v2289 = vpop.permute.xlu0 %2288
      %2292 = vset.pattern.permute.xlu0 0
      %2293 = vperm.xlu0 %2292, %v2273
      %v2294 = vpop.permute.xlu0 %2293
      %2297 = vset.pattern.permute.xlu0 0
      %2298 = vperm.xlu0 %2297, %v2274
      %v2299 = vpop.permute.xlu0 %2298
      %2302 = vset.pattern.permute.xlu0 0
      %2303 = vperm.xlu0 %2302, %v2275
      %v2304 = vpop.permute.xlu0 %2303
      %2307 = vset.pattern.permute.xlu0 0
      %2308 = vperm.xlu0 %2307, %v2276
      %v2309 = vpop.permute.xlu0 %2308
      %2312 = vset.pattern.permute.xlu0 0
      %2313 = vperm.xlu0 %2312, %v2277
      %v2314 = vpop.permute.xlu0 %2313
      %2317 = vset.pattern.permute.xlu0 0
      %2318 = vperm.xlu0 %2317, %v2278
      %v2319 = vpop.permute.xlu0 %2318
      %2322 = vset.pattern.permute.xlu0 0
      %2323 = vperm.xlu0 %2322, %v2279
      %v2324 = vpop.permute.xlu0 %2323
      %2327 = vset.pattern.permute.xlu0 0
      %2328 = vperm.xlu0 %2327, %v2280
      %v2329 = vpop.permute.xlu0 %2328
      %v2341 = vunpack.c.l.b16 %v2260
      %v2342 = vunpack.c.l.b16 %v2261
      %v2343 = vunpack.c.l.b16 %v2262
      %v2344 = vunpack.c.l.b16 %v2263
      %v2345 = vunpack.c.l.b16 %v2264
      %v2346 = vunpack.c.l.b16 %v2265
      %v2347 = vunpack.c.l.b16 %v2266
      %v2348 = vunpack.c.l.b16 %v2267
      %v2349 = vunpack.c.l.b16 %v2268
      %v2350 = vunpack.c.l.b16 %v2269
      %v2351 = vpack.c.b16 %v2342, %v2341
      %v2352 = vpack.c.b16 %v2344, %v2343
      %v2353 = vpack.c.b16 %v2346, %v2345
      %v2354 = vpack.c.b16 %v2348, %v2347
      %v2355 = vpack.c.b16 %v2350, %v2349
      %v2357 = vsel %vm747, %v2351, 0
      %v2360 = vsel %vm747, %v2352, 0
      %v2363 = vsel %vm747, %v2353, 0
      %v2366 = vsel %vm747, %v2354, 0
      %v2369 = vsel %vm747, %v2355, 0
      %v2372 = vsel %vm763, %v2258, 0
      %2374 = vmatprep.subr.bf16.mxu0 0
      %2375 = vmatpush1.bf16.msra.mxu0 %v2372
      %2376 = vmatprep.subr.bf16.mxu0 0
      %2377 = vmatpush1.bf16.msra.mxu0 0
      %2378 = vmatprep.subr.bf16.mxu0 0
      %2379 = vmatpush1.bf16.msra.mxu0 0
      %2380 = vmatprep.subr.bf16.mxu0 0
      %2381 = vmatpush1.bf16.msra.mxu0 0
      %2382 = vmatprep.subr.bf16.mxu0 0
      %2383 = vmatpush1.bf16.msra.mxu0 0
      %2384 = vmatprep.subr.bf16.mxu0 0
      %2385 = vmatpush1.bf16.msra.mxu0 0
      %2386 = vmatprep.subr.bf16.mxu0 0
      %2387 = vmatpush1.bf16.msra.mxu0 0
      %2388 = vmatprep.subr.bf16.mxu0 0
      %2389 = vmatpush1.bf16.msra.mxu0 0
      %2390 = vmatprep.subr.bf16.mxu0 0
      %2391 = vmatpush1.bf16.msra.mxu0 0
      %2392 = vmatprep.subr.bf16.mxu0 0
      %2393 = vmatpush1.bf16.msra.mxu0 0
      %2394 = vmatprep.subr.bf16.mxu0 0
      %2395 = vmatpush1.bf16.msra.mxu0 0
      %2396 = vmatprep.subr.bf16.mxu0 0
      %2397 = vmatpush1.bf16.msra.mxu0 0
      %2398 = vmatprep.subr.bf16.mxu0 0
      %2399 = vmatpush1.bf16.msra.mxu0 0
      %2400 = vmatprep.subr.bf16.mxu0 0
      %2401 = vmatpush1.bf16.msra.mxu0 0
      %2402 = vmatprep.subr.bf16.mxu0 0
      %2403 = vmatpush1.bf16.msra.mxu0 0
      %2404 = vmatprep.subr.bf16.mxu0 0
      %2405 = vmatpush1.bf16.msra.mxu0 0
      %2406 = vmatprep.mubr.bf16.mxu0 0
      %2407 = vmatmul.mubr.bf16.gmra.mrb[0].mxu0 %v2357
      %v2408 = vpop.f32.mrb[0].mxu0
      %v2409 = vadd.f32 %v2284, %v2408
      %v2410 = vpop.f32.mrb[0].mxu0
      %v2411 = vpop.f32.mrb[0].mxu0
      %v2412 = vadd.f32 %v2289, %v2411
      %v2413 = vpop.f32.mrb[0].mxu0
      %2414 = vmatprep.mubr.bf16.mxu0 0
      %2415 = vmatmul.mubr.bf16.gmra.mrb[0].mxu0 %v2360
      %v2416 = vpop.f32.mrb[0].mxu0
      %v2417 = vadd.f32 %v2294, %v2416
      %v2418 = vpop.f32.mrb[0].mxu0
      %v2419 = vpop.f32.mrb[0].mxu0
      %v2420 = vadd.f32 %v2299, %v2419
      %v2421 = vpop.f32.mrb[0].mxu0
      %2422 = vmatprep.mubr.bf16.mxu0 0
      %2423 = vmatmul.mubr.bf16.gmra.mrb[0].mxu0 %v2363
      %v2424 = vpop.f32.mrb[0].mxu0
      %v2425 = vadd.f32 %v2304, %v2424
      %v2426 = vpop.f32.mrb[0].mxu0
      %v2427 = vpop.f32.mrb[0].mxu0
      %v2428 = vadd.f32 %v2309, %v2427
      %v2429 = vpop.f32.mrb[0].mxu0
      %2430 = vmatprep.mubr.bf16.mxu0 0
      %2431 = vmatmul.mubr.bf16.gmra.mrb[0].mxu0 %v2366
      %v2432 = vpop.f32.mrb[0].mxu0
      %v2433 = vadd.f32 %v2314, %v2432
      %v2434 = vpop.f32.mrb[0].mxu0
      %v2435 = vpop.f32.mrb[0].mxu0
      %v2436 = vadd.f32 %v2319, %v2435
      %v2437 = vpop.f32.mrb[0].mxu0
      %2438 = vmatprep.mubr.bf16.mxu0 0
      %2439 = vmatmul.mubr.bf16.gmra.mrb[0].mxu0 %v2369
      %v2440 = vpop.f32.mrb[0].mxu0
      %v2441 = vadd.f32 %v2324, %v2440
      %v2442 = vpop.f32.mrb[0].mxu0
      %v2443 = vpop.f32.mrb[0].mxu0
      %v2444 = vadd.f32 %v2329, %v2443
      %v2445 = vpop.f32.mrb[0].mxu0
      %2446 = vdwg.mxu0
      %v2447 = vmax.f32 %v2409, 0.0
      %v2448 = vmax.f32 %v2412, 0.0
      %v2449 = vmax.f32 %v2417, 0.0
      %v2450 = vmax.f32 %v2420, 0.0
      %v2451 = vmax.f32 %v2425, 0.0
      %v2452 = vmax.f32 %v2428, 0.0
      %v2453 = vmax.f32 %v2433, 0.0
      %v2454 = vmax.f32 %v2436, 0.0
      %v2455 = vmax.f32 %v2441, 0.0
      %v2456 = vmax.f32 %v2444, 0.0
      %vm2457 = vcmask 130048
      %v2458 = vsel %vm2457, %v2447, 0.0
      %2459 = vadd.xlane.f32.xlu0 %v2458
      %v2460 = vpop.xlane.xlu0 %2459
      %v2461 = vsel %vm2457, %v2448, 0.0
      %2462 = vadd.xlane.f32.xlu0 %v2461
      %v2463 = vpop.xlane.xlu0 %2462
      %v2464 = vsel %vm2457, %v2449, 0.0
      %2465 = vadd.xlane.f32.xlu0 %v2464
      %v2466 = vpop.xlane.xlu0 %2465
      %v2467 = vsel %vm2457, %v2450, 0.0
      %2468 = vadd.xlane.f32.xlu0 %v2467
      %v2469 = vpop.xlane.xlu0 %2468
      %v2470 = vsel %vm2457, %v2451, 0.0
      %2471 = vadd.xlane.f32.xlu0 %v2470
      %v2472 = vpop.xlane.xlu0 %2471
      %v2473 = vsel %vm2457, %v2452, 0.0
      %2474 = vadd.xlane.f32.xlu0 %v2473
      %v2475 = vpop.xlane.xlu0 %2474
      %v2476 = vsel %vm2457, %v2453, 0.0
      %2477 = vadd.xlane.f32.xlu0 %v2476
      %v2478 = vpop.xlane.xlu0 %2477
      %v2479 = vsel %vm2457, %v2454, 0.0
      %2480 = vadd.xlane.f32.xlu0 %v2479
      %v2481 = vpop.xlane.xlu0 %2480
      %v2482 = vsel %vm2457, %v2455, 0.0
      %2483 = vadd.xlane.f32.xlu0 %v2482
      %v2484 = vpop.xlane.xlu0 %2483
      %v2485 = vsel %vm2457, %v2456, 0.0
      %2486 = vadd.xlane.f32.xlu0 %v2485
      %v2487 = vpop.xlane.xlu0 %2486
      %v2488 = vrcp.pop 16.0
      %v2489 = vmul.f32 %v2460, %v2488
      %v2490 = vmul.f32 %v2463, %v2488
      %v2491 = vmul.f32 %v2466, %v2488
      %v2492 = vmul.f32 %v2469, %v2488
      %v2493 = vmul.f32 %v2472, %v2488
      %v2494 = vmul.f32 %v2475, %v2488
      %v2495 = vmul.f32 %v2478, %v2488
      %v2496 = vmul.f32 %v2481, %v2488
      %v2497 = vmul.f32 %v2484, %v2488
      %v2498 = vmul.f32 %v2487, %v2488
      %s2499 = scalar_lea.vmem %s7, 80
      %v2500 = vld [vmem:[%s2499] sm:$0xf]
      %v2501 = vld [vmem:[%s2499 + $0x4] sm:$0xf]
      %v2502 = vld [vmem:[%s2499 + $0x8] sm:$0xf]
      %v2503 = vld [vmem:[%s2499 + $0xc] sm:$0xf]
      %v2504 = vld [vmem:[%s2499 + $0x10] sm:$0xf]
      %v2505 = vld [vmem:[%s2499 + $0x14] sm:$0xf]
      %v2506 = vld [vmem:[%s2499 + $0x18] sm:$0xf]
      %v2507 = vld [vmem:[%s2499 + $0x1c] sm:$0xf]
      %v2508 = vld [vmem:[%s2499 + $0x20] sm:$0xf]
      %v2509 = vld [vmem:[%s2499 + $0x24] sm:$0xf]
      %v2510 = vpack.c.bf16 %v2490, %v2489
      %v2511 = vpack.c.bf16 %v2492, %v2491
      %v2512 = vpack.c.bf16 %v2494, %v2493
      %v2513 = vpack.c.bf16 %v2496, %v2495
      %v2514 = vpack.c.bf16 %v2498, %v2497
      %s2515 = scalar_lea.vmem %s8, 160
      %v2516 = vld [vmem:[%s2515] sm:$0xff]
      %v2517 = vld [vmem:[%s2515 + $0x8] sm:$0xff]
      %v2518 = vld [vmem:[%s2515 + $0x10] sm:$0xff]
      %v2519 = vld [vmem:[%s2515 + $0x18] sm:$0xff]
      %v2520 = vld [vmem:[%s2515 + $0x20] sm:$0xff]
      %v2521 = vld [vmem:[%s2515 + $0x28] sm:$0xff]
      %v2522 = vld [vmem:[%s2515 + $0x30] sm:$0xff]
      %v2523 = vld [vmem:[%s2515 + $0x38] sm:$0xff]
      %v2524 = vld [vmem:[%s2515 + $0x40] sm:$0xff]
      %v2525 = vld [vmem:[%s2515 + $0x48] sm:$0xff]
      %v2536 = vunpack.c.l.b16 %v2500
      %v2537 = vunpack.c.l.b16 %v2501
      %v2538 = vunpack.c.l.b16 %v2502
      %v2539 = vunpack.c.l.b16 %v2503
      %v2540 = vunpack.c.l.b16 %v2504
      %v2541 = vunpack.c.l.b16 %v2505
      %v2542 = vunpack.c.l.b16 %v2506
      %v2543 = vunpack.c.l.b16 %v2507
      %v2544 = vunpack.c.l.b16 %v2508
      %v2545 = vunpack.c.l.b16 %v2509
      %v2546 = vpack.c.b16 %v2537, %v2536
      %v2547 = vpack.c.b16 %v2539, %v2538
      %v2548 = vpack.c.b16 %v2541, %v2540
      %v2549 = vpack.c.b16 %v2543, %v2542
      %v2550 = vpack.c.b16 %v2545, %v2544
      %v2552 = vsel %vm964, %v2546, 0
      %v2555 = vsel %vm964, %v2547, 0
      %v2558 = vsel %vm964, %v2548, 0
      %v2561 = vsel %vm964, %v2549, 0
      %v2564 = vsel %vm964, %v2550, 0
      %2566 = vmatprep.subr.bf16.mxu0 0
      %2567 = vmatpush1.bf16.msra.mxu0 %v2510
      %2568 = vmatprep.subr.bf16.mxu0 0
      %2569 = vmatpush1.bf16.msra.mxu0 %v2511
      %2570 = vmatprep.subr.bf16.mxu0 0
      %2571 = vmatpush1.bf16.msra.mxu0 %v2512
      %2572 = vmatprep.subr.bf16.mxu0 0
      %2573 = vmatpush1.bf16.msra.mxu0 %v2513
      %2574 = vmatprep.subr.bf16.mxu0 0
      %2575 = vmatpush1.bf16.msra.mxu0 %v2514
      %2576 = vmatprep.subr.bf16.mxu0 0
      %2577 = vmatpush1.bf16.msra.mxu0 0
      %2578 = vmatprep.subr.bf16.mxu0 0
      %2579 = vmatpush1.bf16.msra.mxu0 0
      %2580 = vmatprep.subr.bf16.mxu0 0
      %2581 = vmatpush1.bf16.msra.mxu0 0
      %2582 = vmatprep.subr.bf16.mxu0 0
      %2583 = vmatpush1.bf16.msra.mxu0 0
      %2584 = vmatprep.subr.bf16.mxu0 0
      %2585 = vmatpush1.bf16.msra.mxu0 0
      %2586 = vmatprep.subr.bf16.mxu0 0
      %2587 = vmatpush1.bf16.msra.mxu0 0
      %2588 = vmatprep.subr.bf16.mxu0 0
      %2589 = vmatpush1.bf16.msra.mxu0 0
      %2590 = vmatprep.subr.bf16.mxu0 0
      %2591 = vmatpush1.bf16.msra.mxu0 0
      %2592 = vmatprep.subr.bf16.mxu0 0
      %2593 = vmatpush1.bf16.msra.mxu0 0
      %2594 = vmatprep.subr.bf16.mxu0 0
      %2595 = vmatpush1.bf16.msra.mxu0 0
      %2596 = vmatprep.subr.bf16.mxu0 0
      %2597 = vmatpush1.bf16.msra.mxu0 0
      %2598 = vmatprep.mubr.bf16.mxu0 0
      %2599 = vmatmul.mubr.bf16.gmra.mrb[0].mxu0 %v2552
      %v2600 = vpop.f32.mrb[0].mxu0
      %v2601 = vadd.f32 %v2516, %v2600
      %v2602 = vpop.f32.mrb[0].mxu0
      %v2603 = vpop.f32.mrb[0].mxu0
      %v2604 = vadd.f32 %v2517, %v2603
      %v2605 = vpop.f32.mrb[0].mxu0
      %2606 = vmatprep.mubr.bf16.mxu0 0
      %2607 = vmatmul.mubr.bf16.gmra.mrb[0].mxu0 %v2555
      %v2608 = vpop.f32.mrb[0].mxu0
      %v2609 = vadd.f32 %v2518, %v2608
      %v2610 = vpop.f32.mrb[0].mxu0
      %v2611 = vpop.f32.mrb[0].mxu0
      %v2612 = vadd.f32 %v2519, %v2611
      %v2613 = vpop.f32.mrb[0].mxu0
      %2614 = vmatprep.mubr.bf16.mxu0 0
      %2615 = vmatmul.mubr.bf16.gmra.mrb[0].mxu0 %v2558
      %v2616 = vpop.f32.mrb[0].mxu0
      %v2617 = vadd.f32 %v2520, %v2616
      %v2618 = vpop.f32.mrb[0].mxu0
      %v2619 = vpop.f32.mrb[0].mxu0
      %v2620 = vadd.f32 %v2521, %v2619
      %v2621 = vpop.f32.mrb[0].mxu0
      %2622 = vmatprep.mubr.bf16.mxu0 0
      %2623 = vmatmul.mubr.bf16.gmra.mrb[0].mxu0 %v2561
      %v2624 = vpop.f32.mrb[0].mxu0
      %v2625 = vadd.f32 %v2522, %v2624
      %v2626 = vpop.f32.mrb[0].mxu0
      %v2627 = vpop.f32.mrb[0].mxu0
      %v2628 = vadd.f32 %v2523, %v2627
      %v2629 = vpop.f32.mrb[0].mxu0
      %2630 = vmatprep.mubr.bf16.mxu0 0
      %2631 = vmatmul.mubr.bf16.gmra.mrb[0].mxu0 %v2564
      %v2632 = vpop.f32.mrb[0].mxu0
      %v2633 = vadd.f32 %v2524, %v2632
      %v2634 = vpop.f32.mrb[0].mxu0
      %v2635 = vpop.f32.mrb[0].mxu0
      %v2636 = vadd.f32 %v2525, %v2635
      %v2637 = vpop.f32.mrb[0].mxu0
      %2638 = vdwg.mxu0
      %v2639 = vmul.f32 %v2601, %v1053
      %v2640 = vmul.f32 %v2604, %v1053
      %v2641 = vmul.f32 %v2609, %v1053
      %v2642 = vmul.f32 %v2612, %v1053
      %v2643 = vmul.f32 %v2617, %v1053
      %v2644 = vmul.f32 %v2620, %v1053
      %v2645 = vmul.f32 %v2625, %v1053
      %v2646 = vmul.f32 %v2628, %v1053
      %v2647 = vmul.f32 %v2633, %v1053
      %v2648 = vmul.f32 %v2636, %v1053
      %v2649 = vadd.f32 %v2639, 0.5
      %v2650 = vadd.f32 %v2640, 0.5
      %v2651 = vadd.f32 %v2641, 0.5
      %v2652 = vadd.f32 %v2642, 0.5
      %v2653 = vadd.f32 %v2643, 0.5
      %v2654 = vadd.f32 %v2644, 0.5
      %v2655 = vadd.f32 %v2645, 0.5
      %v2656 = vadd.f32 %v2646, 0.5
      %v2657 = vadd.f32 %v2647, 0.5
      %v2658 = vadd.f32 %v2648, 0.5
      %v2659 = vmax.f32 %v2649, 0.0
      %v2660 = vmax.f32 %v2650, 0.0
      %v2661 = vmax.f32 %v2651, 0.0
      %v2662 = vmax.f32 %v2652, 0.0
      %v2663 = vmax.f32 %v2653, 0.0
      %v2664 = vmax.f32 %v2654, 0.0
      %v2665 = vmax.f32 %v2655, 0.0
      %v2666 = vmax.f32 %v2656, 0.0
      %v2667 = vmax.f32 %v2657, 0.0
      %v2668 = vmax.f32 %v2658, 0.0
      %v2669 = vmin.f32 %v2659, 1.0
      %v2670 = vmin.f32 %v2660, 1.0
      %v2671 = vmin.f32 %v2661, 1.0
      %v2672 = vmin.f32 %v2662, 1.0
      %v2673 = vmin.f32 %v2663, 1.0
      %v2674 = vmin.f32 %v2664, 1.0
      %v2675 = vmin.f32 %v2665, 1.0
      %v2676 = vmin.f32 %v2666, 1.0
      %v2677 = vmin.f32 %v2667, 1.0
      %v2678 = vmin.f32 %v2668, 1.0
      %s2679 = scalar_lea.vmem %s5, 80
      %v2680 = vld [vmem:[%s2679] sm:$0xf]
      %v2681 = vld [vmem:[%s2679 + $0x4] sm:$0xf]
      %v2682 = vld [vmem:[%s2679 + $0x8] sm:$0xf]
      %v2683 = vld [vmem:[%s2679 + $0xc] sm:$0xf]
      %v2684 = vld [vmem:[%s2679 + $0x10] sm:$0xf]
      %v2685 = vld [vmem:[%s2679 + $0x14] sm:$0xf]
      %v2686 = vld [vmem:[%s2679 + $0x18] sm:$0xf]
      %v2687 = vld [vmem:[%s2679 + $0x1c] sm:$0xf]
      %v2688 = vld [vmem:[%s2679 + $0x20] sm:$0xf]
      %v2689 = vld [vmem:[%s2679 + $0x24] sm:$0xf]
      %v2690 = vpack.c.bf16 %v2448, %v2447
      %v2691 = vpack.c.bf16 %v2450, %v2449
      %v2692 = vpack.c.bf16 %v2452, %v2451
      %v2693 = vpack.c.bf16 %v2454, %v2453
      %v2694 = vpack.c.bf16 %v2456, %v2455
      %s2695 = scalar_lea.vmem %s6, 160
      %v2696 = vld [vmem:[%s2695] sm:$0xff]
      %v2697 = vld [vmem:[%s2695 + $0x8] sm:$0xff]
      %v2698 = vld [vmem:[%s2695 + $0x10] sm:$0xff]
      %v2699 = vld [vmem:[%s2695 + $0x18] sm:$0xff]
      %v2700 = vld [vmem:[%s2695 + $0x20] sm:$0xff]
      %v2701 = vld [vmem:[%s2695 + $0x28] sm:$0xff]
      %v2702 = vld [vmem:[%s2695 + $0x30] sm:$0xff]
      %v2703 = vld [vmem:[%s2695 + $0x38] sm:$0xff]
      %v2704 = vld [vmem:[%s2695 + $0x40] sm:$0xff]
      %v2705 = vld [vmem:[%s2695 + $0x48] sm:$0xff]
      %2707 = vset.pattern.permute.xlu0 0
      %2708 = vperm.xlu0 %2707, %v2696
      %v2709 = vpop.permute.xlu0 %2708
      %2712 = vset.pattern.permute.xlu0 0
      %2713 = vperm.xlu0 %2712, %v2697
      %v2714 = vpop.permute.xlu0 %2713
      %2717 = vset.pattern.permute.xlu0 0
      %2718 = vperm.xlu0 %2717, %v2698
      %v2719 = vpop.permute.xlu0 %2718
      %2722 = vset.pattern.permute.xlu0 0
      %2723 = vperm.xlu0 %2722, %v2699
      %v2724 = vpop.permute.xlu0 %2723
      %2727 = vset.pattern.permute.xlu0 0
      %2728 = vperm.xlu0 %2727, %v2700
      %v2729 = vpop.permute.xlu0 %2728
      %2732 = vset.pattern.permute.xlu0 0
      %2733 = vperm.xlu0 %2732, %v2701
      %v2734 = vpop.permute.xlu0 %2733
      %2737 = vset.pattern.permute.xlu0 0
      %2738 = vperm.xlu0 %2737, %v2702
      %v2739 = vpop.permute.xlu0 %2738
      %2742 = vset.pattern.permute.xlu0 0
      %2743 = vperm.xlu0 %2742, %v2703
      %v2744 = vpop.permute.xlu0 %2743
      %2747 = vset.pattern.permute.xlu0 0
      %2748 = vperm.xlu0 %2747, %v2704
      %v2749 = vpop.permute.xlu0 %2748
      %2752 = vset.pattern.permute.xlu0 0
      %2753 = vperm.xlu0 %2752, %v2705
      %v2754 = vpop.permute.xlu0 %2753
      %v2766 = vunpack.c.l.b16 %v2680
      %v2767 = vunpack.c.l.b16 %v2681
      %v2768 = vunpack.c.l.b16 %v2682
      %v2769 = vunpack.c.l.b16 %v2683
      %v2770 = vunpack.c.l.b16 %v2684
      %v2771 = vunpack.c.l.b16 %v2685
      %v2772 = vunpack.c.l.b16 %v2686
      %v2773 = vunpack.c.l.b16 %v2687
      %v2774 = vunpack.c.l.b16 %v2688
      %v2775 = vunpack.c.l.b16 %v2689
      %v2776 = vpack.c.b16 %v2767, %v2766
      %v2777 = vpack.c.b16 %v2769, %v2768
      %v2778 = vpack.c.b16 %v2771, %v2770
      %v2779 = vpack.c.b16 %v2773, %v2772
      %v2780 = vpack.c.b16 %v2775, %v2774
      %v2782 = vsel %vm964, %v2776, 0
      %v2785 = vsel %vm964, %v2777, 0
      %v2788 = vsel %vm964, %v2778, 0
      %v2791 = vsel %vm964, %v2779, 0
      %v2794 = vsel %vm964, %v2780, 0
      %2796 = vmatprep.subr.bf16.mxu0 0
      %2797 = vmatpush1.bf16.msra.mxu0 %v2690
      %2798 = vmatprep.subr.bf16.mxu0 0
      %2799 = vmatpush1.bf16.msra.mxu0 %v2691
      %2800 = vmatprep.subr.bf16.mxu0 0
      %2801 = vmatpush1.bf16.msra.mxu0 %v2692
      %2802 = vmatprep.subr.bf16.mxu0 0
      %2803 = vmatpush1.bf16.msra.mxu0 %v2693
      %2804 = vmatprep.subr.bf16.mxu0 0
      %2805 = vmatpush1.bf16.msra.mxu0 %v2694
      %2806 = vmatprep.subr.bf16.mxu0 0
      %2807 = vmatpush1.bf16.msra.mxu0 0
      %2808 = vmatprep.subr.bf16.mxu0 0
      %2809 = vmatpush1.bf16.msra.mxu0 0
      %2810 = vmatprep.subr.bf16.mxu0 0
      %2811 = vmatpush1.bf16.msra.mxu0 0
      %2812 = vmatprep.subr.bf16.mxu0 0
      %2813 = vmatpush1.bf16.msra.mxu0 0
      %2814 = vmatprep.subr.bf16.mxu0 0
      %2815 = vmatpush1.bf16.msra.mxu0 0
      %2816 = vmatprep.subr.bf16.mxu0 0
      %2817 = vmatpush1.bf16.msra.mxu0 0
      %2818 = vmatprep.subr.bf16.mxu0 0
      %2819 = vmatpush1.bf16.msra.mxu0 0
      %2820 = vmatprep.subr.bf16.mxu0 0
      %2821 = vmatpush1.bf16.msra.mxu0 0
      %2822 = vmatprep.subr.bf16.mxu0 0
      %2823 = vmatpush1.bf16.msra.mxu0 0
      %2824 = vmatprep.subr.bf16.mxu0 0
      %2825 = vmatpush1.bf16.msra.mxu0 0
      %2826 = vmatprep.subr.bf16.mxu0 0
      %2827 = vmatpush1.bf16.msra.mxu0 0
      %2828 = vmatprep.mubr.bf16.mxu0 0
      %2829 = vmatmul.mubr.bf16.gmra.mrb[0].mxu0 %v2782
      %v2830 = vpop.f32.mrb[0].mxu0
      %v2831 = vadd.f32 %v2709, %v2830
      %v2832 = vpop.f32.mrb[0].mxu0
      %v2833 = vpop.f32.mrb[0].mxu0
      %v2834 = vadd.f32 %v2714, %v2833
      %v2835 = vpop.f32.mrb[0].mxu0
      %2836 = vmatprep.mubr.bf16.mxu0 0
      %2837 = vmatmul.mubr.bf16.gmra.mrb[0].mxu0 %v2785
      %v2838 = vpop.f32.mrb[0].mxu0
      %v2839 = vadd.f32 %v2719, %v2838
      %v2840 = vpop.f32.mrb[0].mxu0
      %v2841 = vpop.f32.mrb[0].mxu0
      %v2842 = vadd.f32 %v2724, %v2841
      %v2843 = vpop.f32.mrb[0].mxu0
      %2844 = vmatprep.mubr.bf16.mxu0 0
      %2845 = vmatmul.mubr.bf16.gmra.mrb[0].mxu0 %v2788
      %v2846 = vpop.f32.mrb[0].mxu0
      %v2847 = vadd.f32 %v2729, %v2846
      %v2848 = vpop.f32.mrb[0].mxu0
      %v2849 = vpop.f32.mrb[0].mxu0
      %v2850 = vadd.f32 %v2734, %v2849
      %v2851 = vpop.f32.mrb[0].mxu0
      %2852 = vmatprep.mubr.bf16.mxu0 0
      %2853 = vmatmul.mubr.bf16.gmra.mrb[0].mxu0 %v2791
      %v2854 = vpop.f32.mrb[0].mxu0
      %v2855 = vadd.f32 %v2739, %v2854
      %v2856 = vpop.f32.mrb[0].mxu0
      %v2857 = vpop.f32.mrb[0].mxu0
      %v2858 = vadd.f32 %v2744, %v2857
      %v2859 = vpop.f32.mrb[0].mxu0
      %2860 = vmatprep.mubr.bf16.mxu0 0
      %2861 = vmatmul.mubr.bf16.gmra.mrb[0].mxu0 %v2794
      %v2862 = vpop.f32.mrb[0].mxu0
      %v2863 = vadd.f32 %v2749, %v2862
      %v2864 = vpop.f32.mrb[0].mxu0
      %v2865 = vpop.f32.mrb[0].mxu0
      %v2866 = vadd.f32 %v2754, %v2865
      %v2867 = vpop.f32.mrb[0].mxu0
      %2868 = vdwg.mxu0
      %v2869 = vmax.f32 %v2831, 0.0
      %v2870 = vmax.f32 %v2834, 0.0
      %v2871 = vmax.f32 %v2839, 0.0
      %v2872 = vmax.f32 %v2842, 0.0
      %v2873 = vmax.f32 %v2847, 0.0
      %v2874 = vmax.f32 %v2850, 0.0
      %v2875 = vmax.f32 %v2855, 0.0
      %v2876 = vmax.f32 %v2858, 0.0
      %v2877 = vmax.f32 %v2863, 0.0
      %v2878 = vmax.f32 %v2866, 0.0
      %s2879 = scalar_lea.vmem %s9, 160
      %v2880 = vld [vmem:[%s2879] sm:$0xff]
      %v2881 = vld [vmem:[%s2879 + $0x8] sm:$0xff]
      %v2882 = vld [vmem:[%s2879 + $0x10] sm:$0xff]
      %v2883 = vld [vmem:[%s2879 + $0x18] sm:$0xff]
      %v2884 = vld [vmem:[%s2879 + $0x20] sm:$0xff]
      %v2885 = vld [vmem:[%s2879 + $0x28] sm:$0xff]
      %v2886 = vld [vmem:[%s2879 + $0x30] sm:$0xff]
      %v2887 = vld [vmem:[%s2879 + $0x38] sm:$0xff]
      %v2888 = vld [vmem:[%s2879 + $0x40] sm:$0xff]
      %v2889 = vld [vmem:[%s2879 + $0x48] sm:$0xff]
      %v2890 = vmul.f32 %v2669, %v2880
      %v2891 = vmul.f32 %v2670, %v2881
      %v2892 = vmul.f32 %v2671, %v2882
      %v2893 = vmul.f32 %v2672, %v2883
      %v2894 = vmul.f32 %v2673, %v2884
      %v2895 = vmul.f32 %v2674, %v2885
      %v2896 = vmul.f32 %v2675, %v2886
      %v2897 = vmul.f32 %v2676, %v2887
      %v2898 = vmul.f32 %v2677, %v2888
      %v2899 = vmul.f32 %v2678, %v2889
      %2901 = vset.pattern.permute.xlu0 0
      %2902 = vperm.xlu0 %2901, %v2890
      %v2903 = vpop.permute.xlu0 %2902
      %2906 = vset.pattern.permute.xlu0 0
      %2907 = vperm.xlu0 %2906, %v2891
      %v2908 = vpop.permute.xlu0 %2907
      %2911 = vset.pattern.permute.xlu0 0
      %2912 = vperm.xlu0 %2911, %v2892
      %v2913 = vpop.permute.xlu0 %2912
      %2916 = vset.pattern.permute.xlu0 0
      %2917 = vperm.xlu0 %2916, %v2893
      %v2918 = vpop.permute.xlu0 %2917
      %2921 = vset.pattern.permute.xlu0 0
      %2922 = vperm.xlu0 %2921, %v2894
      %v2923 = vpop.permute.xlu0 %2922
      %2926 = vset.pattern.permute.xlu0 0
      %2927 = vperm.xlu0 %2926, %v2895
      %v2928 = vpop.permute.xlu0 %2927
      %2931 = vset.pattern.permute.xlu0 0
      %2932 = vperm.xlu0 %2931, %v2896
      %v2933 = vpop.permute.xlu0 %2932
      %2936 = vset.pattern.permute.xlu0 0
      %2937 = vperm.xlu0 %2936, %v2897
      %v2938 = vpop.permute.xlu0 %2937
      %2941 = vset.pattern.permute.xlu0 0
      %2942 = vperm.xlu0 %2941, %v2898
      %v2943 = vpop.permute.xlu0 %2942
      %2946 = vset.pattern.permute.xlu0 0
      %2947 = vperm.xlu0 %2946, %v2899
      %v2948 = vpop.permute.xlu0 %2947
      %v2950 = vmul.f32 %v2903, %v2869
      %v2951 = vmul.f32 %v2908, %v2870
      %v2952 = vmul.f32 %v2913, %v2871
      %v2953 = vmul.f32 %v2918, %v2872
      %v2954 = vmul.f32 %v2923, %v2873
      %v2955 = vmul.f32 %v2928, %v2874
      %v2956 = vmul.f32 %v2933, %v2875
      %v2957 = vmul.f32 %v2938, %v2876
      %v2958 = vmul.f32 %v2943, %v2877
      %v2959 = vmul.f32 %v2948, %v2878
      %v2960 = vsel %vm2457, %v2950, 0.0
      %v2961 = vsel %vm2457, %v2951, 0.0
      %v2962 = vadd.f32 %v2960, %v2961
      %v2963 = vsel %vm2457, %v2952, 0.0
      %v2964 = vadd.f32 %v2962, %v2963
      %v2965 = vsel %vm2457, %v2953, 0.0
      %v2966 = vadd.f32 %v2964, %v2965
      %v2967 = vsel %vm2457, %v2954, 0.0
      %v2968 = vadd.f32 %v2966, %v2967
      %v2969 = vsel %vm2457, %v2955, 0.0
      %v2970 = vadd.f32 %v2968, %v2969
      %v2971 = vsel %vm2457, %v2956, 0.0
      %v2972 = vadd.f32 %v2970, %v2971
      %v2973 = vsel %vm2457, %v2957, 0.0
      %v2974 = vadd.f32 %v2972, %v2973
      %v2975 = vsel %vm2457, %v2958, 0.0
      %v2976 = vadd.f32 %v2974, %v2975
      %v2977 = vsel %vm2457, %v2959, 0.0
      %v2978 = vadd.f32 %v2976, %v2977
      %v2979 = vrot.slane %v2978, 4
      %v2980 = vadd.f32 %v2978, %v2979
      %v2981 = vrot.slane %v2980, 2
      %v2982 = vadd.f32 %v2980, %v2981
      %v2983 = vrot.slane %v2982, 1
      %v2984 = vadd.f32 %v2982, %v2983
      %v2985 = vld [vmem:[%s11] sm:$0xff]
      %v2986 = vld [vmem:[%s11 + $0x8] sm:$0xff]
      %v2987 = vld [vmem:[%s11 + $0x10] sm:$0xff]
      %v2988 = vld [vmem:[%s11 + $0x18] sm:$0xff]
      %v2990 = vsel %vm2457, %v2984, 0
      %2992 = vmatprep.subr.mxu0 %v2986
      %2993 = vmatpush1.msra.mxu0 %v2985
      %2994 = vmatprep.subr.mxu0 %v2988
      %2995 = vmatpush1.msra.mxu0 %v2987
      %2996 = vmatprep.subr.mxu0 0.0
      %2997 = vmatpush1.msra.mxu0 0.0
      %2998 = vmatprep.subr.mxu0 0.0
      %2999 = vmatpush1.msra.mxu0 0.0
      %3000 = vmatprep.subr.mxu0 0.0
      %3001 = vmatpush1.msra.mxu0 0.0
      %3002 = vmatprep.subr.mxu0 0.0
      %3003 = vmatpush1.msra.mxu0 0.0
      %3004 = vmatprep.subr.mxu0 0.0
      %3005 = vmatpush1.msra.mxu0 0.0
      %3006 = vmatprep.subr.mxu0 0.0
      %3007 = vmatpush1.msra.mxu0 0.0
      %3008 = vmatprep.subr.mxu0 0.0
      %3009 = vmatpush1.msra.mxu0 0.0
      %3010 = vmatprep.subr.mxu0 0.0
      %3011 = vmatpush1.msra.mxu0 0.0
      %3012 = vmatprep.subr.mxu0 0.0
      %3013 = vmatpush1.msra.mxu0 0.0
      %3014 = vmatprep.subr.mxu0 0.0
      %3015 = vmatpush1.msra.mxu0 0.0
      %3016 = vmatprep.subr.mxu0 0.0
      %3017 = vmatpush1.msra.mxu0 0.0
      %3018 = vmatprep.subr.mxu0 0.0
      %3019 = vmatpush1.msra.mxu0 0.0
      %3020 = vmatprep.subr.mxu0 0.0
      %3021 = vmatpush1.msra.mxu0 0.0
      %3022 = vmatprep.subr.mxu0 0.0
      %3023 = vmatpush1.msra.mxu0 0.0
      %3024 = vmatprep.subr.mxu0 0.0
      %3025 = vmatpush1.msra.mxu0 0.0
      %3026 = vmatprep.subr.mxu0 0.0
      %3027 = vmatpush1.msra.mxu0 0.0
      %3028 = vmatprep.subr.mxu0 0.0
      %3029 = vmatpush1.msra.mxu0 0.0
      %3030 = vmatprep.subr.mxu0 0.0
      %3031 = vmatpush1.msra.mxu0 0.0
      %3032 = vmatprep.subr.mxu0 0.0
      %3033 = vmatpush1.msra.mxu0 0.0
      %3034 = vmatprep.subr.mxu0 0.0
      %3035 = vmatpush1.msra.mxu0 0.0
      %3036 = vmatprep.subr.mxu0 0.0
      %3037 = vmatpush1.msra.mxu0 0.0
      %3038 = vmatprep.subr.mxu0 0.0
      %3039 = vmatpush1.msra.mxu0 0.0
      %3040 = vmatprep.subr.mxu0 0.0
      %3041 = vmatpush1.msra.mxu0 0.0
      %3042 = vmatprep.subr.mxu0 0.0
      %3043 = vmatpush1.msra.mxu0 0.0
      %3044 = vmatprep.subr.mxu0 0.0
      %3045 = vmatpush1.msra.mxu0 0.0
      %3046 = vmatprep.subr.mxu0 0.0
      %3047 = vmatpush1.msra.mxu0 0.0
      %3048 = vmatprep.subr.mxu0 0.0
      %3049 = vmatpush1.msra.mxu0 0.0
      %3050 = vmatprep.subr.mxu0 0.0
      %3051 = vmatpush1.msra.mxu0 0.0
      %3052 = vmatprep.subr.mxu0 0.0
      %3053 = vmatpush1.msra.mxu0 0.0
      %3054 = vmatprep.subr.mxu0 0.0
      %3055 = vmatpush1.msra.mxu0 0.0
      %3056 = vmatprep.mubr.f32.mxu0 0.0
      %3057 = vmatmul.mubr.f32.gmra.mrb[0].mxu0 %v2990
      %v3058 = vpop.f32.mrb[0].mxu0
      %v3059 = vadd.f32 0.0, %v3058
      %v3060 = vpop.f32.mrb[0].mxu0
      %v3061 = vadd.f32 0.0, %v3060
      %3062 = vdwg.mxu0
      %v3063 = vadd.f32 %v2256, %v3059
      %v3064 = vadd.f32 %v2257, %v3061
      %v3065 = vld [vmem:[#allocation2] sm:$0x1]
      %3067 = vset.pattern.permute.xlu0 0
      %3068 = vperm.xlu0 %3067, %v3065
      %v3069 = vpop.permute.xlu0 %3068
      %v3071 = vlaneseq
      %v3072 = vshrl.u32 %v3071, 7
      %v3073 = vsub.s32 0, %v3072
      %v3074 = vrot.slane %v3069, %v3073
      %v3075 = vadd.f32 %v3063, %v3074
      %v3076 = vadd.f32 %v3064, %v3074
      %v3079 = vcombine.low %v3075, %v3076
      %v3081 = vunpack.c.l.s4 1966171168
      %v3082 = vunpack.c.0.s8 %v3081
      %v3083 = vlaneseq
      %v3084 = vshrl.u32 %v3083, 7
      %v3085 = vsub.s32 %v3082, %v3084
      %v3086 = vrot.slane %v3079, %v3085
      %v3088 = vunpack.c.l.s4 1966171168
      %v3089 = vunpack.c.0.s8 %v3088
      %v3090 = vlaneseq
      %v3091 = vshrl.u32 %v3090, 7
      %v3092 = vsub.s32 %v3089, %v3091
      %v3093 = vrot.slane %v3086, %v3092
      %v3095 = vlaneseq
      %vm3096 = vcmp.ge.s32.totalorder %v3095, 0
      %vm3097 = vcmp.lt.s32.totalorder %v3095, 256
      %vm3098 = vmand %vm3096, %vm3097
      %3099 = vst.msk [vmem:[%s440] sm:$0x3] %vm3098, %v3093
      %p3100 = scmp.lt.s32.totalorder %s26, 1
      %s3101 = scalar_select %p3100, %s26, 1
      %s3102 = smul.addr %s3101, 2
      %s3103 = scalar_lea.vmem %s13, %s3102
      // Predicated region
      $region73: #{unet_dyhead_forward.1} parent=71 // pred_check
        %p3104 = pneg %p322
      $region74: #{unet_dyhead_forward.1} parent=71 // pred_check_branch
        %3106 = sbr.rel (%p3104) target = $region76
      $region75: #{unet_dyhead_forward.1} parent=71 // pred_region
        _
      $region76: #{unet_dyhead_forward.1} parent=71 // pred_fallthru
        _
    $region72: #{unet_dyhead_forward.1} parent=5 // pred_fallthru
      _
    %p3107 = scmp.le.s32.totalorder 2, %s21
    // Predicated region
    $region77: #{unet_dyhead_forward.1} parent=5 // pred_check
      %p3108 = pneg %p3107
    $region78: #{unet_dyhead_forward.1} parent=5 // pred_check_branch
      %3110 = sbr.rel (%p3108) target = $region80
    $region79: #{unet_dyhead_forward.1} parent=5 // pred_region
      %s3111 = ssub.s32 %s21, 2
      // Predicated region
      $region81: #{unet_dyhead_forward.1} parent=79 // pred_check
        %p3112 = pneg %p328
      $region82: #{unet_dyhead_forward.1} parent=79 // pred_check_branch
        %3114 = sbr.rel (%p3112) target = $region84
      $region83: #{unet_dyhead_forward.1} parent=79 // pred_region
        %p3115 = scmp.lt.s32.totalorder %s27, 1
        %s3116 = scalar_select %p3115, %s27, 1
        %s3117 = smul.addr %s3116, 2
        %s3118 = scalar_lea.vmem %s13, %s3117
      $region84: #{unet_dyhead_forward.1} parent=79 // pred_fallthru
        _
    $region80: #{unet_dyhead_forward.1} parent=5 // pred_fallthru
      _
  $region6: #{unet_dyhead_forward.1} parent=0 // loop_footer
    %s25 = sadd.s32 1, %s21
  $region7: #{unet_dyhead_forward.1} parent=0 // loop_footer_branch
    %20 = sbr.rel target = $region3
  $region8: #{unet_dyhead_forward.1} parent=0 // loop_exit
    _

</llo_original>
